<compile_context>
chip_gen: v7x
topology: tpu7x:2x2x1
jax: 0.10.0
libtpu: 0.0.40
codegen_flags: <defaults>
</compile_context>

<pallas_src>
import functools
import math

import jax
import jax.numpy as jnp
from jax.experimental import pallas as pl
from jax.experimental.pallas import tpu as pltpu

EPS = 1e-6                 # LayerNorm eps (matches the PyTorch module)
CDT = jnp.bfloat16         # MXU operand dtype (accumulation stays f32)
TK_CHUNK = 512             # key/value chunk for the online-softmax loop
FF_CHUNK = 512             # d_ff chunk for the FFN reduction


def _vmem_limit_bytes():
    # v5e/v6e: 128 MiB physical -> use 64 MiB budget; v7x: 64 MiB -> 32 MiB.
    try:
        info = pltpu.get_tpu_info()
        cap = getattr(info, "vmem_capacity_bytes", 128 * 1024 * 1024)
    except Exception:  # pragma: no cover - conservative fallback
        cap = 128 * 1024 * 1024
    return int(min(cap // 2, 64 * 1024 * 1024))


_COMPILER_PARAMS = pltpu.CompilerParams(
    dimension_semantics=("parallel",),      # batch grid axis
    vmem_limit_bytes=_vmem_limit_bytes(),
)


# ----------------------------------------------------------------------------
# In-kernel helpers
# ----------------------------------------------------------------------------
def _ln(x, a, b):
    """PyTorch-style LayerNorm: a * (x - mean) / (unbiased_std + eps) + b."""
    d = x.shape[-1]
    mean = jnp.mean(x, axis=-1, keepdims=True)
    diff = x - mean
    var = jnp.sum(diff * diff, axis=-1, keepdims=True) * (1.0 / (d - 1))
    std = jnp.sqrt(var)
    return a * diff / (std + EPS) + b


def _mha(q_src, kv, bias, wq, bq, wk, bk, wv, bv, wo, bo, n_heads):
    """Multi-head attention on VMEM-resident tiles.

    * additive mask bias (precomputed by caller, hoisted out of the head loop)
    * online softmax over Tk chunks (flash-style; no full (T, Tk) live tile)
    * per-head context folded straight into the out-projection accumulator
      (no H-way lane concat)
    * bf16 casts hoisted (activations once, q/k/v once after the projections)
    """
    T, D = q_src.shape
    Tk = kv.shape[0]
    dk = D // n_heads
    scale = 1.0 / math.sqrt(dk)
    step = min(TK_CHUNK, Tk)

    q_src_c = q_src.astype(CDT)
    kv_c = kv.astype(CDT)
    q = (jnp.dot(q_src_c, wq[...], preferred_element_type=jnp.float32)
         + bq[...]) * scale                                   # (T,  D) f32
    k = jnp.dot(kv_c, wk[...], preferred_element_type=jnp.float32) + bk[...]
    v = jnp.dot(kv_c, wv[...], preferred_element_type=jnp.float32) + bv[...]
    q_c, k_c, v_c = q.astype(CDT), k.astype(CDT), v.astype(CDT)

    out = jnp.zeros((T, D), jnp.float32)
    for h in range(n_heads):                                  # small static loop
        lo, hi = h * dk, (h + 1) * dk
        qh = q_c[:, lo:hi]                                    # (T, dk) bf16

        m_i = jnp.full((T, 1), -1e30, jnp.float32)            # online softmax
        l_i = jnp.zeros((T, 1), jnp.float32)
        acc = jnp.zeros((T, dk), jnp.float32)
        for s0 in range(0, Tk, step):                         # Tk chunks
            s1 = min(s0 + step, Tk)
            kh = k_c[s0:s1, lo:hi]                            # (c, dk) bf16
            vh = v_c[s0:s1, lo:hi]
            s = jnp.einsum("td,sd->ts", qh, kh,
                           preferred_element_type=jnp.float32)  # (T, c) f32
            s = s + bias[:, s0:s1]                            # additive mask
            m_new = jnp.maximum(m_i, jnp.max(s, axis=-1, keepdims=True))
            alpha = jnp.exp(m_i - m_new)
            p = jnp.exp(s - m_new)
            l_i = alpha * l_i + jnp.sum(p, axis=-1, keepdims=True)
            acc = alpha * acc + jnp.einsum("ts,sd->td", p.astype(CDT), vh,
                                           preferred_element_type=jnp.float32)
            m_i = m_new

        ctx_h = acc * pl.reciprocal(l_i, approx=True)          # (T, dk) f32
        # fold context straight into the out-projection (no concat over heads)
        out = out + jnp.dot(ctx_h.astype(CDT), wo[lo:hi, :],
                            preferred_element_type=jnp.float32)
    return out + bo[...]


def _ffn(nx, w1, b1, w2, b2):
    """Position-wise FFN with a chunked d_ff reduction (no (T, d_ff) slab)."""
    T, D = nx.shape
    d_ff = w1.shape[1]
    step = min(FF_CHUNK, d_ff)
    nx_c = nx.astype(CDT)
    acc = jnp.zeros((T, D), jnp.float32)
    for lo in range(0, d_ff, step):
        hi = min(lo + step, d_ff)
        h = jnp.dot(nx_c, w1[:, lo:hi], preferred_element_type=jnp.float32)
        h = jnp.maximum(h + b1[:, lo:hi], 0.0)
        acc = acc + jnp.dot(h.astype(CDT), w2[lo:hi, :],
                            preferred_element_type=jnp.float32)
    return acc + b2[...]


# ----------------------------------------------------------------------------
# Fused decoder-layer kernel (one grid step == one batch element)
# ----------------------------------------------------------------------------
def _decoder_layer_kernel(*refs, n_heads):
    (x_ref, mem_ref, tgt_mask_ref, src_mask_ref,
     ln1a, ln1b, sawq, sabq, sawk, sabk, sawv, sabv, sawo, sabo,
     ln2a, ln2b, cawq, cabq, cawk, cabk, cawv, cabv, cawo, cabo,
     ln3a, ln3b, w1, b1, w2, b2,
     o_ref) = refs

    x = x_ref[...].astype(jnp.float32)                        # (T, D) residual

    # --- sublayer 1: pre-norm self-attention + residual ---
    nx = _ln(x, ln1a[...], ln1b[...])
    bias_t = (tgt_mask_ref[...] - 1.0) * 1e9                  # (T, T) additive
    x = x + _mha(nx, nx, bias_t,
                 sawq, sabq, sawk, sabk, sawv, sabv, sawo, sabo, n_heads)

    # --- sublayer 2: pre-norm source attention over encoder memory + residual
    nx = _ln(x, ln2a[...], ln2b[...])
    mem = mem_ref[...].astype(jnp.float32)                    # (S, D)
    bias_s = (src_mask_ref[...] - 1.0) * 1e9                  # (1 or T, S)
    x = x + _mha(nx, mem, bias_s,
                 cawq, cabq, cawk, cabk, cawv, cabv, cawo, cabo, n_heads)

    # --- sublayer 3: pre-norm position-wise FFN + residual ---
    nx = _ln(x, ln3a[...], ln3b[...])
    x = x + _ffn(nx, w1, b1, w2, b2)

    o_ref[...] = x.astype(o_ref.dtype)


# ----------------------------------------------------------------------------
# pallas_call wrapper: grid over batch, weights VMEM-resident
# ----------------------------------------------------------------------------
def decoder_layer(lp, x, memory, src_mask, tgt_mask, n_heads):
    B, T, D = x.shape
    S = memory.shape[1]

    def batch_spec(rows, cols):
        return pl.BlockSpec((None, rows, cols), lambda b: (b, 0, 0))

    def mask_spec(mask):
        _, r, c = mask.shape
        if mask.shape[0] == 1:       # shared across batch -> fetched once
            return pl.BlockSpec((None, r, c), lambda b: (0, 0, 0))
        return pl.BlockSpec((None, r, c), lambda b: (b, 0, 0))

    def resident(arr):
        nd = arr.ndim                # same block every step -> not re-fetched
        return pl.BlockSpec(arr.shape, lambda b, _nd=nd: (0,) * _nd)

    row = lambda v: v.reshape(1, -1)
    sa, ca = lp["self_attn"], lp["src_attn"]
    weights = [
        row(lp["ln1_a"]), row(lp["ln1_b"]),
        sa["wq"], row(sa["bq"]), sa["wk"], row(sa["bk"]),
        sa["wv"], row(sa["bv"]), sa["wo"], row(sa["bo"]),
        row(lp["ln2_a"]), row(lp["ln2_b"]),
        ca["wq"], row(ca["bq"]), ca["wk"], row(ca["bk"]),
        ca["wv"], row(ca["bv"]), ca["wo"], row(ca["bo"]),
        row(lp["ln3_a"]), row(lp["ln3_b"]),
        lp["ff_w1"], row(lp["ff_b1"]), lp["ff_w2"], row(lp["ff_b2"]),
    ]

    inputs = [x, memory, tgt_mask, src_mask] + weights
    in_specs = ([batch_spec(T, D), batch_spec(S, D),
                 mask_spec(tgt_mask), mask_spec(src_mask)]
                + [resident(w) for w in weights])

    kernel = functools.partial(_decoder_layer_kernel, n_heads=n_heads)
    return pl.pallas_call(
        kernel,
        out_shape=jax.ShapeDtypeStruct((B, T, D), jnp.float32),
        grid=(B,),
        in_specs=in_specs,
        out_specs=batch_spec(T, D),
        compiler_params=_COMPILER_PARAMS,
    )(*inputs)


def decoder_forward(layers, x, memory, src_mask, tgt_mask, n_heads):
    for lp in layers:
        x = decoder_layer(lp, x, memory, src_mask, tgt_mask, n_heads)
    return x


# ----------------------------------------------------------------------------
# Parameters
# ----------------------------------------------------------------------------
def init_attn(key, D):
    ks = jax.random.split(key, 4)
    mk = lambda k: jax.random.normal(k, (D, D), jnp.float32) * 0.05
    return {"wq": mk(ks[0]), "bq": jnp.zeros((D,), jnp.float32),
            "wk": mk(ks[1]), "bk": jnp.zeros((D,), jnp.float32),
            "wv": mk(ks[2]), "bv": jnp.zeros((D,), jnp.float32),
            "wo": mk(ks[3]), "bo": jnp.zeros((D,), jnp.float32)}


def init_params(key, D, d_ff, n_layers):
    layers = []
    for _ in range(n_layers):
        key, k1, k2, k3, k4 = jax.random.split(key, 5)
        layers.append({
            "ln1_a": jnp.ones((D,), jnp.float32), "ln1_b": jnp.zeros((D,), jnp.float32),
            "ln2_a": jnp.ones((D,), jnp.float32), "ln2_b": jnp.zeros((D,), jnp.float32),
            "ln3_a": jnp.ones((D,), jnp.float32), "ln3_b": jnp.zeros((D,), jnp.float32),
            "self_attn": init_attn(k1, D),
            "src_attn": init_attn(k2, D),
            "ff_w1": jax.random.normal(k3, (D, d_ff), jnp.float32) * 0.05,
            "ff_b1": jnp.zeros((d_ff,), jnp.float32),
            "ff_w2": jax.random.normal(k4, (d_ff, D), jnp.float32) * 0.05,
            "ff_b2": jnp.zeros((D,), jnp.float32),
        })
    return {"layers": layers}


_BF16_KEYS = {"wq", "wk", "wv", "wo", "ff_w1", "ff_w2"}


def cast_params_for_kernel(params):
    """Weight matrices in bf16 (halves weight DMA, feeds the MXU in bf16).
    Biases / LayerNorm params stay f32 (VPU math stays f32)."""
    def cast_tree(t):
        out = {}
        for k, v in t.items():
            if isinstance(v, dict):
                out[k] = cast_tree(v)
            else:
                out[k] = v.astype(CDT) if k in _BF16_KEYS else v
        return out
    return {"layers": [cast_tree(lp) for lp in params["layers"]]}


# ----------------------------------------------------------------------------
# Pure-jnp f32 reference (same math, no Pallas) for a sanity check
# ----------------------------------------------------------------------------
def _ref_ln(x, a, b):
    mean = jnp.mean(x, -1, keepdims=True)
    std = jnp.std(x, -1, keepdims=True, ddof=1)
    return a * (x - mean) / (std + EPS) + b


def _ref_mha(p, q, k, v, mask, H):
    B, Tq, D = q.shape
    Tk = k.shape[1]
    dk = D // H
    proj = lambda t, w, b: t @ w + b
    qh = proj(q, p["wq"], p["bq"]).reshape(B, Tq, H, dk).transpose(0, 2, 1, 3)
    kh = proj(k, p["wk"], p["bk"]).reshape(B, Tk, H, dk).transpose(0, 2, 1, 3)
    vh = proj(v, p["wv"], p["bv"]).reshape(B, Tk, H, dk).transpose(0, 2, 1, 3)
    s = jnp.einsum("bhqd,bhkd->bhqk", qh, kh) / jnp.sqrt(jnp.float32(dk))
    s = jnp.where(mask[:, None, :, :] == 0, -1e9, s)
    p_attn = jax.nn.softmax(s, axis=-1)
    ctx = jnp.einsum("bhqk,bhkd->bhqd", p_attn, vh)
    ctx = ctx.transpose(0, 2, 1, 3).reshape(B, Tq, D)
    return ctx @ p["wo"] + p["bo"]


def _ref_forward(params, x, memory, src_mask, tgt_mask, H):
    for lp in params["layers"]:
        nx = _ref_ln(x, lp["ln1_a"], lp["ln1_b"])
        x = x + _ref_mha(lp["self_attn"], nx, nx, nx, tgt_mask, H)
        nx = _ref_ln(x, lp["ln2_a"], lp["ln2_b"])
        x = x + _ref_mha(lp["src_attn"], nx, memory, memory, src_mask, H)
        nx = _ref_ln(x, lp["ln3_a"], lp["ln3_b"])
        x = x + (jnp.maximum(nx @ lp["ff_w1"] + lp["ff_b1"], 0.0) @ lp["ff_w2"]
                 + lp["ff_b2"])
    return x


# ----------------------------------------------------------------------------
if __name__ == "__main__":
    B, T, S, D, H, d_ff, N = 2, 8, 8, 32, 4, 64, 2

    root = jax.random.PRNGKey(0)
    kx, km, kp = jax.random.split(root, 3)

    x = jax.random.normal(kx, (B, T, D), jnp.float32)        # target embeddings
    memory = jax.random.normal(km, (B, S, D), jnp.float32)   # encoder output

    # src_mask: (B, 1, S) padding mask (broadcast over query rows in-kernel);
    # tgt_mask: (1, T, T) causal mask shared across the batch (fetched once).
    src_mask = jnp.ones((B, 1, S), jnp.float32)
    tgt_mask = jnp.tril(jnp.ones((T, T), jnp.float32))[None, :, :]

    params = init_params(kp, D, d_ff, N)       # f32 reference params
    kparams = cast_params_for_kernel(params)   # bf16 weight matrices for MXU

    fwd = jax.jit(functools.partial(decoder_forward, n_heads=H))
    out = jax.block_until_ready(
        fwd(kparams["layers"], x, memory, src_mask, tgt_mask))

    ref = _ref_forward(params, x, memory, src_mask, tgt_mask, H)
    assert out.shape == (B, T, D)
    # bf16 MXU operands + approx reciprocal vs pure-f32 reference -> 2e-2 tol.
    assert jnp.allclose(out, ref, rtol=2e-2, atol=2e-2), "mismatch vs reference"

    print("KERNEL_OK")
</pallas_src>

<mosaic_0001>
module attributes {stable_mosaic.version = 11 : i64} {
  func.func @_decoder_layer_kernel(%arg0: i32, %arg1: memref<1x8x32xf32, #tpu.memory_space<vmem>>, %arg2: memref<1x8x32xf32, #tpu.memory_space<vmem>>, %arg3: memref<1x8x8xf32, #tpu.memory_space<vmem>>, %arg4: memref<1x1x8xf32, #tpu.memory_space<vmem>>, %arg5: memref<1x32xf32, #tpu.memory_space<vmem>>, %arg6: memref<1x32xf32, #tpu.memory_space<vmem>>, %arg7: memref<32x32xbf16, #tpu.memory_space<vmem>>, %arg8: memref<1x32xf32, #tpu.memory_space<vmem>>, %arg9: memref<32x32xbf16, #tpu.memory_space<vmem>>, %arg10: memref<1x32xf32, #tpu.memory_space<vmem>>, %arg11: memref<32x32xbf16, #tpu.memory_space<vmem>>, %arg12: memref<1x32xf32, #tpu.memory_space<vmem>>, %arg13: memref<32x32xbf16, #tpu.memory_space<vmem>>, %arg14: memref<1x32xf32, #tpu.memory_space<vmem>>, %arg15: memref<1x32xf32, #tpu.memory_space<vmem>>, %arg16: memref<1x32xf32, #tpu.memory_space<vmem>>, %arg17: memref<32x32xbf16, #tpu.memory_space<vmem>>, %arg18: memref<1x32xf32, #tpu.memory_space<vmem>>, %arg19: memref<32x32xbf16, #tpu.memory_space<vmem>>, %arg20: memref<1x32xf32, #tpu.memory_space<vmem>>, %arg21: memref<32x32xbf16, #tpu.memory_space<vmem>>, %arg22: memref<1x32xf32, #tpu.memory_space<vmem>>, %arg23: memref<32x32xbf16, #tpu.memory_space<vmem>>, %arg24: memref<1x32xf32, #tpu.memory_space<vmem>>, %arg25: memref<1x32xf32, #tpu.memory_space<vmem>>, %arg26: memref<1x32xf32, #tpu.memory_space<vmem>>, %arg27: memref<32x64xbf16, #tpu.memory_space<vmem>>, %arg28: memref<1x64xf32, #tpu.memory_space<vmem>>, %arg29: memref<64x32xbf16, #tpu.memory_space<vmem>>, %arg30: memref<1x32xf32, #tpu.memory_space<vmem>>, %arg31: memref<1x8x32xf32, #tpu.memory_space<vmem>>) attributes {dimension_semantics = [#tpu.dimension_semantics<parallel>], iteration_bounds = array<i64: 2>, scalar_prefetch = 0 : i64, scratch_operands = 0 : i64, tpu.core_type = #tpu.core_type<tc>, window_params = [{transform_indices = @transform_0, window_bounds = array<i64: 1, 8, 32>}, {transform_indices = @transform_1, window_bounds = array<i64: 1, 8, 32>}, {pipeline_mode = #tpu.pipeline_mode<synchronous>, transform_indices = @transform_2, window_bounds = array<i64: 1, 8, 8>}, {transform_indices = @transform_3, window_bounds = array<i64: 1, 1, 8>}, {pipeline_mode = #tpu.pipeline_mode<synchronous>, transform_indices = @transform_4, window_bounds = array<i64: 1, 32>}, {pipeline_mode = #tpu.pipeline_mode<synchronous>, transform_indices = @transform_5, window_bounds = array<i64: 1, 32>}, {pipeline_mode = #tpu.pipeline_mode<synchronous>, transform_indices = @transform_6, window_bounds = array<i64: 32, 32>}, {pipeline_mode = #tpu.pipeline_mode<synchronous>, transform_indices = @transform_7, window_bounds = array<i64: 1, 32>}, {pipeline_mode = #tpu.pipeline_mode<synchronous>, transform_indices = @transform_8, window_bounds = array<i64: 32, 32>}, {pipeline_mode = #tpu.pipeline_mode<synchronous>, transform_indices = @transform_9, window_bounds = array<i64: 1, 32>}, {pipeline_mode = #tpu.pipeline_mode<synchronous>, transform_indices = @transform_10, window_bounds = array<i64: 32, 32>}, {pipeline_mode = #tpu.pipeline_mode<synchronous>, transform_indices = @transform_11, window_bounds = array<i64: 1, 32>}, {pipeline_mode = #tpu.pipeline_mode<synchronous>, transform_indices = @transform_12, window_bounds = array<i64: 32, 32>}, {pipeline_mode = #tpu.pipeline_mode<synchronous>, transform_indices = @transform_13, window_bounds = array<i64: 1, 32>}, {pipeline_mode = #tpu.pipeline_mode<synchronous>, transform_indices = @transform_14, window_bounds = array<i64: 1, 32>}, {pipeline_mode = #tpu.pipeline_mode<synchronous>, transform_indices = @transform_15, window_bounds = array<i64: 1, 32>}, {pipeline_mode = #tpu.pipeline_mode<synchronous>, transform_indices = @transform_16, window_bounds = array<i64: 32, 32>}, {pipeline_mode = #tpu.pipeline_mode<synchronous>, transform_indices = @transform_17, window_bounds = array<i64: 1, 32>}, {pipeline_mode = #tpu.pipeline_mode<synchronous>, transform_indices = @transform_18, window_bounds = array<i64: 32, 32>}, {pipeline_mode = #tpu.pipeline_mode<synchronous>, transform_indices = @transform_19, window_bounds = array<i64: 1, 32>}, {pipeline_mode = #tpu.pipeline_mode<synchronous>, transform_indices = @transform_20, window_bounds = array<i64: 32, 32>}, {pipeline_mode = #tpu.pipeline_mode<synchronous>, transform_indices = @transform_21, window_bounds = array<i64: 1, 32>}, {pipeline_mode = #tpu.pipeline_mode<synchronous>, transform_indices = @transform_22, window_bounds = array<i64: 32, 32>}, {pipeline_mode = #tpu.pipeline_mode<synchronous>, transform_indices = @transform_23, window_bounds = array<i64: 1, 32>}, {pipeline_mode = #tpu.pipeline_mode<synchronous>, transform_indices = @transform_24, window_bounds = array<i64: 1, 32>}, {pipeline_mode = #tpu.pipeline_mode<synchronous>, transform_indices = @transform_25, window_bounds = array<i64: 1, 32>}, {pipeline_mode = #tpu.pipeline_mode<synchronous>, transform_indices = @transform_26, window_bounds = array<i64: 32, 64>}, {pipeline_mode = #tpu.pipeline_mode<synchronous>, transform_indices = @transform_27, window_bounds = array<i64: 1, 64>}, {pipeline_mode = #tpu.pipeline_mode<synchronous>, transform_indices = @transform_28, window_bounds = array<i64: 64, 32>}, {pipeline_mode = #tpu.pipeline_mode<synchronous>, transform_indices = @transform_29, window_bounds = array<i64: 1, 32>}, {transform_indices = @transform_30, window_bounds = array<i64: 1, 8, 32>}]} {
    %c0 = arith.constant 0 : index
    %c0_0 = arith.constant 0 : index
    %c0_1 = arith.constant 0 : index
    %0 = vector.load %arg1[%c0, %c0_0, %c0_1] : memref<1x8x32xf32, #tpu.memory_space<vmem>>, vector<1x8x32xf32>
    %1 = vector.shape_cast %0 : vector<1x8x32xf32> to vector<8x32xf32>
    %c0_2 = arith.constant 0 : index
    %c0_3 = arith.constant 0 : index
    %2 = vector.load %arg5[%c0_2, %c0_3] : memref<1x32xf32, #tpu.memory_space<vmem>>, vector<1x32xf32>
    %c0_4 = arith.constant 0 : index
    %c0_5 = arith.constant 0 : index
    %3 = vector.load %arg6[%c0_4, %c0_5] : memref<1x32xf32, #tpu.memory_space<vmem>>, vector<1x32xf32>
    %cst = arith.constant dense<0.000000e+00> : vector<8xf32>
    %4 = vector.multi_reduction <add>, %1, %cst [1] : vector<8x32xf32> to vector<8xf32>
    %5 = vector.shape_cast %4 : vector<8xf32> to vector<8x1xf32>
    %cst_6 = arith.constant 3.200000e+01 : f32
    %6 = vector.broadcast %cst_6 : f32 to vector<8x1xf32>
    %7 = arith.divf %5, %6 : vector<8x1xf32>
    %8 = vector.broadcast %7 : vector<8x1xf32> to vector<8x32xf32>
    %9 = arith.subf %1, %8 : vector<8x32xf32>
    %10 = arith.mulf %9, %9 : vector<8x32xf32>
    %cst_7 = arith.constant dense<0.000000e+00> : vector<8xf32>
    %11 = vector.multi_reduction <add>, %10, %cst_7 [1] : vector<8x32xf32> to vector<8xf32>
    %12 = vector.shape_cast %11 : vector<8xf32> to vector<8x1xf32>
    %cst_8 = arith.constant 0.0322580636 : f32
    %13 = vector.broadcast %cst_8 : f32 to vector<8x1xf32>
    %14 = arith.mulf %12, %13 : vector<8x1xf32>
    %15 = math.sqrt %14 : vector<8x1xf32>
    %16 = vector.broadcast %2 : vector<1x32xf32> to vector<8x32xf32>
    %17 = arith.mulf %16, %9 : vector<8x32xf32>
    %cst_9 = arith.constant 9.99999997E-7 : f32
    %18 = vector.broadcast %cst_9 : f32 to vector<8x1xf32>
    %19 = arith.addf %15, %18 : vector<8x1xf32>
    %20 = vector.broadcast %19 : vector<8x1xf32> to vector<8x32xf32>
    %21 = arith.divf %17, %20 : vector<8x32xf32>
    %22 = vector.broadcast %3 : vector<1x32xf32> to vector<8x32xf32>
    %23 = arith.addf %21, %22 : vector<8x32xf32>
    %c0_10 = arith.constant 0 : index
    %c0_11 = arith.constant 0 : index
    %c0_12 = arith.constant 0 : index
    %24 = vector.load %arg3[%c0_10, %c0_11, %c0_12] : memref<1x8x8xf32, #tpu.memory_space<vmem>>, vector<1x8x8xf32>
    %25 = vector.shape_cast %24 : vector<1x8x8xf32> to vector<8x8xf32>
    %cst_13 = arith.constant 1.000000e+00 : f32
    %26 = vector.broadcast %cst_13 : f32 to vector<8x8xf32>
    %27 = arith.subf %25, %26 : vector<8x8xf32>
    %cst_14 = arith.constant 1.000000e+09 : f32
    %28 = vector.broadcast %cst_14 : f32 to vector<8x8xf32>
    %29 = arith.mulf %27, %28 : vector<8x8xf32>
    %30 = arith.truncf %23 : vector<8x32xf32> to vector<8x32xbf16>
    %31 = arith.truncf %23 : vector<8x32xf32> to vector<8x32xbf16>
    %c0_15 = arith.constant 0 : index
    %c0_16 = arith.constant 0 : index
    %32 = vector.load %arg7[%c0_15, %c0_16] : memref<32x32xbf16, #tpu.memory_space<vmem>>, vector<32x32xbf16>
    %cst_17 = arith.constant dense<0.000000e+00> : vector<8x32xf32>
    %33 = tpu.matmul %30, %32, %cst_17 {dimension_numbers = #tpu.dot_dimension_numbers<[1], [0], [0], [1], [0, 0, 1, 1], [], []>} : vector<8x32xbf16>, vector<32x32xbf16>, vector<8x32xf32> -> vector<8x32xf32>
    %c0_18 = arith.constant 0 : index
    %c0_19 = arith.constant 0 : index
    %34 = vector.load %arg8[%c0_18, %c0_19] : memref<1x32xf32, #tpu.memory_space<vmem>>, vector<1x32xf32>
    %35 = vector.broadcast %34 : vector<1x32xf32> to vector<8x32xf32>
    %36 = arith.addf %33, %35 : vector<8x32xf32>
    %cst_20 = arith.constant 0.353553385 : f32
    %37 = vector.broadcast %cst_20 : f32 to vector<8x32xf32>
    %38 = arith.mulf %36, %37 : vector<8x32xf32>
    %c0_21 = arith.constant 0 : index
    %c0_22 = arith.constant 0 : index
    %39 = vector.load %arg9[%c0_21, %c0_22] : memref<32x32xbf16, #tpu.memory_space<vmem>>, vector<32x32xbf16>
    %cst_23 = arith.constant dense<0.000000e+00> : vector<8x32xf32>
    %40 = tpu.matmul %31, %39, %cst_23 {dimension_numbers = #tpu.dot_dimension_numbers<[1], [0], [0], [1], [0, 0, 1, 1], [], []>} : vector<8x32xbf16>, vector<32x32xbf16>, vector<8x32xf32> -> vector<8x32xf32>
    %c0_24 = arith.constant 0 : index
    %c0_25 = arith.constant 0 : index
    %41 = vector.load %arg10[%c0_24, %c0_25] : memref<1x32xf32, #tpu.memory_space<vmem>>, vector<1x32xf32>
    %42 = vector.broadcast %41 : vector<1x32xf32> to vector<8x32xf32>
    %43 = arith.addf %40, %42 : vector<8x32xf32>
    %c0_26 = arith.constant 0 : index
    %c0_27 = arith.constant 0 : index
    %44 = vector.load %arg11[%c0_26, %c0_27] : memref<32x32xbf16, #tpu.memory_space<vmem>>, vector<32x32xbf16>
    %cst_28 = arith.constant dense<0.000000e+00> : vector<8x32xf32>
    %45 = tpu.matmul %31, %44, %cst_28 {dimension_numbers = #tpu.dot_dimension_numbers<[1], [0], [0], [1], [0, 0, 1, 1], [], []>} : vector<8x32xbf16>, vector<32x32xbf16>, vector<8x32xf32> -> vector<8x32xf32>
    %c0_29 = arith.constant 0 : index
    %c0_30 = arith.constant 0 : index
    %46 = vector.load %arg12[%c0_29, %c0_30] : memref<1x32xf32, #tpu.memory_space<vmem>>, vector<1x32xf32>
    %47 = vector.broadcast %46 : vector<1x32xf32> to vector<8x32xf32>
    %48 = arith.addf %45, %47 : vector<8x32xf32>
    %49 = arith.truncf %38 : vector<8x32xf32> to vector<8x32xbf16>
    %50 = arith.truncf %43 : vector<8x32xf32> to vector<8x32xbf16>
    %51 = arith.truncf %48 : vector<8x32xf32> to vector<8x32xbf16>
    %cst_31 = arith.constant 0.000000e+00 : f32
    %52 = vector.broadcast %cst_31 : f32 to vector<8x32xf32>
    %53 = vector.extract_strided_slice %49 {offsets = [0, 0], sizes = [8, 8], strides = [1, 1]} : vector<8x32xbf16> to vector<8x8xbf16>
    %cst_32 = arith.constant -1.000000e+30 : f32
    %54 = vector.broadcast %cst_32 : f32 to vector<8x1xf32>
    %cst_33 = arith.constant 0.000000e+00 : f32
    %55 = vector.broadcast %cst_33 : f32 to vector<8x1xf32>
    %cst_34 = arith.constant 0.000000e+00 : f32
    %56 = vector.broadcast %cst_34 : f32 to vector<8x8xf32>
    %57 = vector.extract_strided_slice %50 {offsets = [0, 0], sizes = [8, 8], strides = [1, 1]} : vector<8x32xbf16> to vector<8x8xbf16>
    %58 = vector.extract_strided_slice %51 {offsets = [0, 0], sizes = [8, 8], strides = [1, 1]} : vector<8x32xbf16> to vector<8x8xbf16>
    "tpu.trace_start"() <{level = 10 : i32, message = "td,sd->ts"}> : () -> ()
    %cst_35 = arith.constant dense<0.000000e+00> : vector<8x8xf32>
    %59 = tpu.matmul %53, %57, %cst_35 {dimension_numbers = #tpu.dot_dimension_numbers<[1], [1], [0], [0], [0, 0, 1, 0], [], []>} : vector<8x8xbf16>, vector<8x8xbf16>, vector<8x8xf32> -> vector<8x8xf32>
    "tpu.trace_stop"() : () -> ()
    %60 = arith.addf %59, %29 : vector<8x8xf32>
    %cst_36 = arith.constant dense<0xFF800000> : vector<8xf32>
    %61 = vector.multi_reduction <maximumf>, %60, %cst_36 [1] : vector<8x8xf32> to vector<8xf32>
    %62 = vector.shape_cast %61 : vector<8xf32> to vector<8x1xf32>
    %63 = arith.maximumf %54, %62 : vector<8x1xf32>
    %64 = arith.subf %54, %63 : vector<8x1xf32>
    %65 = math.exp %64 : vector<8x1xf32>
    %66 = vector.broadcast %63 : vector<8x1xf32> to vector<8x8xf32>
    %67 = arith.subf %60, %66 : vector<8x8xf32>
    %68 = math.exp %67 : vector<8x8xf32>
    %69 = arith.mulf %65, %55 : vector<8x1xf32>
    %cst_37 = arith.constant dense<0.000000e+00> : vector<8xf32>
    %70 = vector.multi_reduction <add>, %68, %cst_37 [1] : vector<8x8xf32> to vector<8xf32>
    %71 = vector.shape_cast %70 : vector<8xf32> to vector<8x1xf32>
    %72 = arith.addf %69, %71 : vector<8x1xf32>
    %73 = vector.broadcast %65 : vector<8x1xf32> to vector<8x8xf32>
    %74 = arith.mulf %73, %56 : vector<8x8xf32>
    %75 = arith.truncf %68 : vector<8x8xf32> to vector<8x8xbf16>
    "tpu.trace_start"() <{level = 10 : i32, message = "ts,sd->td"}> : () -> ()
    %cst_38 = arith.constant dense<0.000000e+00> : vector<8x8xf32>
    %76 = tpu.matmul %75, %58, %cst_38 {dimension_numbers = #tpu.dot_dimension_numbers<[1], [0], [0], [1], [0, 0, 1, 1], [], []>} : vector<8x8xbf16>, vector<8x8xbf16>, vector<8x8xf32> -> vector<8x8xf32>
    "tpu.trace_stop"() : () -> ()
    %77 = arith.addf %74, %76 : vector<8x8xf32>
    %78 = tpu.reciprocal %72 {approx = true} : vector<8x1xf32> -> vector<8x1xf32>
    %79 = vector.broadcast %78 : vector<8x1xf32> to vector<8x8xf32>
    %80 = arith.mulf %77, %79 : vector<8x8xf32>
    %81 = arith.truncf %80 : vector<8x8xf32> to vector<8x8xbf16>
    %c0_39 = arith.constant 0 : index
    %c0_40 = arith.constant 0 : index
    %82 = vector.load %arg13[%c0_39, %c0_40] : memref<32x32xbf16, #tpu.memory_space<vmem>>, vector<8x32xbf16>
    %cst_41 = arith.constant dense<0.000000e+00> : vector<8x32xf32>
    %83 = tpu.matmul %81, %82, %cst_41 {dimension_numbers = #tpu.dot_dimension_numbers<[1], [0], [0], [1], [0, 0, 1, 1], [], []>} : vector<8x8xbf16>, vector<8x32xbf16>, vector<8x32xf32> -> vector<8x32xf32>
    %84 = arith.addf %52, %83 : vector<8x32xf32>
    %85 = vector.extract_strided_slice %49 {offsets = [0, 8], sizes = [8, 8], strides = [1, 1]} : vector<8x32xbf16> to vector<8x8xbf16>
    %cst_42 = arith.constant -1.000000e+30 : f32
    %86 = vector.broadcast %cst_42 : f32 to vector<8x1xf32>
    %cst_43 = arith.constant 0.000000e+00 : f32
    %87 = vector.broadcast %cst_43 : f32 to vector<8x1xf32>
    %cst_44 = arith.constant 0.000000e+00 : f32
    %88 = vector.broadcast %cst_44 : f32 to vector<8x8xf32>
    %89 = vector.extract_strided_slice %50 {offsets = [0, 8], sizes = [8, 8], strides = [1, 1]} : vector<8x32xbf16> to vector<8x8xbf16>
    %90 = vector.extract_strided_slice %51 {offsets = [0, 8], sizes = [8, 8], strides = [1, 1]} : vector<8x32xbf16> to vector<8x8xbf16>
    "tpu.trace_start"() <{level = 10 : i32, message = "td,sd->ts"}> : () -> ()
    %cst_45 = arith.constant dense<0.000000e+00> : vector<8x8xf32>
    %91 = tpu.matmul %85, %89, %cst_45 {dimension_numbers = #tpu.dot_dimension_numbers<[1], [1], [0], [0], [0, 0, 1, 0], [], []>} : vector<8x8xbf16>, vector<8x8xbf16>, vector<8x8xf32> -> vector<8x8xf32>
    "tpu.trace_stop"() : () -> ()
    %92 = arith.addf %91, %29 : vector<8x8xf32>
    %cst_46 = arith.constant dense<0xFF800000> : vector<8xf32>
    %93 = vector.multi_reduction <maximumf>, %92, %cst_46 [1] : vector<8x8xf32> to vector<8xf32>
    %94 = vector.shape_cast %93 : vector<8xf32> to vector<8x1xf32>
    %95 = arith.maximumf %86, %94 : vector<8x1xf32>
    %96 = arith.subf %86, %95 : vector<8x1xf32>
    %97 = math.exp %96 : vector<8x1xf32>
    %98 = vector.broadcast %95 : vector<8x1xf32> to vector<8x8xf32>
    %99 = arith.subf %92, %98 : vector<8x8xf32>
    %100 = math.exp %99 : vector<8x8xf32>
    %101 = arith.mulf %97, %87 : vector<8x1xf32>
    %cst_47 = arith.constant dense<0.000000e+00> : vector<8xf32>
    %102 = vector.multi_reduction <add>, %100, %cst_47 [1] : vector<8x8xf32> to vector<8xf32>
    %103 = vector.shape_cast %102 : vector<8xf32> to vector<8x1xf32>
    %104 = arith.addf %101, %103 : vector<8x1xf32>
    %105 = vector.broadcast %97 : vector<8x1xf32> to vector<8x8xf32>
    %106 = arith.mulf %105, %88 : vector<8x8xf32>
    %107 = arith.truncf %100 : vector<8x8xf32> to vector<8x8xbf16>
    "tpu.trace_start"() <{level = 10 : i32, message = "ts,sd->td"}> : () -> ()
    %cst_48 = arith.constant dense<0.000000e+00> : vector<8x8xf32>
    %108 = tpu.matmul %107, %90, %cst_48 {dimension_numbers = #tpu.dot_dimension_numbers<[1], [0], [0], [1], [0, 0, 1, 1], [], []>} : vector<8x8xbf16>, vector<8x8xbf16>, vector<8x8xf32> -> vector<8x8xf32>
    "tpu.trace_stop"() : () -> ()
    %109 = arith.addf %106, %108 : vector<8x8xf32>
    %110 = tpu.reciprocal %104 {approx = true} : vector<8x1xf32> -> vector<8x1xf32>
    %111 = vector.broadcast %110 : vector<8x1xf32> to vector<8x8xf32>
    %112 = arith.mulf %109, %111 : vector<8x8xf32>
    %113 = arith.truncf %112 : vector<8x8xf32> to vector<8x8xbf16>
    %c8 = arith.constant 8 : index
    %c0_49 = arith.constant 0 : index
    %114 = vector.load %arg13[%c8, %c0_49] : memref<32x32xbf16, #tpu.memory_space<vmem>>, vector<8x32xbf16>
    %cst_50 = arith.constant dense<0.000000e+00> : vector<8x32xf32>
    %115 = tpu.matmul %113, %114, %cst_50 {dimension_numbers = #tpu.dot_dimension_numbers<[1], [0], [0], [1], [0, 0, 1, 1], [], []>} : vector<8x8xbf16>, vector<8x32xbf16>, vector<8x32xf32> -> vector<8x32xf32>
    %116 = arith.addf %84, %115 : vector<8x32xf32>
    %117 = vector.extract_strided_slice %49 {offsets = [0, 16], sizes = [8, 8], strides = [1, 1]} : vector<8x32xbf16> to vector<8x8xbf16>
    %cst_51 = arith.constant -1.000000e+30 : f32
    %118 = vector.broadcast %cst_51 : f32 to vector<8x1xf32>
    %cst_52 = arith.constant 0.000000e+00 : f32
    %119 = vector.broadcast %cst_52 : f32 to vector<8x1xf32>
    %cst_53 = arith.constant 0.000000e+00 : f32
    %120 = vector.broadcast %cst_53 : f32 to vector<8x8xf32>
    %121 = vector.extract_strided_slice %50 {offsets = [0, 16], sizes = [8, 8], strides = [1, 1]} : vector<8x32xbf16> to vector<8x8xbf16>
    %122 = vector.extract_strided_slice %51 {offsets = [0, 16], sizes = [8, 8], strides = [1, 1]} : vector<8x32xbf16> to vector<8x8xbf16>
    "tpu.trace_start"() <{level = 10 : i32, message = "td,sd->ts"}> : () -> ()
    %cst_54 = arith.constant dense<0.000000e+00> : vector<8x8xf32>
    %123 = tpu.matmul %117, %121, %cst_54 {dimension_numbers = #tpu.dot_dimension_numbers<[1], [1], [0], [0], [0, 0, 1, 0], [], []>} : vector<8x8xbf16>, vector<8x8xbf16>, vector<8x8xf32> -> vector<8x8xf32>
    "tpu.trace_stop"() : () -> ()
    %124 = arith.addf %123, %29 : vector<8x8xf32>
    %cst_55 = arith.constant dense<0xFF800000> : vector<8xf32>
    %125 = vector.multi_reduction <maximumf>, %124, %cst_55 [1] : vector<8x8xf32> to vector<8xf32>
    %126 = vector.shape_cast %125 : vector<8xf32> to vector<8x1xf32>
    %127 = arith.maximumf %118, %126 : vector<8x1xf32>
    %128 = arith.subf %118, %127 : vector<8x1xf32>
    %129 = math.exp %128 : vector<8x1xf32>
    %130 = vector.broadcast %127 : vector<8x1xf32> to vector<8x8xf32>
    %131 = arith.subf %124, %130 : vector<8x8xf32>
    %132 = math.exp %131 : vector<8x8xf32>
    %133 = arith.mulf %129, %119 : vector<8x1xf32>
    %cst_56 = arith.constant dense<0.000000e+00> : vector<8xf32>
    %134 = vector.multi_reduction <add>, %132, %cst_56 [1] : vector<8x8xf32> to vector<8xf32>
    %135 = vector.shape_cast %134 : vector<8xf32> to vector<8x1xf32>
    %136 = arith.addf %133, %135 : vector<8x1xf32>
    %137 = vector.broadcast %129 : vector<8x1xf32> to vector<8x8xf32>
    %138 = arith.mulf %137, %120 : vector<8x8xf32>
    %139 = arith.truncf %132 : vector<8x8xf32> to vector<8x8xbf16>
    "tpu.trace_start"() <{level = 10 : i32, message = "ts,sd->td"}> : () -> ()
    %cst_57 = arith.constant dense<0.000000e+00> : vector<8x8xf32>
    %140 = tpu.matmul %139, %122, %cst_57 {dimension_numbers = #tpu.dot_dimension_numbers<[1], [0], [0], [1], [0, 0, 1, 1], [], []>} : vector<8x8xbf16>, vector<8x8xbf16>, vector<8x8xf32> -> vector<8x8xf32>
    "tpu.trace_stop"() : () -> ()
    %141 = arith.addf %138, %140 : vector<8x8xf32>
    %142 = tpu.reciprocal %136 {approx = true} : vector<8x1xf32> -> vector<8x1xf32>
    %143 = vector.broadcast %142 : vector<8x1xf32> to vector<8x8xf32>
    %144 = arith.mulf %141, %143 : vector<8x8xf32>
    %145 = arith.truncf %144 : vector<8x8xf32> to vector<8x8xbf16>
    %c16 = arith.constant 16 : index
    %c0_58 = arith.constant 0 : index
    %146 = vector.load %arg13[%c16, %c0_58] : memref<32x32xbf16, #tpu.memory_space<vmem>>, vector<8x32xbf16>
    %cst_59 = arith.constant dense<0.000000e+00> : vector<8x32xf32>
    %147 = tpu.matmul %145, %146, %cst_59 {dimension_numbers = #tpu.dot_dimension_numbers<[1], [0], [0], [1], [0, 0, 1, 1], [], []>} : vector<8x8xbf16>, vector<8x32xbf16>, vector<8x32xf32> -> vector<8x32xf32>
    %148 = arith.addf %116, %147 : vector<8x32xf32>
    %149 = vector.extract_strided_slice %49 {offsets = [0, 24], sizes = [8, 8], strides = [1, 1]} : vector<8x32xbf16> to vector<8x8xbf16>
    %cst_60 = arith.constant -1.000000e+30 : f32
    %150 = vector.broadcast %cst_60 : f32 to vector<8x1xf32>
    %cst_61 = arith.constant 0.000000e+00 : f32
    %151 = vector.broadcast %cst_61 : f32 to vector<8x1xf32>
    %cst_62 = arith.constant 0.000000e+00 : f32
    %152 = vector.broadcast %cst_62 : f32 to vector<8x8xf32>
    %153 = vector.extract_strided_slice %50 {offsets = [0, 24], sizes = [8, 8], strides = [1, 1]} : vector<8x32xbf16> to vector<8x8xbf16>
    %154 = vector.extract_strided_slice %51 {offsets = [0, 24], sizes = [8, 8], strides = [1, 1]} : vector<8x32xbf16> to vector<8x8xbf16>
    "tpu.trace_start"() <{level = 10 : i32, message = "td,sd->ts"}> : () -> ()
    %cst_63 = arith.constant dense<0.000000e+00> : vector<8x8xf32>
    %155 = tpu.matmul %149, %153, %cst_63 {dimension_numbers = #tpu.dot_dimension_numbers<[1], [1], [0], [0], [0, 0, 1, 0], [], []>} : vector<8x8xbf16>, vector<8x8xbf16>, vector<8x8xf32> -> vector<8x8xf32>
    "tpu.trace_stop"() : () -> ()
    %156 = arith.addf %155, %29 : vector<8x8xf32>
    %cst_64 = arith.constant dense<0xFF800000> : vector<8xf32>
    %157 = vector.multi_reduction <maximumf>, %156, %cst_64 [1] : vector<8x8xf32> to vector<8xf32>
    %158 = vector.shape_cast %157 : vector<8xf32> to vector<8x1xf32>
    %159 = arith.maximumf %150, %158 : vector<8x1xf32>
    %160 = arith.subf %150, %159 : vector<8x1xf32>
    %161 = math.exp %160 : vector<8x1xf32>
    %162 = vector.broadcast %159 : vector<8x1xf32> to vector<8x8xf32>
    %163 = arith.subf %156, %162 : vector<8x8xf32>
    %164 = math.exp %163 : vector<8x8xf32>
    %165 = arith.mulf %161, %151 : vector<8x1xf32>
    %cst_65 = arith.constant dense<0.000000e+00> : vector<8xf32>
    %166 = vector.multi_reduction <add>, %164, %cst_65 [1] : vector<8x8xf32> to vector<8xf32>
    %167 = vector.shape_cast %166 : vector<8xf32> to vector<8x1xf32>
    %168 = arith.addf %165, %167 : vector<8x1xf32>
    %169 = vector.broadcast %161 : vector<8x1xf32> to vector<8x8xf32>
    %170 = arith.mulf %169, %152 : vector<8x8xf32>
    %171 = arith.truncf %164 : vector<8x8xf32> to vector<8x8xbf16>
    "tpu.trace_start"() <{level = 10 : i32, message = "ts,sd->td"}> : () -> ()
    %cst_66 = arith.constant dense<0.000000e+00> : vector<8x8xf32>
    %172 = tpu.matmul %171, %154, %cst_66 {dimension_numbers = #tpu.dot_dimension_numbers<[1], [0], [0], [1], [0, 0, 1, 1], [], []>} : vector<8x8xbf16>, vector<8x8xbf16>, vector<8x8xf32> -> vector<8x8xf32>
    "tpu.trace_stop"() : () -> ()
    %173 = arith.addf %170, %172 : vector<8x8xf32>
    %174 = tpu.reciprocal %168 {approx = true} : vector<8x1xf32> -> vector<8x1xf32>
    %175 = vector.broadcast %174 : vector<8x1xf32> to vector<8x8xf32>
    %176 = arith.mulf %173, %175 : vector<8x8xf32>
    %177 = arith.truncf %176 : vector<8x8xf32> to vector<8x8xbf16>
    %c24 = arith.constant 24 : index
    %c0_67 = arith.constant 0 : index
    %178 = vector.load %arg13[%c24, %c0_67] : memref<32x32xbf16, #tpu.memory_space<vmem>>, vector<8x32xbf16>
    %cst_68 = arith.constant dense<0.000000e+00> : vector<8x32xf32>
    %179 = tpu.matmul %177, %178, %cst_68 {dimension_numbers = #tpu.dot_dimension_numbers<[1], [0], [0], [1], [0, 0, 1, 1], [], []>} : vector<8x8xbf16>, vector<8x32xbf16>, vector<8x32xf32> -> vector<8x32xf32>
    %180 = arith.addf %148, %179 : vector<8x32xf32>
    %c0_69 = arith.constant 0 : index
    %c0_70 = arith.constant 0 : index
    %181 = vector.load %arg14[%c0_69, %c0_70] : memref<1x32xf32, #tpu.memory_space<vmem>>, vector<1x32xf32>
    %182 = vector.broadcast %181 : vector<1x32xf32> to vector<8x32xf32>
    %183 = arith.addf %180, %182 : vector<8x32xf32>
    %184 = arith.addf %1, %183 : vector<8x32xf32>
    %c0_71 = arith.constant 0 : index
    %c0_72 = arith.constant 0 : index
    %185 = vector.load %arg15[%c0_71, %c0_72] : memref<1x32xf32, #tpu.memory_space<vmem>>, vector<1x32xf32>
    %c0_73 = arith.constant 0 : index
    %c0_74 = arith.constant 0 : index
    %186 = vector.load %arg16[%c0_73, %c0_74] : memref<1x32xf32, #tpu.memory_space<vmem>>, vector<1x32xf32>
    %cst_75 = arith.constant dense<0.000000e+00> : vector<8xf32>
    %187 = vector.multi_reduction <add>, %184, %cst_75 [1] : vector<8x32xf32> to vector<8xf32>
    %188 = vector.shape_cast %187 : vector<8xf32> to vector<8x1xf32>
    %cst_76 = arith.constant 3.200000e+01 : f32
    %189 = vector.broadcast %cst_76 : f32 to vector<8x1xf32>
    %190 = arith.divf %188, %189 : vector<8x1xf32>
    %191 = vector.broadcast %190 : vector<8x1xf32> to vector<8x32xf32>
    %192 = arith.subf %184, %191 : vector<8x32xf32>
    %193 = arith.mulf %192, %192 : vector<8x32xf32>
    %cst_77 = arith.constant dense<0.000000e+00> : vector<8xf32>
    %194 = vector.multi_reduction <add>, %193, %cst_77 [1] : vector<8x32xf32> to vector<8xf32>
    %195 = vector.shape_cast %194 : vector<8xf32> to vector<8x1xf32>
    %cst_78 = arith.constant 0.0322580636 : f32
    %196 = vector.broadcast %cst_78 : f32 to vector<8x1xf32>
    %197 = arith.mulf %195, %196 : vector<8x1xf32>
    %198 = math.sqrt %197 : vector<8x1xf32>
    %199 = vector.broadcast %185 : vector<1x32xf32> to vector<8x32xf32>
    %200 = arith.mulf %199, %192 : vector<8x32xf32>
    %cst_79 = arith.constant 9.99999997E-7 : f32
    %201 = vector.broadcast %cst_79 : f32 to vector<8x1xf32>
    %202 = arith.addf %198, %201 : vector<8x1xf32>
    %203 = vector.broadcast %202 : vector<8x1xf32> to vector<8x32xf32>
    %204 = arith.divf %200, %203 : vector<8x32xf32>
    %205 = vector.broadcast %186 : vector<1x32xf32> to vector<8x32xf32>
    %206 = arith.addf %204, %205 : vector<8x32xf32>
    %c0_80 = arith.constant 0 : index
    %c0_81 = arith.constant 0 : index
    %c0_82 = arith.constant 0 : index
    %207 = vector.load %arg2[%c0_80, %c0_81, %c0_82] : memref<1x8x32xf32, #tpu.memory_space<vmem>>, vector<1x8x32xf32>
    %208 = vector.shape_cast %207 : vector<1x8x32xf32> to vector<8x32xf32>
    %c0_83 = arith.constant 0 : index
    %c0_84 = arith.constant 0 : index
    %c0_85 = arith.constant 0 : index
    %209 = vector.load %arg4[%c0_83, %c0_84, %c0_85] : memref<1x1x8xf32, #tpu.memory_space<vmem>>, vector<1x1x8xf32>
    %210 = vector.shape_cast %209 : vector<1x1x8xf32> to vector<1x8xf32>
    %cst_86 = arith.constant 1.000000e+00 : f32
    %211 = vector.broadcast %cst_86 : f32 to vector<1x8xf32>
    %212 = arith.subf %210, %211 : vector<1x8xf32>
    %cst_87 = arith.constant 1.000000e+09 : f32
    %213 = vector.broadcast %cst_87 : f32 to vector<1x8xf32>
    %214 = arith.mulf %212, %213 : vector<1x8xf32>
    %215 = arith.truncf %206 : vector<8x32xf32> to vector<8x32xbf16>
    %216 = arith.truncf %208 : vector<8x32xf32> to vector<8x32xbf16>
    %c0_88 = arith.constant 0 : index
    %c0_89 = arith.constant 0 : index
    %217 = vector.load %arg17[%c0_88, %c0_89] : memref<32x32xbf16, #tpu.memory_space<vmem>>, vector<32x32xbf16>
    %cst_90 = arith.constant dense<0.000000e+00> : vector<8x32xf32>
    %218 = tpu.matmul %215, %217, %cst_90 {dimension_numbers = #tpu.dot_dimension_numbers<[1], [0], [0], [1], [0, 0, 1, 1], [], []>} : vector<8x32xbf16>, vector<32x32xbf16>, vector<8x32xf32> -> vector<8x32xf32>
    %c0_91 = arith.constant 0 : index
    %c0_92 = arith.constant 0 : index
    %219 = vector.load %arg18[%c0_91, %c0_92] : memref<1x32xf32, #tpu.memory_space<vmem>>, vector<1x32xf32>
    %220 = vector.broadcast %219 : vector<1x32xf32> to vector<8x32xf32>
    %221 = arith.addf %218, %220 : vector<8x32xf32>
    %cst_93 = arith.constant 0.353553385 : f32
    %222 = vector.broadcast %cst_93 : f32 to vector<8x32xf32>
    %223 = arith.mulf %221, %222 : vector<8x32xf32>
    %c0_94 = arith.constant 0 : index
    %c0_95 = arith.constant 0 : index
    %224 = vector.load %arg19[%c0_94, %c0_95] : memref<32x32xbf16, #tpu.memory_space<vmem>>, vector<32x32xbf16>
    %cst_96 = arith.constant dense<0.000000e+00> : vector<8x32xf32>
    %225 = tpu.matmul %216, %224, %cst_96 {dimension_numbers = #tpu.dot_dimension_numbers<[1], [0], [0], [1], [0, 0, 1, 1], [], []>} : vector<8x32xbf16>, vector<32x32xbf16>, vector<8x32xf32> -> vector<8x32xf32>
    %c0_97 = arith.constant 0 : index
    %c0_98 = arith.constant 0 : index
    %226 = vector.load %arg20[%c0_97, %c0_98] : memref<1x32xf32, #tpu.memory_space<vmem>>, vector<1x32xf32>
    %227 = vector.broadcast %226 : vector<1x32xf32> to vector<8x32xf32>
    %228 = arith.addf %225, %227 : vector<8x32xf32>
    %c0_99 = arith.constant 0 : index
    %c0_100 = arith.constant 0 : index
    %229 = vector.load %arg21[%c0_99, %c0_100] : memref<32x32xbf16, #tpu.memory_space<vmem>>, vector<32x32xbf16>
    %cst_101 = arith.constant dense<0.000000e+00> : vector<8x32xf32>
    %230 = tpu.matmul %216, %229, %cst_101 {dimension_numbers = #tpu.dot_dimension_numbers<[1], [0], [0], [1], [0, 0, 1, 1], [], []>} : vector<8x32xbf16>, vector<32x32xbf16>, vector<8x32xf32> -> vector<8x32xf32>
    %c0_102 = arith.constant 0 : index
    %c0_103 = arith.constant 0 : index
    %231 = vector.load %arg22[%c0_102, %c0_103] : memref<1x32xf32, #tpu.memory_space<vmem>>, vector<1x32xf32>
    %232 = vector.broadcast %231 : vector<1x32xf32> to vector<8x32xf32>
    %233 = arith.addf %230, %232 : vector<8x32xf32>
    %234 = arith.truncf %223 : vector<8x32xf32> to vector<8x32xbf16>
    %235 = arith.truncf %228 : vector<8x32xf32> to vector<8x32xbf16>
    %236 = arith.truncf %233 : vector<8x32xf32> to vector<8x32xbf16>
    %cst_104 = arith.constant 0.000000e+00 : f32
    %237 = vector.broadcast %cst_104 : f32 to vector<8x32xf32>
    %238 = vector.extract_strided_slice %234 {offsets = [0, 0], sizes = [8, 8], strides = [1, 1]} : vector<8x32xbf16> to vector<8x8xbf16>
    %cst_105 = arith.constant -1.000000e+30 : f32
    %239 = vector.broadcast %cst_105 : f32 to vector<8x1xf32>
    %cst_106 = arith.constant 0.000000e+00 : f32
    %240 = vector.broadcast %cst_106 : f32 to vector<8x1xf32>
    %cst_107 = arith.constant 0.000000e+00 : f32
    %241 = vector.broadcast %cst_107 : f32 to vector<8x8xf32>
    %242 = vector.extract_strided_slice %235 {offsets = [0, 0], sizes = [8, 8], strides = [1, 1]} : vector<8x32xbf16> to vector<8x8xbf16>
    %243 = vector.extract_strided_slice %236 {offsets = [0, 0], sizes = [8, 8], strides = [1, 1]} : vector<8x32xbf16> to vector<8x8xbf16>
    "tpu.trace_start"() <{level = 10 : i32, message = "td,sd->ts"}> : () -> ()
    %cst_108 = arith.constant dense<0.000000e+00> : vector<8x8xf32>
    %244 = tpu.matmul %238, %242, %cst_108 {dimension_numbers = #tpu.dot_dimension_numbers<[1], [1], [0], [0], [0, 0, 1, 0], [], []>} : vector<8x8xbf16>, vector<8x8xbf16>, vector<8x8xf32> -> vector<8x8xf32>
    "tpu.trace_stop"() : () -> ()
    %245 = vector.broadcast %214 : vector<1x8xf32> to vector<8x8xf32>
    %246 = arith.addf %244, %245 : vector<8x8xf32>
    %cst_109 = arith.constant dense<0xFF800000> : vector<8xf32>
    %247 = vector.multi_reduction <maximumf>, %246, %cst_109 [1] : vector<8x8xf32> to vector<8xf32>
    %248 = vector.shape_cast %247 : vector<8xf32> to vector<8x1xf32>
    %249 = arith.maximumf %239, %248 : vector<8x1xf32>
    %250 = arith.subf %239, %249 : vector<8x1xf32>
    %251 = math.exp %250 : vector<8x1xf32>
    %252 = vector.broadcast %249 : vector<8x1xf32> to vector<8x8xf32>
    %253 = arith.subf %246, %252 : vector<8x8xf32>
    %254 = math.exp %253 : vector<8x8xf32>
    %255 = arith.mulf %251, %240 : vector<8x1xf32>
    %cst_110 = arith.constant dense<0.000000e+00> : vector<8xf32>
    %256 = vector.multi_reduction <add>, %254, %cst_110 [1] : vector<8x8xf32> to vector<8xf32>
    %257 = vector.shape_cast %256 : vector<8xf32> to vector<8x1xf32>
    %258 = arith.addf %255, %257 : vector<8x1xf32>
    %259 = vector.broadcast %251 : vector<8x1xf32> to vector<8x8xf32>
    %260 = arith.mulf %259, %241 : vector<8x8xf32>
    %261 = arith.truncf %254 : vector<8x8xf32> to vector<8x8xbf16>
    "tpu.trace_start"() <{level = 10 : i32, message = "ts,sd->td"}> : () -> ()
    %cst_111 = arith.constant dense<0.000000e+00> : vector<8x8xf32>
    %262 = tpu.matmul %261, %243, %cst_111 {dimension_numbers = #tpu.dot_dimension_numbers<[1], [0], [0], [1], [0, 0, 1, 1], [], []>} : vector<8x8xbf16>, vector<8x8xbf16>, vector<8x8xf32> -> vector<8x8xf32>
    "tpu.trace_stop"() : () -> ()
    %263 = arith.addf %260, %262 : vector<8x8xf32>
    %264 = tpu.reciprocal %258 {approx = true} : vector<8x1xf32> -> vector<8x1xf32>
    %265 = vector.broadcast %264 : vector<8x1xf32> to vector<8x8xf32>
    %266 = arith.mulf %263, %265 : vector<8x8xf32>
    %267 = arith.truncf %266 : vector<8x8xf32> to vector<8x8xbf16>
    %c0_112 = arith.constant 0 : index
    %c0_113 = arith.constant 0 : index
    %268 = vector.load %arg23[%c0_112, %c0_113] : memref<32x32xbf16, #tpu.memory_space<vmem>>, vector<8x32xbf16>
    %cst_114 = arith.constant dense<0.000000e+00> : vector<8x32xf32>
    %269 = tpu.matmul %267, %268, %cst_114 {dimension_numbers = #tpu.dot_dimension_numbers<[1], [0], [0], [1], [0, 0, 1, 1], [], []>} : vector<8x8xbf16>, vector<8x32xbf16>, vector<8x32xf32> -> vector<8x32xf32>
    %270 = arith.addf %237, %269 : vector<8x32xf32>
    %271 = vector.extract_strided_slice %234 {offsets = [0, 8], sizes = [8, 8], strides = [1, 1]} : vector<8x32xbf16> to vector<8x8xbf16>
    %cst_115 = arith.constant -1.000000e+30 : f32
    %272 = vector.broadcast %cst_115 : f32 to vector<8x1xf32>
    %cst_116 = arith.constant 0.000000e+00 : f32
    %273 = vector.broadcast %cst_116 : f32 to vector<8x1xf32>
    %cst_117 = arith.constant 0.000000e+00 : f32
    %274 = vector.broadcast %cst_117 : f32 to vector<8x8xf32>
    %275 = vector.extract_strided_slice %235 {offsets = [0, 8], sizes = [8, 8], strides = [1, 1]} : vector<8x32xbf16> to vector<8x8xbf16>
    %276 = vector.extract_strided_slice %236 {offsets = [0, 8], sizes = [8, 8], strides = [1, 1]} : vector<8x32xbf16> to vector<8x8xbf16>
    "tpu.trace_start"() <{level = 10 : i32, message = "td,sd->ts"}> : () -> ()
    %cst_118 = arith.constant dense<0.000000e+00> : vector<8x8xf32>
    %277 = tpu.matmul %271, %275, %cst_118 {dimension_numbers = #tpu.dot_dimension_numbers<[1], [1], [0], [0], [0, 0, 1, 0], [], []>} : vector<8x8xbf16>, vector<8x8xbf16>, vector<8x8xf32> -> vector<8x8xf32>
    "tpu.trace_stop"() : () -> ()
    %278 = vector.broadcast %214 : vector<1x8xf32> to vector<8x8xf32>
    %279 = arith.addf %277, %278 : vector<8x8xf32>
    %cst_119 = arith.constant dense<0xFF800000> : vector<8xf32>
    %280 = vector.multi_reduction <maximumf>, %279, %cst_119 [1] : vector<8x8xf32> to vector<8xf32>
    %281 = vector.shape_cast %280 : vector<8xf32> to vector<8x1xf32>
    %282 = arith.maximumf %272, %281 : vector<8x1xf32>
    %283 = arith.subf %272, %282 : vector<8x1xf32>
    %284 = math.exp %283 : vector<8x1xf32>
    %285 = vector.broadcast %282 : vector<8x1xf32> to vector<8x8xf32>
    %286 = arith.subf %279, %285 : vector<8x8xf32>
    %287 = math.exp %286 : vector<8x8xf32>
    %288 = arith.mulf %284, %273 : vector<8x1xf32>
    %cst_120 = arith.constant dense<0.000000e+00> : vector<8xf32>
    %289 = vector.multi_reduction <add>, %287, %cst_120 [1] : vector<8x8xf32> to vector<8xf32>
    %290 = vector.shape_cast %289 : vector<8xf32> to vector<8x1xf32>
    %291 = arith.addf %288, %290 : vector<8x1xf32>
    %292 = vector.broadcast %284 : vector<8x1xf32> to vector<8x8xf32>
    %293 = arith.mulf %292, %274 : vector<8x8xf32>
    %294 = arith.truncf %287 : vector<8x8xf32> to vector<8x8xbf16>
    "tpu.trace_start"() <{level = 10 : i32, message = "ts,sd->td"}> : () -> ()
    %cst_121 = arith.constant dense<0.000000e+00> : vector<8x8xf32>
    %295 = tpu.matmul %294, %276, %cst_121 {dimension_numbers = #tpu.dot_dimension_numbers<[1], [0], [0], [1], [0, 0, 1, 1], [], []>} : vector<8x8xbf16>, vector<8x8xbf16>, vector<8x8xf32> -> vector<8x8xf32>
    "tpu.trace_stop"() : () -> ()
    %296 = arith.addf %293, %295 : vector<8x8xf32>
    %297 = tpu.reciprocal %291 {approx = true} : vector<8x1xf32> -> vector<8x1xf32>
    %298 = vector.broadcast %297 : vector<8x1xf32> to vector<8x8xf32>
    %299 = arith.mulf %296, %298 : vector<8x8xf32>
    %300 = arith.truncf %299 : vector<8x8xf32> to vector<8x8xbf16>
    %c8_122 = arith.constant 8 : index
    %c0_123 = arith.constant 0 : index
    %301 = vector.load %arg23[%c8_122, %c0_123] : memref<32x32xbf16, #tpu.memory_space<vmem>>, vector<8x32xbf16>
    %cst_124 = arith.constant dense<0.000000e+00> : vector<8x32xf32>
    %302 = tpu.matmul %300, %301, %cst_124 {dimension_numbers = #tpu.dot_dimension_numbers<[1], [0], [0], [1], [0, 0, 1, 1], [], []>} : vector<8x8xbf16>, vector<8x32xbf16>, vector<8x32xf32> -> vector<8x32xf32>
    %303 = arith.addf %270, %302 : vector<8x32xf32>
    %304 = vector.extract_strided_slice %234 {offsets = [0, 16], sizes = [8, 8], strides = [1, 1]} : vector<8x32xbf16> to vector<8x8xbf16>
    %cst_125 = arith.constant -1.000000e+30 : f32
    %305 = vector.broadcast %cst_125 : f32 to vector<8x1xf32>
    %cst_126 = arith.constant 0.000000e+00 : f32
    %306 = vector.broadcast %cst_126 : f32 to vector<8x1xf32>
    %cst_127 = arith.constant 0.000000e+00 : f32
    %307 = vector.broadcast %cst_127 : f32 to vector<8x8xf32>
    %308 = vector.extract_strided_slice %235 {offsets = [0, 16], sizes = [8, 8], strides = [1, 1]} : vector<8x32xbf16> to vector<8x8xbf16>
    %309 = vector.extract_strided_slice %236 {offsets = [0, 16], sizes = [8, 8], strides = [1, 1]} : vector<8x32xbf16> to vector<8x8xbf16>
    "tpu.trace_start"() <{level = 10 : i32, message = "td,sd->ts"}> : () -> ()
    %cst_128 = arith.constant dense<0.000000e+00> : vector<8x8xf32>
    %310 = tpu.matmul %304, %308, %cst_128 {dimension_numbers = #tpu.dot_dimension_numbers<[1], [1], [0], [0], [0, 0, 1, 0], [], []>} : vector<8x8xbf16>, vector<8x8xbf16>, vector<8x8xf32> -> vector<8x8xf32>
    "tpu.trace_stop"() : () -> ()
    %311 = vector.broadcast %214 : vector<1x8xf32> to vector<8x8xf32>
    %312 = arith.addf %310, %311 : vector<8x8xf32>
    %cst_129 = arith.constant dense<0xFF800000> : vector<8xf32>
    %313 = vector.multi_reduction <maximumf>, %312, %cst_129 [1] : vector<8x8xf32> to vector<8xf32>
    %314 = vector.shape_cast %313 : vector<8xf32> to vector<8x1xf32>
    %315 = arith.maximumf %305, %314 : vector<8x1xf32>
    %316 = arith.subf %305, %315 : vector<8x1xf32>
    %317 = math.exp %316 : vector<8x1xf32>
    %318 = vector.broadcast %315 : vector<8x1xf32> to vector<8x8xf32>
    %319 = arith.subf %312, %318 : vector<8x8xf32>
    %320 = math.exp %319 : vector<8x8xf32>
    %321 = arith.mulf %317, %306 : vector<8x1xf32>
    %cst_130 = arith.constant dense<0.000000e+00> : vector<8xf32>
    %322 = vector.multi_reduction <add>, %320, %cst_130 [1] : vector<8x8xf32> to vector<8xf32>
    %323 = vector.shape_cast %322 : vector<8xf32> to vector<8x1xf32>
    %324 = arith.addf %321, %323 : vector<8x1xf32>
    %325 = vector.broadcast %317 : vector<8x1xf32> to vector<8x8xf32>
    %326 = arith.mulf %325, %307 : vector<8x8xf32>
    %327 = arith.truncf %320 : vector<8x8xf32> to vector<8x8xbf16>
    "tpu.trace_start"() <{level = 10 : i32, message = "ts,sd->td"}> : () -> ()
    %cst_131 = arith.constant dense<0.000000e+00> : vector<8x8xf32>
    %328 = tpu.matmul %327, %309, %cst_131 {dimension_numbers = #tpu.dot_dimension_numbers<[1], [0], [0], [1], [0, 0, 1, 1], [], []>} : vector<8x8xbf16>, vector<8x8xbf16>, vector<8x8xf32> -> vector<8x8xf32>
    "tpu.trace_stop"() : () -> ()
    %329 = arith.addf %326, %328 : vector<8x8xf32>
    %330 = tpu.reciprocal %324 {approx = true} : vector<8x1xf32> -> vector<8x1xf32>
    %331 = vector.broadcast %330 : vector<8x1xf32> to vector<8x8xf32>
    %332 = arith.mulf %329, %331 : vector<8x8xf32>
    %333 = arith.truncf %332 : vector<8x8xf32> to vector<8x8xbf16>
    %c16_132 = arith.constant 16 : index
    %c0_133 = arith.constant 0 : index
    %334 = vector.load %arg23[%c16_132, %c0_133] : memref<32x32xbf16, #tpu.memory_space<vmem>>, vector<8x32xbf16>
    %cst_134 = arith.constant dense<0.000000e+00> : vector<8x32xf32>
    %335 = tpu.matmul %333, %334, %cst_134 {dimension_numbers = #tpu.dot_dimension_numbers<[1], [0], [0], [1], [0, 0, 1, 1], [], []>} : vector<8x8xbf16>, vector<8x32xbf16>, vector<8x32xf32> -> vector<8x32xf32>
    %336 = arith.addf %303, %335 : vector<8x32xf32>
    %337 = vector.extract_strided_slice %234 {offsets = [0, 24], sizes = [8, 8], strides = [1, 1]} : vector<8x32xbf16> to vector<8x8xbf16>
    %cst_135 = arith.constant -1.000000e+30 : f32
    %338 = vector.broadcast %cst_135 : f32 to vector<8x1xf32>
    %cst_136 = arith.constant 0.000000e+00 : f32
    %339 = vector.broadcast %cst_136 : f32 to vector<8x1xf32>
    %cst_137 = arith.constant 0.000000e+00 : f32
    %340 = vector.broadcast %cst_137 : f32 to vector<8x8xf32>
    %341 = vector.extract_strided_slice %235 {offsets = [0, 24], sizes = [8, 8], strides = [1, 1]} : vector<8x32xbf16> to vector<8x8xbf16>
    %342 = vector.extract_strided_slice %236 {offsets = [0, 24], sizes = [8, 8], strides = [1, 1]} : vector<8x32xbf16> to vector<8x8xbf16>
    "tpu.trace_start"() <{level = 10 : i32, message = "td,sd->ts"}> : () -> ()
    %cst_138 = arith.constant dense<0.000000e+00> : vector<8x8xf32>
    %343 = tpu.matmul %337, %341, %cst_138 {dimension_numbers = #tpu.dot_dimension_numbers<[1], [1], [0], [0], [0, 0, 1, 0], [], []>} : vector<8x8xbf16>, vector<8x8xbf16>, vector<8x8xf32> -> vector<8x8xf32>
    "tpu.trace_stop"() : () -> ()
    %344 = vector.broadcast %214 : vector<1x8xf32> to vector<8x8xf32>
    %345 = arith.addf %343, %344 : vector<8x8xf32>
    %cst_139 = arith.constant dense<0xFF800000> : vector<8xf32>
    %346 = vector.multi_reduction <maximumf>, %345, %cst_139 [1] : vector<8x8xf32> to vector<8xf32>
    %347 = vector.shape_cast %346 : vector<8xf32> to vector<8x1xf32>
    %348 = arith.maximumf %338, %347 : vector<8x1xf32>
    %349 = arith.subf %338, %348 : vector<8x1xf32>
    %350 = math.exp %349 : vector<8x1xf32>
    %351 = vector.broadcast %348 : vector<8x1xf32> to vector<8x8xf32>
    %352 = arith.subf %345, %351 : vector<8x8xf32>
    %353 = math.exp %352 : vector<8x8xf32>
    %354 = arith.mulf %350, %339 : vector<8x1xf32>
    %cst_140 = arith.constant dense<0.000000e+00> : vector<8xf32>
    %355 = vector.multi_reduction <add>, %353, %cst_140 [1] : vector<8x8xf32> to vector<8xf32>
    %356 = vector.shape_cast %355 : vector<8xf32> to vector<8x1xf32>
    %357 = arith.addf %354, %356 : vector<8x1xf32>
    %358 = vector.broadcast %350 : vector<8x1xf32> to vector<8x8xf32>
    %359 = arith.mulf %358, %340 : vector<8x8xf32>
    %360 = arith.truncf %353 : vector<8x8xf32> to vector<8x8xbf16>
    "tpu.trace_start"() <{level = 10 : i32, message = "ts,sd->td"}> : () -> ()
    %cst_141 = arith.constant dense<0.000000e+00> : vector<8x8xf32>
    %361 = tpu.matmul %360, %342, %cst_141 {dimension_numbers = #tpu.dot_dimension_numbers<[1], [0], [0], [1], [0, 0, 1, 1], [], []>} : vector<8x8xbf16>, vector<8x8xbf16>, vector<8x8xf32> -> vector<8x8xf32>
    "tpu.trace_stop"() : () -> ()
    %362 = arith.addf %359, %361 : vector<8x8xf32>
    %363 = tpu.reciprocal %357 {approx = true} : vector<8x1xf32> -> vector<8x1xf32>
    %364 = vector.broadcast %363 : vector<8x1xf32> to vector<8x8xf32>
    %365 = arith.mulf %362, %364 : vector<8x8xf32>
    %366 = arith.truncf %365 : vector<8x8xf32> to vector<8x8xbf16>
    %c24_142 = arith.constant 24 : index
    %c0_143 = arith.constant 0 : index
    %367 = vector.load %arg23[%c24_142, %c0_143] : memref<32x32xbf16, #tpu.memory_space<vmem>>, vector<8x32xbf16>
    %cst_144 = arith.constant dense<0.000000e+00> : vector<8x32xf32>
    %368 = tpu.matmul %366, %367, %cst_144 {dimension_numbers = #tpu.dot_dimension_numbers<[1], [0], [0], [1], [0, 0, 1, 1], [], []>} : vector<8x8xbf16>, vector<8x32xbf16>, vector<8x32xf32> -> vector<8x32xf32>
    %369 = arith.addf %336, %368 : vector<8x32xf32>
    %c0_145 = arith.constant 0 : index
    %c0_146 = arith.constant 0 : index
    %370 = vector.load %arg24[%c0_145, %c0_146] : memref<1x32xf32, #tpu.memory_space<vmem>>, vector<1x32xf32>
    %371 = vector.broadcast %370 : vector<1x32xf32> to vector<8x32xf32>
    %372 = arith.addf %369, %371 : vector<8x32xf32>
    %373 = arith.addf %184, %372 : vector<8x32xf32>
    %c0_147 = arith.constant 0 : index
    %c0_148 = arith.constant 0 : index
    %374 = vector.load %arg25[%c0_147, %c0_148] : memref<1x32xf32, #tpu.memory_space<vmem>>, vector<1x32xf32>
    %c0_149 = arith.constant 0 : index
    %c0_150 = arith.constant 0 : index
    %375 = vector.load %arg26[%c0_149, %c0_150] : memref<1x32xf32, #tpu.memory_space<vmem>>, vector<1x32xf32>
    %cst_151 = arith.constant dense<0.000000e+00> : vector<8xf32>
    %376 = vector.multi_reduction <add>, %373, %cst_151 [1] : vector<8x32xf32> to vector<8xf32>
    %377 = vector.shape_cast %376 : vector<8xf32> to vector<8x1xf32>
    %cst_152 = arith.constant 3.200000e+01 : f32
    %378 = vector.broadcast %cst_152 : f32 to vector<8x1xf32>
    %379 = arith.divf %377, %378 : vector<8x1xf32>
    %380 = vector.broadcast %379 : vector<8x1xf32> to vector<8x32xf32>
    %381 = arith.subf %373, %380 : vector<8x32xf32>
    %382 = arith.mulf %381, %381 : vector<8x32xf32>
    %cst_153 = arith.constant dense<0.000000e+00> : vector<8xf32>
    %383 = vector.multi_reduction <add>, %382, %cst_153 [1] : vector<8x32xf32> to vector<8xf32>
    %384 = vector.shape_cast %383 : vector<8xf32> to vector<8x1xf32>
    %cst_154 = arith.constant 0.0322580636 : f32
    %385 = vector.broadcast %cst_154 : f32 to vector<8x1xf32>
    %386 = arith.mulf %384, %385 : vector<8x1xf32>
    %387 = math.sqrt %386 : vector<8x1xf32>
    %388 = vector.broadcast %374 : vector<1x32xf32> to vector<8x32xf32>
    %389 = arith.mulf %388, %381 : vector<8x32xf32>
    %cst_155 = arith.constant 9.99999997E-7 : f32
    %390 = vector.broadcast %cst_155 : f32 to vector<8x1xf32>
    %391 = arith.addf %387, %390 : vector<8x1xf32>
    %392 = vector.broadcast %391 : vector<8x1xf32> to vector<8x32xf32>
    %393 = arith.divf %389, %392 : vector<8x32xf32>
    %394 = vector.broadcast %375 : vector<1x32xf32> to vector<8x32xf32>
    %395 = arith.addf %393, %394 : vector<8x32xf32>
    %396 = arith.truncf %395 : vector<8x32xf32> to vector<8x32xbf16>
    %cst_156 = arith.constant 0.000000e+00 : f32
    %397 = vector.broadcast %cst_156 : f32 to vector<8x32xf32>
    %c0_157 = arith.constant 0 : index
    %c0_158 = arith.constant 0 : index
    %398 = vector.load %arg27[%c0_157, %c0_158] : memref<32x64xbf16, #tpu.memory_space<vmem>>, vector<32x64xbf16>
    %cst_159 = arith.constant dense<0.000000e+00> : vector<8x64xf32>
    %399 = tpu.matmul %396, %398, %cst_159 {dimension_numbers = #tpu.dot_dimension_numbers<[1], [0], [0], [1], [0, 0, 1, 1], [], []>} : vector<8x32xbf16>, vector<32x64xbf16>, vector<8x64xf32> -> vector<8x64xf32>
    %c0_160 = arith.constant 0 : index
    %c0_161 = arith.constant 0 : index
    %400 = vector.load %arg28[%c0_160, %c0_161] : memref<1x64xf32, #tpu.memory_space<vmem>>, vector<1x64xf32>
    %401 = vector.broadcast %400 : vector<1x64xf32> to vector<8x64xf32>
    %402 = arith.addf %399, %401 : vector<8x64xf32>
    %cst_162 = arith.constant 0.000000e+00 : f32
    %403 = vector.broadcast %cst_162 : f32 to vector<8x64xf32>
    %404 = arith.maximumf %402, %403 : vector<8x64xf32>
    %405 = arith.truncf %404 : vector<8x64xf32> to vector<8x64xbf16>
    %c0_163 = arith.constant 0 : index
    %c0_164 = arith.constant 0 : index
    %406 = vector.load %arg29[%c0_163, %c0_164] : memref<64x32xbf16, #tpu.memory_space<vmem>>, vector<64x32xbf16>
    %cst_165 = arith.constant dense<0.000000e+00> : vector<8x32xf32>
    %407 = tpu.matmul %405, %406, %cst_165 {dimension_numbers = #tpu.dot_dimension_numbers<[1], [0], [0], [1], [0, 0, 1, 1], [], []>} : vector<8x64xbf16>, vector<64x32xbf16>, vector<8x32xf32> -> vector<8x32xf32>
    %408 = arith.addf %397, %407 : vector<8x32xf32>
    %c0_166 = arith.constant 0 : index
    %c0_167 = arith.constant 0 : index
    %409 = vector.load %arg30[%c0_166, %c0_167] : memref<1x32xf32, #tpu.memory_space<vmem>>, vector<1x32xf32>
    %410 = vector.broadcast %409 : vector<1x32xf32> to vector<8x32xf32>
    %411 = arith.addf %408, %410 : vector<8x32xf32>
    %412 = arith.addf %373, %411 : vector<8x32xf32>
    %c0_168 = arith.constant 0 : index
    %c0_169 = arith.constant 0 : index
    %c0_170 = arith.constant 0 : index
    %413 = vector.load %arg31[%c0_168, %c0_169, %c0_170] : memref<1x8x32xf32, #tpu.memory_space<vmem>>, vector<1x8x32xf32>
    %414 = vector.shape_cast %413 : vector<1x8x32xf32> to vector<8x32xf32>
    %415 = vector.shape_cast %412 : vector<8x32xf32> to vector<1x8x32xf32>
    tpu.vector_store %arg31[%c0_168, %c0_169, %c0_170], %415 {strides = array<i32>} : memref<1x8x32xf32, #tpu.memory_space<vmem>>, vector<1x8x32xf32>,
    return
  }
  func.func @transform_0(%arg0: i32) -> (i32, i32, i32) {
    %c0_i32 = arith.constant 0 : i32
    %c0_i32_0 = arith.constant 0 : i32
    %c0_i32_1 = arith.constant 0 : i32
    return %arg0, %c0_i32, %c0_i32_0 : i32, i32, i32
  }
  func.func @transform_1(%arg0: i32) -> (i32, i32, i32) {
    %c0_i32 = arith.constant 0 : i32
    %c0_i32_0 = arith.constant 0 : i32
    %c0_i32_1 = arith.constant 0 : i32
    return %arg0, %c0_i32, %c0_i32_0 : i32, i32, i32
  }
  func.func @transform_2(%arg0: i32) -> (i32, i32, i32) {
    %c0_i32 = arith.constant 0 : i32
    %c0_i32_0 = arith.constant 0 : i32
    %c0_i32_1 = arith.constant 0 : i32
    %c0_i32_2 = arith.constant 0 : i32
    return %c0_i32, %c0_i32_0, %c0_i32_1 : i32, i32, i32
  }
  func.func @transform_3(%arg0: i32) -> (i32, i32, i32) {
    %c0_i32 = arith.constant 0 : i32
    %c0_i32_0 = arith.constant 0 : i32
    %c0_i32_1 = arith.constant 0 : i32
    return %arg0, %c0_i32, %c0_i32_0 : i32, i32, i32
  }
  func.func @transform_4(%arg0: i32) -> (i32, i32) {
    %c0_i32 = arith.constant 0 : i32
    %c0_i32_0 = arith.constant 0 : i32
    %c0_i32_1 = arith.constant 0 : i32
    return %c0_i32, %c0_i32_0 : i32, i32
  }
  func.func @transform_5(%arg0: i32) -> (i32, i32) {
    %c0_i32 = arith.constant 0 : i32
    %c0_i32_0 = arith.constant 0 : i32
    %c0_i32_1 = arith.constant 0 : i32
    return %c0_i32, %c0_i32_0 : i32, i32
  }
  func.func @transform_6(%arg0: i32) -> (i32, i32) {
    %c0_i32 = arith.constant 0 : i32
    %c0_i32_0 = arith.constant 0 : i32
    %c0_i32_1 = arith.constant 0 : i32
    return %c0_i32, %c0_i32_0 : i32, i32
  }
  func.func @transform_7(%arg0: i32) -> (i32, i32) {
    %c0_i32 = arith.constant 0 : i32
    %c0_i32_0 = arith.constant 0 : i32
    %c0_i32_1 = arith.constant 0 : i32
    return %c0_i32, %c0_i32_0 : i32, i32
  }
  func.func @transform_8(%arg0: i32) -> (i32, i32) {
    %c0_i32 = arith.constant 0 : i32
    %c0_i32_0 = arith.constant 0 : i32
    %c0_i32_1 = arith.constant 0 : i32
    return %c0_i32, %c0_i32_0 : i32, i32
  }
  func.func @transform_9(%arg0: i32) -> (i32, i32) {
    %c0_i32 = arith.constant 0 : i32
    %c0_i32_0 = arith.constant 0 : i32
    %c0_i32_1 = arith.constant 0 : i32
    return %c0_i32, %c0_i32_0 : i32, i32
  }
  func.func @transform_10(%arg0: i32) -> (i32, i32) {
    %c0_i32 = arith.constant 0 : i32
    %c0_i32_0 = arith.constant 0 : i32
    %c0_i32_1 = arith.constant 0 : i32
    return %c0_i32, %c0_i32_0 : i32, i32
  }
  func.func @transform_11(%arg0: i32) -> (i32, i32) {
    %c0_i32 = arith.constant 0 : i32
    %c0_i32_0 = arith.constant 0 : i32
    %c0_i32_1 = arith.constant 0 : i32
    return %c0_i32, %c0_i32_0 : i32, i32
  }
  func.func @transform_12(%arg0: i32) -> (i32, i32) {
    %c0_i32 = arith.constant 0 : i32
    %c0_i32_0 = arith.constant 0 : i32
    %c0_i32_1 = arith.constant 0 : i32
    return %c0_i32, %c0_i32_0 : i32, i32
  }
  func.func @transform_13(%arg0: i32) -> (i32, i32) {
    %c0_i32 = arith.constant 0 : i32
    %c0_i32_0 = arith.constant 0 : i32
    %c0_i32_1 = arith.constant 0 : i32
    return %c0_i32, %c0_i32_0 : i32, i32
  }
  func.func @transform_14(%arg0: i32) -> (i32, i32) {
    %c0_i32 = arith.constant 0 : i32
    %c0_i32_0 = arith.constant 0 : i32
    %c0_i32_1 = arith.constant 0 : i32
    return %c0_i32, %c0_i32_0 : i32, i32
  }
  func.func @transform_15(%arg0: i32) -> (i32, i32) {
    %c0_i32 = arith.constant 0 : i32
    %c0_i32_0 = arith.constant 0 : i32
    %c0_i32_1 = arith.constant 0 : i32
    return %c0_i32, %c0_i32_0 : i32, i32
  }
  func.func @transform_16(%arg0: i32) -> (i32, i32) {
    %c0_i32 = arith.constant 0 : i32
    %c0_i32_0 = arith.constant 0 : i32
    %c0_i32_1 = arith.constant 0 : i32
    return %c0_i32, %c0_i32_0 : i32, i32
  }
  func.func @transform_17(%arg0: i32) -> (i32, i32) {
    %c0_i32 = arith.constant 0 : i32
    %c0_i32_0 = arith.constant 0 : i32
    %c0_i32_1 = arith.constant 0 : i32
    return %c0_i32, %c0_i32_0 : i32, i32
  }
  func.func @transform_18(%arg0: i32) -> (i32, i32) {
    %c0_i32 = arith.constant 0 : i32
    %c0_i32_0 = arith.constant 0 : i32
    %c0_i32_1 = arith.constant 0 : i32
    return %c0_i32, %c0_i32_0 : i32, i32
  }
  func.func @transform_19(%arg0: i32) -> (i32, i32) {
    %c0_i32 = arith.constant 0 : i32
    %c0_i32_0 = arith.constant 0 : i32
    %c0_i32_1 = arith.constant 0 : i32
    return %c0_i32, %c0_i32_0 : i32, i32
  }
  func.func @transform_20(%arg0: i32) -> (i32, i32) {
    %c0_i32 = arith.constant 0 : i32
    %c0_i32_0 = arith.constant 0 : i32
    %c0_i32_1 = arith.constant 0 : i32
    return %c0_i32, %c0_i32_0 : i32, i32
  }
  func.func @transform_21(%arg0: i32) -> (i32, i32) {
    %c0_i32 = arith.constant 0 : i32
    %c0_i32_0 = arith.constant 0 : i32
    %c0_i32_1 = arith.constant 0 : i32
    return %c0_i32, %c0_i32_0 : i32, i32
  }
  func.func @transform_22(%arg0: i32) -> (i32, i32) {
    %c0_i32 = arith.constant 0 : i32
    %c0_i32_0 = arith.constant 0 : i32
    %c0_i32_1 = arith.constant 0 : i32
    return %c0_i32, %c0_i32_0 : i32, i32
  }
  func.func @transform_23(%arg0: i32) -> (i32, i32) {
    %c0_i32 = arith.constant 0 : i32
    %c0_i32_0 = arith.constant 0 : i32
    %c0_i32_1 = arith.constant 0 : i32
    return %c0_i32, %c0_i32_0 : i32, i32
  }
  func.func @transform_24(%arg0: i32) -> (i32, i32) {
    %c0_i32 = arith.constant 0 : i32
    %c0_i32_0 = arith.constant 0 : i32
    %c0_i32_1 = arith.constant 0 : i32
    return %c0_i32, %c0_i32_0 : i32, i32
  }
  func.func @transform_25(%arg0: i32) -> (i32, i32) {
    %c0_i32 = arith.constant 0 : i32
    %c0_i32_0 = arith.constant 0 : i32
    %c0_i32_1 = arith.constant 0 : i32
    return %c0_i32, %c0_i32_0 : i32, i32
  }
  func.func @transform_26(%arg0: i32) -> (i32, i32) {
    %c0_i32 = arith.constant 0 : i32
    %c0_i32_0 = arith.constant 0 : i32
    %c0_i32_1 = arith.constant 0 : i32
    return %c0_i32, %c0_i32_0 : i32, i32
  }
  func.func @transform_27(%arg0: i32) -> (i32, i32) {
    %c0_i32 = arith.constant 0 : i32
    %c0_i32_0 = arith.constant 0 : i32
    %c0_i32_1 = arith.constant 0 : i32
    return %c0_i32, %c0_i32_0 : i32, i32
  }
  func.func @transform_28(%arg0: i32) -> (i32, i32) {
    %c0_i32 = arith.constant 0 : i32
    %c0_i32_0 = arith.constant 0 : i32
    %c0_i32_1 = arith.constant 0 : i32
    return %c0_i32, %c0_i32_0 : i32, i32
  }
  func.func @transform_29(%arg0: i32) -> (i32, i32) {
    %c0_i32 = arith.constant 0 : i32
    %c0_i32_0 = arith.constant 0 : i32
    %c0_i32_1 = arith.constant 0 : i32
    return %c0_i32, %c0_i32_0 : i32, i32
  }
  func.func @transform_30(%arg0: i32) -> (i32, i32, i32) {
    %c0_i32 = arith.constant 0 : i32
    %c0_i32_0 = arith.constant 0 : i32
    %c0_i32_1 = arith.constant 0 : i32
    return %arg0, %c0_i32, %c0_i32_0 : i32, i32, i32
  }
}

</mosaic_0001>

<llo_original>
// kernel: decoder_forward.2
$region0: #{decoder_forward.2}
  #allocation0 [shape = 'u32[]', space=smem, size = 0x4, offset = 0x4, fixed_abs, tag = 'smem constant byte address 0x4 - core index']
  #allocation1 [shape = 'u32[144,128]{1,0:T(1,128)}', space=vmem, size = 0x12000, scoped, tag = 'internal scratch']
  %s0 = inlined_call_operand.smem [shape: u32[31], index: -1, kind: input, shape index: {}]
  %s1 = sld [smem:[%s0]]
  %s2 = scalar_lea.smem %s0, 1
  %s3 = sld [smem:[%s2]]
  %s4 = scalar_lea.smem %s0, 2
  %s5 = sld [smem:[%s4]]
  %s6 = scalar_lea.smem %s0, 3
  %s7 = sld [smem:[%s6]]
  %s8 = scalar_lea.smem %s0, 4
  %s9 = sld [smem:[%s8]]
  %s10 = scalar_lea.smem %s0, 5
  %s11 = sld [smem:[%s10]]
  %s12 = scalar_lea.smem %s0, 6
  %s13 = sld [smem:[%s12]]
  %s14 = scalar_lea.smem %s0, 7
  %s15 = sld [smem:[%s14]]
  %s16 = scalar_lea.smem %s0, 8
  %s17 = sld [smem:[%s16]]
  %s18 = scalar_lea.smem %s0, 9
  %s19 = sld [smem:[%s18]]
  %s20 = scalar_lea.smem %s0, 10
  %s21 = sld [smem:[%s20]]
  %s22 = scalar_lea.smem %s0, 11
  %s23 = sld [smem:[%s22]]
  %s24 = scalar_lea.smem %s0, 12
  %s25 = sld [smem:[%s24]]
  %s26 = scalar_lea.smem %s0, 13
  %s27 = sld [smem:[%s26]]
  %s28 = scalar_lea.smem %s0, 14
  %s29 = sld [smem:[%s28]]
  %s30 = scalar_lea.smem %s0, 15
  %s31 = sld [smem:[%s30]]
  %s32 = scalar_lea.smem %s0, 16
  %s33 = sld [smem:[%s32]]
  %s34 = scalar_lea.smem %s0, 17
  %s35 = sld [smem:[%s34]]
  %s36 = scalar_lea.smem %s0, 18
  %s37 = sld [smem:[%s36]]
  %s38 = scalar_lea.smem %s0, 19
  %s39 = sld [smem:[%s38]]
  %s40 = scalar_lea.smem %s0, 20
  %s41 = sld [smem:[%s40]]
  %s42 = scalar_lea.smem %s0, 21
  %s43 = sld [smem:[%s42]]
  %s44 = scalar_lea.smem %s0, 22
  %s45 = sld [smem:[%s44]]
  %s46 = scalar_lea.smem %s0, 23
  %s47 = sld [smem:[%s46]]
  %s48 = scalar_lea.smem %s0, 24
  %s49 = sld [smem:[%s48]]
  %s50 = scalar_lea.smem %s0, 25
  %s51 = sld [smem:[%s50]]
  %s52 = scalar_lea.smem %s0, 26
  %s53 = sld [smem:[%s52]]
  %s54 = scalar_lea.smem %s0, 27
  %s55 = sld [smem:[%s54]]
  %s56 = scalar_lea.smem %s0, 28
  %s57 = sld [smem:[%s56]]
  %s58 = scalar_lea.smem %s0, 29
  %s59 = sld [smem:[%s58]]
  %s60 = scalar_lea.smem %s0, 30
  %s61 = sld [smem:[%s60]]
  %s62 = sld [smem:[#allocation0]]
  $region273: #{decoder_forward.2} parent=0
    _
  %s64 = ssub.s32 1, %s62
  %s65 = scalar_select 0, %s64, %s62
  $region1: #{decoder_forward.2} parent=0
    #allocation2 [shape = 'u8[8192]{0}', space=vmem, size = 0x2000, scoped, tag = 'input window, operand 0']
    #allocation3 [shape = 's32[2]{0}', space=sflag, size = 0x8, scoped, tag = 'scoped memory for decoder_forward.2']
    #allocation4 [shape = 's32[2]{0}', space=sflag, size = 0x8, scoped, tag = 'scoped memory for decoder_forward.2']
    #allocation5 [shape = 'u8[8192]{0}', space=vmem, size = 0x2000, scoped, tag = 'input window, operand 1']
    #allocation6 [shape = 's32[2]{0}', space=sflag, size = 0x8, scoped, tag = 'scoped memory for decoder_forward.2']
    #allocation7 [shape = 'u8[4096]{0}', space=vmem, size = 0x1000, scoped, tag = 'input window, operand 2, single buffered']
    #allocation8 [shape = 'u8[1024]{0}', space=vmem, size = 0x400, scoped, tag = 'input window, operand 3']
    #allocation9 [shape = 's32[2]{0}', space=sflag, size = 0x8, scoped, tag = 'scoped memory for decoder_forward.2']
    #allocation10 [shape = 'u8[512]{0}', space=vmem, size = 0x400, scoped, tag = 'input window, operand 4, single buffered']
    #allocation11 [shape = 'u8[512]{0}', space=vmem, size = 0x400, scoped, tag = 'input window, operand 5, single buffered']
    #allocation12 [shape = 's32[1]{0}', space=sflag, size = 0x4, scoped, tag = 'scoped memory for decoder_forward.2']
    #allocation13 [shape = 'u8[8192]{0}', space=vmem, size = 0x2000, scoped, tag = 'input window, operand 6, single buffered']
    #allocation14 [shape = 'u8[512]{0}', space=vmem, size = 0x400, scoped, tag = 'input window, operand 7, single buffered']
    #allocation15 [shape = 's32[1]{0}', space=sflag, size = 0x4, scoped, tag = 'scoped memory for decoder_forward.2']
    #allocation16 [shape = 'u8[8192]{0}', space=vmem, size = 0x2000, scoped, tag = 'input window, operand 8, single buffered']
    #allocation17 [shape = 'u8[512]{0}', space=vmem, size = 0x400, scoped, tag = 'input window, operand 9, single buffered']
    #allocation18 [shape = 's32[1]{0}', space=sflag, size = 0x4, scoped, tag = 'scoped memory for decoder_forward.2']
    #allocation19 [shape = 'u8[8192]{0}', space=vmem, size = 0x2000, scoped, tag = 'input window, operand 10, single buffered']
    #allocation20 [shape = 'u8[512]{0}', space=vmem, size = 0x400, scoped, tag = 'input window, operand 11, single buffered']
    #allocation21 [shape = 's32[1]{0}', space=sflag, size = 0x4, scoped, tag = 'scoped memory for decoder_forward.2']
    #allocation22 [shape = 'u8[8192]{0}', space=vmem, size = 0x2000, scoped, tag = 'input window, operand 12, single buffered']
    #allocation23 [shape = 'u8[512]{0}', space=vmem, size = 0x400, scoped, tag = 'input window, operand 13, single buffered']
    #allocation24 [shape = 's32[1]{0}', space=sflag, size = 0x4, scoped, tag = 'scoped memory for decoder_forward.2']
    #allocation25 [shape = 'u8[512]{0}', space=vmem, size = 0x400, scoped, tag = 'input window, operand 14, single buffered']
    #allocation26 [shape = 'u8[512]{0}', space=vmem, size = 0x400, scoped, tag = 'input window, operand 15, single buffered']
    #allocation27 [shape = 's32[1]{0}', space=sflag, size = 0x4, scoped, tag = 'scoped memory for decoder_forward.2']
    #allocation28 [shape = 'u8[8192]{0}', space=vmem, size = 0x2000, scoped, tag = 'input window, operand 16, single buffered']
    #allocation29 [shape = 'u8[512]{0}', space=vmem, size = 0x400, scoped, tag = 'input window, operand 17, single buffered']
    #allocation30 [shape = 's32[1]{0}', space=sflag, size = 0x4, scoped, tag = 'scoped memory for decoder_forward.2']
    #allocation31 [shape = 'u8[8192]{0}', space=vmem, size = 0x2000, scoped, tag = 'input window, operand 18, single buffered']
    #allocation32 [shape = 'u8[512]{0}', space=vmem, size = 0x400, scoped, tag = 'input window, operand 19, single buffered']
    #allocation33 [shape = 's32[1]{0}', space=sflag, size = 0x4, scoped, tag = 'scoped memory for decoder_forward.2']
    #allocation34 [shape = 'u8[8192]{0}', space=vmem, size = 0x2000, scoped, tag = 'input window, operand 20, single buffered']
    #allocation35 [shape = 'u8[512]{0}', space=vmem, size = 0x400, scoped, tag = 'input window, operand 21, single buffered']
    #allocation36 [shape = 's32[1]{0}', space=sflag, size = 0x4, scoped, tag = 'scoped memory for decoder_forward.2']
    #allocation37 [shape = 'u8[8192]{0}', space=vmem, size = 0x2000, scoped, tag = 'input window, operand 22, single buffered']
    #allocation38 [shape = 'u8[512]{0}', space=vmem, size = 0x400, scoped, tag = 'input window, operand 23, single buffered']
    #allocation39 [shape = 's32[1]{0}', space=sflag, size = 0x4, scoped, tag = 'scoped memory for decoder_forward.2']
    #allocation40 [shape = 'u8[512]{0}', space=vmem, size = 0x400, scoped, tag = 'input window, operand 24, single buffered']
    #allocation41 [shape = 'u8[512]{0}', space=vmem, size = 0x400, scoped, tag = 'input window, operand 25, single buffered']
    #allocation42 [shape = 's32[1]{0}', space=sflag, size = 0x4, scoped, tag = 'scoped memory for decoder_forward.2']
    #allocation43 [shape = 'u8[8192]{0}', space=vmem, size = 0x2000, scoped, tag = 'input window, operand 26, single buffered']
    #allocation44 [shape = 'u8[512]{0}', space=vmem, size = 0x400, scoped, tag = 'input window, operand 27, single buffered']
    #allocation45 [shape = 's32[1]{0}', space=sflag, size = 0x4, scoped, tag = 'scoped memory for decoder_forward.2']
    #allocation46 [shape = 'u8[16384]{0}', space=vmem, size = 0x4000, scoped, tag = 'input window, operand 28, single buffered']
    #allocation47 [shape = 'u8[512]{0}', space=vmem, size = 0x400, scoped, tag = 'input window, operand 29, single buffered']
    #allocation48 [shape = 's32[1]{0}', space=sflag, size = 0x4, scoped, tag = 'scoped memory for decoder_forward.2']
    #allocation49 [shape = 'u8[8192]{0}', space=vmem, size = 0x2000, scoped, tag = 'output window, operand 0']
    %66 = vsyncpa [#allocation3], 0
    %s67 = scalar_lea.sflag [#allocation3], 1
    %68 = vsyncpa %s67, 0
    %69 = vsyncpa [#allocation6], 0
    %s70 = scalar_lea.sflag [#allocation6], 1
    %71 = vsyncpa %s70, 0
    %72 = vsyncpa [#allocation9], 0
    %s73 = scalar_lea.sflag [#allocation9], 1
    %74 = vsyncpa %s73, 0
    %75 = vsyncpa [#allocation12], 0
    %76 = vsyncpa [#allocation15], 0
    %77 = vsyncpa [#allocation18], 0
    %78 = vsyncpa [#allocation21], 0
    %79 = vsyncpa [#allocation24], 0
    %80 = vsyncpa [#allocation27], 0
    %81 = vsyncpa [#allocation30], 0
    %82 = vsyncpa [#allocation33], 0
    %83 = vsyncpa [#allocation36], 0
    %84 = vsyncpa [#allocation39], 0
    %85 = vsyncpa [#allocation42], 0
    %86 = vsyncpa [#allocation45], 0
    %87 = vsyncpa [#allocation48], 0
    %88 = vsyncpa [#allocation4], 0
    %s89 = scalar_lea.sflag [#allocation4], 1
    %90 = vsyncpa %s89, 0
    loop: start=0, step=1, limit=4
    $region2: #{decoder_forward.2} parent=1 // loop_pre_header
      _
    $region3: #{decoder_forward.2} parent=1 // loop_header
      %s92 = sphi 0, %s96
      %p93 = scmp.ge.s32.totalorder %s92, 4
      %s102 = sphi 0, %s104
      %s105 = sphi 0, %s102
      %s106 = sphi 0, %s105
      %s122 = sphi 0, %s106
      %s128 = sphi 0, %s130
      %s131 = sphi 0, %s128
      %s132 = sphi 0, %s131
      %s148 = sphi 0, %s132
      %s152 = sphi 0, %s152
      %s154 = sphi 0, %s152
      %s155 = sphi 0, %s154
      %s169 = sphi 0, %s155
      %s175 = sphi 0, %s177
      %s178 = sphi 0, %s175
      %s179 = sphi 0, %s178
      %s195 = sphi 0, %s179
      %s199 = sphi 0, %s199
      %s201 = sphi 0, %s199
      %s202 = sphi 0, %s201
      %s216 = sphi 0, %s202
      %s220 = sphi 0, %s220
      %s222 = sphi 0, %s220
      %s223 = sphi 0, %s222
      %s237 = sphi 0, %s223
      %s241 = sphi 0, %s241
      %s243 = sphi 0, %s241
      %s244 = sphi 0, %s243
      %s258 = sphi 0, %s244
      %s262 = sphi 0, %s262
      %s264 = sphi 0, %s262
      %s265 = sphi 0, %s264
      %s279 = sphi 0, %s265
      %s283 = sphi 0, %s283
      %s285 = sphi 0, %s283
      %s286 = sphi 0, %s285
      %s300 = sphi 0, %s286
      %s304 = sphi 0, %s304
      %s306 = sphi 0, %s304
      %s307 = sphi 0, %s306
      %s321 = sphi 0, %s307
      %s325 = sphi 0, %s325
      %s327 = sphi 0, %s325
      %s328 = sphi 0, %s327
      %s342 = sphi 0, %s328
      %s346 = sphi 0, %s346
      %s348 = sphi 0, %s346
      %s349 = sphi 0, %s348
      %s363 = sphi 0, %s349
      %s367 = sphi 0, %s367
      %s369 = sphi 0, %s367
      %s370 = sphi 0, %s369
      %s384 = sphi 0, %s370
      %s388 = sphi 0, %s388
      %s390 = sphi 0, %s388
      %s391 = sphi 0, %s390
      %s405 = sphi 0, %s391
      %s409 = sphi 0, %s409
      %s411 = sphi 0, %s409
      %s412 = sphi 0, %s411
      %s426 = sphi 0, %s412
      %s430 = sphi 0, %s430
      %s432 = sphi 0, %s430
      %s433 = sphi 0, %s432
      %s447 = sphi 0, %s433
      %s451 = sphi 0, %s451
      %s453 = sphi 0, %s451
      %s454 = sphi 0, %s453
      %s468 = sphi 0, %s454
      %s472 = sphi 0, %s472
      %s474 = sphi 0, %s472
      %s475 = sphi 0, %s474
      %s489 = sphi 0, %s475
      %s493 = sphi 0, %s493
      %s495 = sphi 0, %s493
      %s496 = sphi 0, %s495
      %s510 = sphi 0, %s496
      %s514 = sphi 0, %s514
      %s516 = sphi 0, %s514
      %s517 = sphi 0, %s516
      %s531 = sphi 0, %s517
      %s535 = sphi 0, %s535
      %s537 = sphi 0, %s535
      %s538 = sphi 0, %s537
      %s552 = sphi 0, %s538
      %s556 = sphi 0, %s556
      %s558 = sphi 0, %s556
      %s559 = sphi 0, %s558
      %s573 = sphi 0, %s559
      %s577 = sphi 0, %s577
      %s579 = sphi 0, %s577
      %s580 = sphi 0, %s579
      %s594 = sphi 0, %s580
      %s598 = sphi 0, %s598
      %s600 = sphi 0, %s598
      %s601 = sphi 0, %s600
      %s615 = sphi 0, %s601
      %s619 = sphi 0, %s619
      %s621 = sphi 0, %s619
      %s622 = sphi 0, %s621
      %s636 = sphi 0, %s622
      %s640 = sphi 0, %s640
      %s642 = sphi 0, %s640
      %s643 = sphi 0, %s642
      %s657 = sphi 0, %s643
      %s661 = sphi 0, %s661
      %s663 = sphi 0, %s661
      %s664 = sphi 0, %s663
      %s678 = sphi 0, %s664
      %s682 = sphi 0, %s682
      %s684 = sphi 0, %s682
      %s685 = sphi 0, %s684
      %s699 = sphi 0, %s685
      %s703 = sphi 0, %s703
      %s705 = sphi 0, %s703
      %s706 = sphi 0, %s705
      %s720 = sphi 0, %s706
      %s724 = sphi 0, %s724
      %s726 = sphi 0, %s724
      %s727 = sphi 0, %s726
      %s741 = sphi 0, %s727
      %s747 = sphi 0, %s749
      %s750 = sphi 0, %s747
      %s751 = sphi 0, %s750
      %s767 = sphi 0, %s751
    $region4: #{decoder_forward.2} parent=1 // loop_header_branch
      %95 = sbr.rel (%p93) target = $region8
    $region5: #{decoder_forward.2} parent=1 // loop_body
      %s97 = ssub.s32 %s92, 1
      %s98 = ssub.s32 %s92, 2
      %s99 = sadd.s32 %s92, 1
      %s100 = ssub.s32 %s92, %s99
      %p101 = scmp.eq.s32.totalorder %s100, 0
      %s103 = sadd.s32 %s102, 1
      %s104 = scalar_select %p101, %s102, %s103
      %p107 = pneg %p101
      %p108 = scmp.eq.s32.totalorder %s92, 1
      %p109 = por %p107, %p108
      %p110 = scmp.ne.s32.totalorder %s102, %s105
      %p111 = scmp.eq.s32.totalorder %s92, 0
      %p112 = por %p110, %p111
      %p113 = scmp.ne.s32.totalorder %s102, %s105
      %p114 = scmp.eq.s32.totalorder %s97, 1
      %p115 = por %p113, %p114
      %p116 = scmp.ne.s32.totalorder %s105, %s106
      %p117 = scmp.eq.s32.totalorder %s97, 0
      %p118 = por %p116, %p117
      %p119 = scmp.ne.s32.totalorder %s105, %s106
      %p120 = scmp.eq.s32.totalorder %s98, 1
      %p121 = por %p119, %p120
      %p123 = scmp.ne.s32.totalorder %s106, %s122
      %p124 = scmp.eq.s32.totalorder %s98, 0
      %p125 = por %p123, %p124
      %s126 = ssub.s32 %s92, %s99
      %p127 = scmp.eq.s32.totalorder %s126, 0
      %s129 = sadd.s32 %s128, 1
      %s130 = scalar_select %p127, %s128, %s129
      %p133 = pneg %p127
      %p134 = scmp.eq.s32.totalorder %s92, 1
      %p135 = por %p133, %p134
      %p136 = scmp.ne.s32.totalorder %s128, %s131
      %p137 = scmp.eq.s32.totalorder %s92, 0
      %p138 = por %p136, %p137
      %p139 = scmp.ne.s32.totalorder %s128, %s131
      %p140 = scmp.eq.s32.totalorder %s97, 1
      %p141 = por %p139, %p140
      %p142 = scmp.ne.s32.totalorder %s131, %s132
      %p143 = scmp.eq.s32.totalorder %s97, 0
      %p144 = por %p142, %p143
      %p145 = scmp.ne.s32.totalorder %s131, %s132
      %p146 = scmp.eq.s32.totalorder %s98, 1
      %p147 = por %p145, %p146
      %p149 = scmp.ne.s32.totalorder %s132, %s148
      %p150 = scmp.eq.s32.totalorder %s98, 0
      %p151 = por %p149, %p150
      %s153 = sadd.s32 %s152, 1
      %p156 = scmp.eq.s32.totalorder %s92, 1
      %p157 = scmp.ne.s32.totalorder %s152, %s154
      %p158 = scmp.eq.s32.totalorder %s92, 0
      %p159 = por %p157, %p158
      %p160 = scmp.ne.s32.totalorder %s152, %s154
      %p161 = scmp.eq.s32.totalorder %s97, 1
      %p162 = por %p160, %p161
      %p163 = scmp.ne.s32.totalorder %s154, %s155
      %p164 = scmp.eq.s32.totalorder %s97, 0
      %p165 = por %p163, %p164
      %p166 = scmp.ne.s32.totalorder %s154, %s155
      %p167 = scmp.eq.s32.totalorder %s98, 1
      %p168 = por %p166, %p167
      %p170 = scmp.ne.s32.totalorder %s155, %s169
      %p171 = scmp.eq.s32.totalorder %s98, 0
      %p172 = por %p170, %p171
      %s173 = ssub.s32 %s92, %s99
      %p174 = scmp.eq.s32.totalorder %s173, 0
      %s176 = sadd.s32 %s175, 1
      %s177 = scalar_select %p174, %s175, %s176
      %p180 = pneg %p174
      %p181 = scmp.eq.s32.totalorder %s92, 1
      %p182 = por %p180, %p181
      %p183 = scmp.ne.s32.totalorder %s175, %s178
      %p184 = scmp.eq.s32.totalorder %s92, 0
      %p185 = por %p183, %p184
      %p186 = scmp.ne.s32.totalorder %s175, %s178
      %p187 = scmp.eq.s32.totalorder %s97, 1
      %p188 = por %p186, %p187
      %p189 = scmp.ne.s32.totalorder %s178, %s179
      %p190 = scmp.eq.s32.totalorder %s97, 0
      %p191 = por %p189, %p190
      %p192 = scmp.ne.s32.totalorder %s178, %s179
      %p193 = scmp.eq.s32.totalorder %s98, 1
      %p194 = por %p192, %p193
      %p196 = scmp.ne.s32.totalorder %s179, %s195
      %p197 = scmp.eq.s32.totalorder %s98, 0
      %p198 = por %p196, %p197
      %s200 = sadd.s32 %s199, 1
      %p203 = scmp.eq.s32.totalorder %s92, 1
      %p204 = scmp.ne.s32.totalorder %s199, %s201
      %p205 = scmp.eq.s32.totalorder %s92, 0
      %p206 = por %p204, %p205
      %p207 = scmp.ne.s32.totalorder %s199, %s201
      %p208 = scmp.eq.s32.totalorder %s97, 1
      %p209 = por %p207, %p208
      %p210 = scmp.ne.s32.totalorder %s201, %s202
      %p211 = scmp.eq.s32.totalorder %s97, 0
      %p212 = por %p210, %p211
      %p213 = scmp.ne.s32.totalorder %s201, %s202
      %p214 = scmp.eq.s32.totalorder %s98, 1
      %p215 = por %p213, %p214
      %p217 = scmp.ne.s32.totalorder %s202, %s216
      %p218 = scmp.eq.s32.totalorder %s98, 0
      %p219 = por %p217, %p218
      %s221 = sadd.s32 %s220, 1
      %p224 = scmp.eq.s32.totalorder %s92, 1
      %p225 = scmp.ne.s32.totalorder %s220, %s222
      %p226 = scmp.eq.s32.totalorder %s92, 0
      %p227 = por %p225, %p226
      %p228 = scmp.ne.s32.totalorder %s220, %s222
      %p229 = scmp.eq.s32.totalorder %s97, 1
      %p230 = por %p228, %p229
      %p231 = scmp.ne.s32.totalorder %s222, %s223
      %p232 = scmp.eq.s32.totalorder %s97, 0
      %p233 = por %p231, %p232
      %p234 = scmp.ne.s32.totalorder %s222, %s223
      %p235 = scmp.eq.s32.totalorder %s98, 1
      %p236 = por %p234, %p235
      %p238 = scmp.ne.s32.totalorder %s223, %s237
      %p239 = scmp.eq.s32.totalorder %s98, 0
      %p240 = por %p238, %p239
      %s242 = sadd.s32 %s241, 1
      %p245 = scmp.eq.s32.totalorder %s92, 1
      %p246 = scmp.ne.s32.totalorder %s241, %s243
      %p247 = scmp.eq.s32.totalorder %s92, 0
      %p248 = por %p246, %p247
      %p249 = scmp.ne.s32.totalorder %s241, %s243
      %p250 = scmp.eq.s32.totalorder %s97, 1
      %p251 = por %p249, %p250
      %p252 = scmp.ne.s32.totalorder %s243, %s244
      %p253 = scmp.eq.s32.totalorder %s97, 0
      %p254 = por %p252, %p253
      %p255 = scmp.ne.s32.totalorder %s243, %s244
      %p256 = scmp.eq.s32.totalorder %s98, 1
      %p257 = por %p255, %p256
      %p259 = scmp.ne.s32.totalorder %s244, %s258
      %p260 = scmp.eq.s32.totalorder %s98, 0
      %p261 = por %p259, %p260
      %s263 = sadd.s32 %s262, 1
      %p266 = scmp.eq.s32.totalorder %s92, 1
      %p267 = scmp.ne.s32.totalorder %s262, %s264
      %p268 = scmp.eq.s32.totalorder %s92, 0
      %p269 = por %p267, %p268
      %p270 = scmp.ne.s32.totalorder %s262, %s264
      %p271 = scmp.eq.s32.totalorder %s97, 1
      %p272 = por %p270, %p271
      %p273 = scmp.ne.s32.totalorder %s264, %s265
      %p274 = scmp.eq.s32.totalorder %s97, 0
      %p275 = por %p273, %p274
      %p276 = scmp.ne.s32.totalorder %s264, %s265
      %p277 = scmp.eq.s32.totalorder %s98, 1
      %p278 = por %p276, %p277
      %p280 = scmp.ne.s32.totalorder %s265, %s279
      %p281 = scmp.eq.s32.totalorder %s98, 0
      %p282 = por %p280, %p281
      %s284 = sadd.s32 %s283, 1
      %p287 = scmp.eq.s32.totalorder %s92, 1
      %p288 = scmp.ne.s32.totalorder %s283, %s285
      %p289 = scmp.eq.s32.totalorder %s92, 0
      %p290 = por %p288, %p289
      %p291 = scmp.ne.s32.totalorder %s283, %s285
      %p292 = scmp.eq.s32.totalorder %s97, 1
      %p293 = por %p291, %p292
      %p294 = scmp.ne.s32.totalorder %s285, %s286
      %p295 = scmp.eq.s32.totalorder %s97, 0
      %p296 = por %p294, %p295
      %p297 = scmp.ne.s32.totalorder %s285, %s286
      %p298 = scmp.eq.s32.totalorder %s98, 1
      %p299 = por %p297, %p298
      %p301 = scmp.ne.s32.totalorder %s286, %s300
      %p302 = scmp.eq.s32.totalorder %s98, 0
      %p303 = por %p301, %p302
      %s305 = sadd.s32 %s304, 1
      %p308 = scmp.eq.s32.totalorder %s92, 1
      %p309 = scmp.ne.s32.totalorder %s304, %s306
      %p310 = scmp.eq.s32.totalorder %s92, 0
      %p311 = por %p309, %p310
      %p312 = scmp.ne.s32.totalorder %s304, %s306
      %p313 = scmp.eq.s32.totalorder %s97, 1
      %p314 = por %p312, %p313
      %p315 = scmp.ne.s32.totalorder %s306, %s307
      %p316 = scmp.eq.s32.totalorder %s97, 0
      %p317 = por %p315, %p316
      %p318 = scmp.ne.s32.totalorder %s306, %s307
      %p319 = scmp.eq.s32.totalorder %s98, 1
      %p320 = por %p318, %p319
      %p322 = scmp.ne.s32.totalorder %s307, %s321
      %p323 = scmp.eq.s32.totalorder %s98, 0
      %p324 = por %p322, %p323
      %s326 = sadd.s32 %s325, 1
      %p329 = scmp.eq.s32.totalorder %s92, 1
      %p330 = scmp.ne.s32.totalorder %s325, %s327
      %p331 = scmp.eq.s32.totalorder %s92, 0
      %p332 = por %p330, %p331
      %p333 = scmp.ne.s32.totalorder %s325, %s327
      %p334 = scmp.eq.s32.totalorder %s97, 1
      %p335 = por %p333, %p334
      %p336 = scmp.ne.s32.totalorder %s327, %s328
      %p337 = scmp.eq.s32.totalorder %s97, 0
      %p338 = por %p336, %p337
      %p339 = scmp.ne.s32.totalorder %s327, %s328
      %p340 = scmp.eq.s32.totalorder %s98, 1
      %p341 = por %p339, %p340
      %p343 = scmp.ne.s32.totalorder %s328, %s342
      %p344 = scmp.eq.s32.totalorder %s98, 0
      %p345 = por %p343, %p344
      %s347 = sadd.s32 %s346, 1
      %p350 = scmp.eq.s32.totalorder %s92, 1
      %p351 = scmp.ne.s32.totalorder %s346, %s348
      %p352 = scmp.eq.s32.totalorder %s92, 0
      %p353 = por %p351, %p352
      %p354 = scmp.ne.s32.totalorder %s346, %s348
      %p355 = scmp.eq.s32.totalorder %s97, 1
      %p356 = por %p354, %p355
      %p357 = scmp.ne.s32.totalorder %s348, %s349
      %p358 = scmp.eq.s32.totalorder %s97, 0
      %p359 = por %p357, %p358
      %p360 = scmp.ne.s32.totalorder %s348, %s349
      %p361 = scmp.eq.s32.totalorder %s98, 1
      %p362 = por %p360, %p361
      %p364 = scmp.ne.s32.totalorder %s349, %s363
      %p365 = scmp.eq.s32.totalorder %s98, 0
      %p366 = por %p364, %p365
      %s368 = sadd.s32 %s367, 1
      %p371 = scmp.eq.s32.totalorder %s92, 1
      %p372 = scmp.ne.s32.totalorder %s367, %s369
      %p373 = scmp.eq.s32.totalorder %s92, 0
      %p374 = por %p372, %p373
      %p375 = scmp.ne.s32.totalorder %s367, %s369
      %p376 = scmp.eq.s32.totalorder %s97, 1
      %p377 = por %p375, %p376
      %p378 = scmp.ne.s32.totalorder %s369, %s370
      %p379 = scmp.eq.s32.totalorder %s97, 0
      %p380 = por %p378, %p379
      %p381 = scmp.ne.s32.totalorder %s369, %s370
      %p382 = scmp.eq.s32.totalorder %s98, 1
      %p383 = por %p381, %p382
      %p385 = scmp.ne.s32.totalorder %s370, %s384
      %p386 = scmp.eq.s32.totalorder %s98, 0
      %p387 = por %p385, %p386
      %s389 = sadd.s32 %s388, 1
      %p392 = scmp.eq.s32.totalorder %s92, 1
      %p393 = scmp.ne.s32.totalorder %s388, %s390
      %p394 = scmp.eq.s32.totalorder %s92, 0
      %p395 = por %p393, %p394
      %p396 = scmp.ne.s32.totalorder %s388, %s390
      %p397 = scmp.eq.s32.totalorder %s97, 1
      %p398 = por %p396, %p397
      %p399 = scmp.ne.s32.totalorder %s390, %s391
      %p400 = scmp.eq.s32.totalorder %s97, 0
      %p401 = por %p399, %p400
      %p402 = scmp.ne.s32.totalorder %s390, %s391
      %p403 = scmp.eq.s32.totalorder %s98, 1
      %p404 = por %p402, %p403
      %p406 = scmp.ne.s32.totalorder %s391, %s405
      %p407 = scmp.eq.s32.totalorder %s98, 0
      %p408 = por %p406, %p407
      %s410 = sadd.s32 %s409, 1
      %p413 = scmp.eq.s32.totalorder %s92, 1
      %p414 = scmp.ne.s32.totalorder %s409, %s411
      %p415 = scmp.eq.s32.totalorder %s92, 0
      %p416 = por %p414, %p415
      %p417 = scmp.ne.s32.totalorder %s409, %s411
      %p418 = scmp.eq.s32.totalorder %s97, 1
      %p419 = por %p417, %p418
      %p420 = scmp.ne.s32.totalorder %s411, %s412
      %p421 = scmp.eq.s32.totalorder %s97, 0
      %p422 = por %p420, %p421
      %p423 = scmp.ne.s32.totalorder %s411, %s412
      %p424 = scmp.eq.s32.totalorder %s98, 1
      %p425 = por %p423, %p424
      %p427 = scmp.ne.s32.totalorder %s412, %s426
      %p428 = scmp.eq.s32.totalorder %s98, 0
      %p429 = por %p427, %p428
      %s431 = sadd.s32 %s430, 1
      %p434 = scmp.eq.s32.totalorder %s92, 1
      %p435 = scmp.ne.s32.totalorder %s430, %s432
      %p436 = scmp.eq.s32.totalorder %s92, 0
      %p437 = por %p435, %p436
      %p438 = scmp.ne.s32.totalorder %s430, %s432
      %p439 = scmp.eq.s32.totalorder %s97, 1
      %p440 = por %p438, %p439
      %p441 = scmp.ne.s32.totalorder %s432, %s433
      %p442 = scmp.eq.s32.totalorder %s97, 0
      %p443 = por %p441, %p442
      %p444 = scmp.ne.s32.totalorder %s432, %s433
      %p445 = scmp.eq.s32.totalorder %s98, 1
      %p446 = por %p444, %p445
      %p448 = scmp.ne.s32.totalorder %s433, %s447
      %p449 = scmp.eq.s32.totalorder %s98, 0
      %p450 = por %p448, %p449
      %s452 = sadd.s32 %s451, 1
      %p455 = scmp.eq.s32.totalorder %s92, 1
      %p456 = scmp.ne.s32.totalorder %s451, %s453
      %p457 = scmp.eq.s32.totalorder %s92, 0
      %p458 = por %p456, %p457
      %p459 = scmp.ne.s32.totalorder %s451, %s453
      %p460 = scmp.eq.s32.totalorder %s97, 1
      %p461 = por %p459, %p460
      %p462 = scmp.ne.s32.totalorder %s453, %s454
      %p463 = scmp.eq.s32.totalorder %s97, 0
      %p464 = por %p462, %p463
      %p465 = scmp.ne.s32.totalorder %s453, %s454
      %p466 = scmp.eq.s32.totalorder %s98, 1
      %p467 = por %p465, %p466
      %p469 = scmp.ne.s32.totalorder %s454, %s468
      %p470 = scmp.eq.s32.totalorder %s98, 0
      %p471 = por %p469, %p470
      %s473 = sadd.s32 %s472, 1
      %p476 = scmp.eq.s32.totalorder %s92, 1
      %p477 = scmp.ne.s32.totalorder %s472, %s474
      %p478 = scmp.eq.s32.totalorder %s92, 0
      %p479 = por %p477, %p478
      %p480 = scmp.ne.s32.totalorder %s472, %s474
      %p481 = scmp.eq.s32.totalorder %s97, 1
      %p482 = por %p480, %p481
      %p483 = scmp.ne.s32.totalorder %s474, %s475
      %p484 = scmp.eq.s32.totalorder %s97, 0
      %p485 = por %p483, %p484
      %p486 = scmp.ne.s32.totalorder %s474, %s475
      %p487 = scmp.eq.s32.totalorder %s98, 1
      %p488 = por %p486, %p487
      %p490 = scmp.ne.s32.totalorder %s475, %s489
      %p491 = scmp.eq.s32.totalorder %s98, 0
      %p492 = por %p490, %p491
      %s494 = sadd.s32 %s493, 1
      %p497 = scmp.eq.s32.totalorder %s92, 1
      %p498 = scmp.ne.s32.totalorder %s493, %s495
      %p499 = scmp.eq.s32.totalorder %s92, 0
      %p500 = por %p498, %p499
      %p501 = scmp.ne.s32.totalorder %s493, %s495
      %p502 = scmp.eq.s32.totalorder %s97, 1
      %p503 = por %p501, %p502
      %p504 = scmp.ne.s32.totalorder %s495, %s496
      %p505 = scmp.eq.s32.totalorder %s97, 0
      %p506 = por %p504, %p505
      %p507 = scmp.ne.s32.totalorder %s495, %s496
      %p508 = scmp.eq.s32.totalorder %s98, 1
      %p509 = por %p507, %p508
      %p511 = scmp.ne.s32.totalorder %s496, %s510
      %p512 = scmp.eq.s32.totalorder %s98, 0
      %p513 = por %p511, %p512
      %s515 = sadd.s32 %s514, 1
      %p518 = scmp.eq.s32.totalorder %s92, 1
      %p519 = scmp.ne.s32.totalorder %s514, %s516
      %p520 = scmp.eq.s32.totalorder %s92, 0
      %p521 = por %p519, %p520
      %p522 = scmp.ne.s32.totalorder %s514, %s516
      %p523 = scmp.eq.s32.totalorder %s97, 1
      %p524 = por %p522, %p523
      %p525 = scmp.ne.s32.totalorder %s516, %s517
      %p526 = scmp.eq.s32.totalorder %s97, 0
      %p527 = por %p525, %p526
      %p528 = scmp.ne.s32.totalorder %s516, %s517
      %p529 = scmp.eq.s32.totalorder %s98, 1
      %p530 = por %p528, %p529
      %p532 = scmp.ne.s32.totalorder %s517, %s531
      %p533 = scmp.eq.s32.totalorder %s98, 0
      %p534 = por %p532, %p533
      %s536 = sadd.s32 %s535, 1
      %p539 = scmp.eq.s32.totalorder %s92, 1
      %p540 = scmp.ne.s32.totalorder %s535, %s537
      %p541 = scmp.eq.s32.totalorder %s92, 0
      %p542 = por %p540, %p541
      %p543 = scmp.ne.s32.totalorder %s535, %s537
      %p544 = scmp.eq.s32.totalorder %s97, 1
      %p545 = por %p543, %p544
      %p546 = scmp.ne.s32.totalorder %s537, %s538
      %p547 = scmp.eq.s32.totalorder %s97, 0
      %p548 = por %p546, %p547
      %p549 = scmp.ne.s32.totalorder %s537, %s538
      %p550 = scmp.eq.s32.totalorder %s98, 1
      %p551 = por %p549, %p550
      %p553 = scmp.ne.s32.totalorder %s538, %s552
      %p554 = scmp.eq.s32.totalorder %s98, 0
      %p555 = por %p553, %p554
      %s557 = sadd.s32 %s556, 1
      %p560 = scmp.eq.s32.totalorder %s92, 1
      %p561 = scmp.ne.s32.totalorder %s556, %s558
      %p562 = scmp.eq.s32.totalorder %s92, 0
      %p563 = por %p561, %p562
      %p564 = scmp.ne.s32.totalorder %s556, %s558
      %p565 = scmp.eq.s32.totalorder %s97, 1
      %p566 = por %p564, %p565
      %p567 = scmp.ne.s32.totalorder %s558, %s559
      %p568 = scmp.eq.s32.totalorder %s97, 0
      %p569 = por %p567, %p568
      %p570 = scmp.ne.s32.totalorder %s558, %s559
      %p571 = scmp.eq.s32.totalorder %s98, 1
      %p572 = por %p570, %p571
      %p574 = scmp.ne.s32.totalorder %s559, %s573
      %p575 = scmp.eq.s32.totalorder %s98, 0
      %p576 = por %p574, %p575
      %s578 = sadd.s32 %s577, 1
      %p581 = scmp.eq.s32.totalorder %s92, 1
      %p582 = scmp.ne.s32.totalorder %s577, %s579
      %p583 = scmp.eq.s32.totalorder %s92, 0
      %p584 = por %p582, %p583
      %p585 = scmp.ne.s32.totalorder %s577, %s579
      %p586 = scmp.eq.s32.totalorder %s97, 1
      %p587 = por %p585, %p586
      %p588 = scmp.ne.s32.totalorder %s579, %s580
      %p589 = scmp.eq.s32.totalorder %s97, 0
      %p590 = por %p588, %p589
      %p591 = scmp.ne.s32.totalorder %s579, %s580
      %p592 = scmp.eq.s32.totalorder %s98, 1
      %p593 = por %p591, %p592
      %p595 = scmp.ne.s32.totalorder %s580, %s594
      %p596 = scmp.eq.s32.totalorder %s98, 0
      %p597 = por %p595, %p596
      %s599 = sadd.s32 %s598, 1
      %p602 = scmp.eq.s32.totalorder %s92, 1
      %p603 = scmp.ne.s32.totalorder %s598, %s600
      %p604 = scmp.eq.s32.totalorder %s92, 0
      %p605 = por %p603, %p604
      %p606 = scmp.ne.s32.totalorder %s598, %s600
      %p607 = scmp.eq.s32.totalorder %s97, 1
      %p608 = por %p606, %p607
      %p609 = scmp.ne.s32.totalorder %s600, %s601
      %p610 = scmp.eq.s32.totalorder %s97, 0
      %p611 = por %p609, %p610
      %p612 = scmp.ne.s32.totalorder %s600, %s601
      %p613 = scmp.eq.s32.totalorder %s98, 1
      %p614 = por %p612, %p613
      %p616 = scmp.ne.s32.totalorder %s601, %s615
      %p617 = scmp.eq.s32.totalorder %s98, 0
      %p618 = por %p616, %p617
      %s620 = sadd.s32 %s619, 1
      %p623 = scmp.eq.s32.totalorder %s92, 1
      %p624 = scmp.ne.s32.totalorder %s619, %s621
      %p625 = scmp.eq.s32.totalorder %s92, 0
      %p626 = por %p624, %p625
      %p627 = scmp.ne.s32.totalorder %s619, %s621
      %p628 = scmp.eq.s32.totalorder %s97, 1
      %p629 = por %p627, %p628
      %p630 = scmp.ne.s32.totalorder %s621, %s622
      %p631 = scmp.eq.s32.totalorder %s97, 0
      %p632 = por %p630, %p631
      %p633 = scmp.ne.s32.totalorder %s621, %s622
      %p634 = scmp.eq.s32.totalorder %s98, 1
      %p635 = por %p633, %p634
      %p637 = scmp.ne.s32.totalorder %s622, %s636
      %p638 = scmp.eq.s32.totalorder %s98, 0
      %p639 = por %p637, %p638
      %s641 = sadd.s32 %s640, 1
      %p644 = scmp.eq.s32.totalorder %s92, 1
      %p645 = scmp.ne.s32.totalorder %s640, %s642
      %p646 = scmp.eq.s32.totalorder %s92, 0
      %p647 = por %p645, %p646
      %p648 = scmp.ne.s32.totalorder %s640, %s642
      %p649 = scmp.eq.s32.totalorder %s97, 1
      %p650 = por %p648, %p649
      %p651 = scmp.ne.s32.totalorder %s642, %s643
      %p652 = scmp.eq.s32.totalorder %s97, 0
      %p653 = por %p651, %p652
      %p654 = scmp.ne.s32.totalorder %s642, %s643
      %p655 = scmp.eq.s32.totalorder %s98, 1
      %p656 = por %p654, %p655
      %p658 = scmp.ne.s32.totalorder %s643, %s657
      %p659 = scmp.eq.s32.totalorder %s98, 0
      %p660 = por %p658, %p659
      %s662 = sadd.s32 %s661, 1
      %p665 = scmp.eq.s32.totalorder %s92, 1
      %p666 = scmp.ne.s32.totalorder %s661, %s663
      %p667 = scmp.eq.s32.totalorder %s92, 0
      %p668 = por %p666, %p667
      %p669 = scmp.ne.s32.totalorder %s661, %s663
      %p670 = scmp.eq.s32.totalorder %s97, 1
      %p671 = por %p669, %p670
      %p672 = scmp.ne.s32.totalorder %s663, %s664
      %p673 = scmp.eq.s32.totalorder %s97, 0
      %p674 = por %p672, %p673
      %p675 = scmp.ne.s32.totalorder %s663, %s664
      %p676 = scmp.eq.s32.totalorder %s98, 1
      %p677 = por %p675, %p676
      %p679 = scmp.ne.s32.totalorder %s664, %s678
      %p680 = scmp.eq.s32.totalorder %s98, 0
      %p681 = por %p679, %p680
      %s683 = sadd.s32 %s682, 1
      %p686 = scmp.eq.s32.totalorder %s92, 1
      %p687 = scmp.ne.s32.totalorder %s682, %s684
      %p688 = scmp.eq.s32.totalorder %s92, 0
      %p689 = por %p687, %p688
      %p690 = scmp.ne.s32.totalorder %s682, %s684
      %p691 = scmp.eq.s32.totalorder %s97, 1
      %p692 = por %p690, %p691
      %p693 = scmp.ne.s32.totalorder %s684, %s685
      %p694 = scmp.eq.s32.totalorder %s97, 0
      %p695 = por %p693, %p694
      %p696 = scmp.ne.s32.totalorder %s684, %s685
      %p697 = scmp.eq.s32.totalorder %s98, 1
      %p698 = por %p696, %p697
      %p700 = scmp.ne.s32.totalorder %s685, %s699
      %p701 = scmp.eq.s32.totalorder %s98, 0
      %p702 = por %p700, %p701
      %s704 = sadd.s32 %s703, 1
      %p707 = scmp.eq.s32.totalorder %s92, 1
      %p708 = scmp.ne.s32.totalorder %s703, %s705
      %p709 = scmp.eq.s32.totalorder %s92, 0
      %p710 = por %p708, %p709
      %p711 = scmp.ne.s32.totalorder %s703, %s705
      %p712 = scmp.eq.s32.totalorder %s97, 1
      %p713 = por %p711, %p712
      %p714 = scmp.ne.s32.totalorder %s705, %s706
      %p715 = scmp.eq.s32.totalorder %s97, 0
      %p716 = por %p714, %p715
      %p717 = scmp.ne.s32.totalorder %s705, %s706
      %p718 = scmp.eq.s32.totalorder %s98, 1
      %p719 = por %p717, %p718
      %p721 = scmp.ne.s32.totalorder %s706, %s720
      %p722 = scmp.eq.s32.totalorder %s98, 0
      %p723 = por %p721, %p722
      %s725 = sadd.s32 %s724, 1
      %p728 = scmp.eq.s32.totalorder %s92, 1
      %p729 = scmp.ne.s32.totalorder %s724, %s726
      %p730 = scmp.eq.s32.totalorder %s92, 0
      %p731 = por %p729, %p730
      %p732 = scmp.ne.s32.totalorder %s724, %s726
      %p733 = scmp.eq.s32.totalorder %s97, 1
      %p734 = por %p732, %p733
      %p735 = scmp.ne.s32.totalorder %s726, %s727
      %p736 = scmp.eq.s32.totalorder %s97, 0
      %p737 = por %p735, %p736
      %p738 = scmp.ne.s32.totalorder %s726, %s727
      %p739 = scmp.eq.s32.totalorder %s98, 1
      %p740 = por %p738, %p739
      %p742 = scmp.ne.s32.totalorder %s727, %s741
      %p743 = scmp.eq.s32.totalorder %s98, 0
      %p744 = por %p742, %p743
      %s745 = ssub.s32 %s92, %s99
      %p746 = scmp.eq.s32.totalorder %s745, 0
      %s748 = sadd.s32 %s747, 1
      %s749 = scalar_select %p746, %s747, %s748
      %p752 = pneg %p746
      %p753 = scmp.eq.s32.totalorder %s92, 1
      %p754 = por %p752, %p753
      %p755 = scmp.ne.s32.totalorder %s747, %s750
      %p756 = scmp.eq.s32.totalorder %s92, 0
      %p757 = por %p755, %p756
      %p758 = scmp.ne.s32.totalorder %s747, %s750
      %p759 = scmp.eq.s32.totalorder %s97, 1
      %p760 = por %p758, %p759
      %p761 = scmp.ne.s32.totalorder %s750, %s751
      %p762 = scmp.eq.s32.totalorder %s97, 0
      %p763 = por %p761, %p762
      %p764 = scmp.ne.s32.totalorder %s750, %s751
      %p765 = scmp.eq.s32.totalorder %s98, 1
      %p766 = por %p764, %p765
      %p768 = scmp.ne.s32.totalorder %s751, %s767
      %p769 = scmp.eq.s32.totalorder %s98, 0
      %p770 = por %p768, %p769
      %p771 = scmp.le.s32.totalorder 1, %s92
      %p772 = scmp.lt.s32.totalorder %s92, 3
      %p773 = pnand %p771, %p772
      %p774 = pneg %p773
      // Predicated region
      $region9: #{decoder_forward.2} parent=5 // pred_check
        _
      $region10: #{decoder_forward.2} parent=5 // pred_check_branch
        %776 = sbr.rel (%p773) target = $region12
      $region11: #{decoder_forward.2} parent=5 // pred_region
        %s777 = ssub.s32 %s92, 1
        // Predicated region
        $region13: #{decoder_forward.2} parent=11 // pred_check
          %p778 = pneg %p165
        $region14: #{decoder_forward.2} parent=11 // pred_check_branch
          %780 = sbr.rel (%p778) target = $region16
        $region15: #{decoder_forward.2} parent=11 // pred_region
          %s782 = ssub.s32 128, 128
          %783 = vsyncadd [#allocation6], %s782
          %s785 = sshll.u32 [#allocation7], 4
          %s786 = int_to_ptr.vmem [resolvable:$true] %s785
          %788 = dma.hbm_to_vmem [thread:$0]  %s5, 128, %s786, [#allocation6]
        $region16: #{decoder_forward.2} parent=11 // pred_fallthru
          _
        // Predicated region
        $region17: #{decoder_forward.2} parent=11 // pred_check
          %p789 = pneg %p212
        $region18: #{decoder_forward.2} parent=11 // pred_check_branch
          %791 = sbr.rel (%p789) target = $region20
        $region19: #{decoder_forward.2} parent=11 // pred_region
          %s793 = ssub.s32 16, 16
          %794 = vsyncadd [#allocation9], %s793
          %s796 = sshll.u32 [#allocation10], 4
          %s797 = int_to_ptr.vmem [resolvable:$true] %s796
          %799 = dma.hbm_to_vmem [thread:$0]  %s9, 16, %s797, [#allocation9]
        $region20: #{decoder_forward.2} parent=11 // pred_fallthru
          _
        // Predicated region
        $region21: #{decoder_forward.2} parent=11 // pred_check
          %p800 = pneg %p233
        $region22: #{decoder_forward.2} parent=11 // pred_check_branch
          %802 = sbr.rel (%p800) target = $region24
        $region23: #{decoder_forward.2} parent=11 // pred_region
          %s804 = ssub.s32 16, 16
          %805 = vsyncadd [#allocation12], %s804
          %s807 = sshll.u32 [#allocation11], 4
          %s808 = int_to_ptr.vmem [resolvable:$true] %s807
          %810 = dma.hbm_to_vmem [thread:$0]  %s11, 16, %s808, [#allocation12]
        $region24: #{decoder_forward.2} parent=11 // pred_fallthru
          _
        // Predicated region
        $region25: #{decoder_forward.2} parent=11 // pred_check
          %p811 = pneg %p254
        $region26: #{decoder_forward.2} parent=11 // pred_check_branch
          %813 = sbr.rel (%p811) target = $region28
        $region27: #{decoder_forward.2} parent=11 // pred_region
          %s815 = ssub.s32 256, 256
          %816 = vsyncadd [#allocation12], %s815
          %s817 = sshll.u32 [#allocation13], 4
          %s818 = int_to_ptr.vmem [resolvable:$true] %s817
          %823 = dma.hbm_to_vmem [thread:$0]  %s13, 256, %s818, [#allocation12], 64, 64, 4
        $region28: #{decoder_forward.2} parent=11 // pred_fallthru
          _
        // Predicated region
        $region29: #{decoder_forward.2} parent=11 // pred_check
          %p824 = pneg %p275
        $region30: #{decoder_forward.2} parent=11 // pred_check_branch
          %826 = sbr.rel (%p824) target = $region32
        $region31: #{decoder_forward.2} parent=11 // pred_region
          %s828 = ssub.s32 16, 16
          %829 = vsyncadd [#allocation15], %s828
          %s831 = sshll.u32 [#allocation14], 4
          %s832 = int_to_ptr.vmem [resolvable:$true] %s831
          %834 = dma.hbm_to_vmem [thread:$0]  %s15, 16, %s832, [#allocation15]
        $region32: #{decoder_forward.2} parent=11 // pred_fallthru
          _
        // Predicated region
        $region33: #{decoder_forward.2} parent=11 // pred_check
          %p835 = pneg %p296
        $region34: #{decoder_forward.2} parent=11 // pred_check_branch
          %837 = sbr.rel (%p835) target = $region36
        $region35: #{decoder_forward.2} parent=11 // pred_region
          %s839 = ssub.s32 256, 256
          %840 = vsyncadd [#allocation15], %s839
          %s841 = sshll.u32 [#allocation16], 4
          %s842 = int_to_ptr.vmem [resolvable:$true] %s841
          %847 = dma.hbm_to_vmem [thread:$0]  %s17, 256, %s842, [#allocation15], 64, 64, 4
        $region36: #{decoder_forward.2} parent=11 // pred_fallthru
          _
        // Predicated region
        $region37: #{decoder_forward.2} parent=11 // pred_check
          %p848 = pneg %p317
        $region38: #{decoder_forward.2} parent=11 // pred_check_branch
          %850 = sbr.rel (%p848) target = $region40
        $region39: #{decoder_forward.2} parent=11 // pred_region
          %s852 = ssub.s32 16, 16
          %853 = vsyncadd [#allocation18], %s852
          %s855 = sshll.u32 [#allocation17], 4
          %s856 = int_to_ptr.vmem [resolvable:$true] %s855
          %858 = dma.hbm_to_vmem [thread:$0]  %s19, 16, %s856, [#allocation18]
        $region40: #{decoder_forward.2} parent=11 // pred_fallthru
          _
        // Predicated region
        $region41: #{decoder_forward.2} parent=11 // pred_check
          %p859 = pneg %p338
        $region42: #{decoder_forward.2} parent=11 // pred_check_branch
          %861 = sbr.rel (%p859) target = $region44
        $region43: #{decoder_forward.2} parent=11 // pred_region
          %s863 = ssub.s32 256, 256
          %864 = vsyncadd [#allocation18], %s863
          %s865 = sshll.u32 [#allocation19], 4
          %s866 = int_to_ptr.vmem [resolvable:$true] %s865
          %871 = dma.hbm_to_vmem [thread:$0]  %s21, 256, %s866, [#allocation18], 64, 64, 4
        $region44: #{decoder_forward.2} parent=11 // pred_fallthru
          _
        // Predicated region
        $region45: #{decoder_forward.2} parent=11 // pred_check
          %p872 = pneg %p359
        $region46: #{decoder_forward.2} parent=11 // pred_check_branch
          %874 = sbr.rel (%p872) target = $region48
        $region47: #{decoder_forward.2} parent=11 // pred_region
          %s876 = ssub.s32 16, 16
          %877 = vsyncadd [#allocation21], %s876
          %s879 = sshll.u32 [#allocation20], 4
          %s880 = int_to_ptr.vmem [resolvable:$true] %s879
          %882 = dma.hbm_to_vmem [thread:$0]  %s23, 16, %s880, [#allocation21]
        $region48: #{decoder_forward.2} parent=11 // pred_fallthru
          _
        // Predicated region
        $region49: #{decoder_forward.2} parent=11 // pred_check
          %p883 = pneg %p380
        $region50: #{decoder_forward.2} parent=11 // pred_check_branch
          %885 = sbr.rel (%p883) target = $region52
        $region51: #{decoder_forward.2} parent=11 // pred_region
          %s887 = ssub.s32 256, 256
          %888 = vsyncadd [#allocation21], %s887
          %s889 = sshll.u32 [#allocation22], 4
          %s890 = int_to_ptr.vmem [resolvable:$true] %s889
          %895 = dma.hbm_to_vmem [thread:$0]  %s25, 256, %s890, [#allocation21], 64, 64, 4
        $region52: #{decoder_forward.2} parent=11 // pred_fallthru
          _
        // Predicated region
        $region53: #{decoder_forward.2} parent=11 // pred_check
          %p896 = pneg %p401
        $region54: #{decoder_forward.2} parent=11 // pred_check_branch
          %898 = sbr.rel (%p896) target = $region56
        $region55: #{decoder_forward.2} parent=11 // pred_region
          %s900 = ssub.s32 16, 16
          %901 = vsyncadd [#allocation24], %s900
          %s903 = sshll.u32 [#allocation23], 4
          %s904 = int_to_ptr.vmem [resolvable:$true] %s903
          %906 = dma.hbm_to_vmem [thread:$0]  %s27, 16, %s904, [#allocation24]
        $region56: #{decoder_forward.2} parent=11 // pred_fallthru
          _
        // Predicated region
        $region57: #{decoder_forward.2} parent=11 // pred_check
          %p907 = pneg %p422
        $region58: #{decoder_forward.2} parent=11 // pred_check_branch
          %909 = sbr.rel (%p907) target = $region60
        $region59: #{decoder_forward.2} parent=11 // pred_region
          %s911 = ssub.s32 16, 16
          %912 = vsyncadd [#allocation24], %s911
          %s914 = sshll.u32 [#allocation25], 4
          %s915 = int_to_ptr.vmem [resolvable:$true] %s914
          %917 = dma.hbm_to_vmem [thread:$0]  %s29, 16, %s915, [#allocation24]
        $region60: #{decoder_forward.2} parent=11 // pred_fallthru
          _
        // Predicated region
        $region61: #{decoder_forward.2} parent=11 // pred_check
          %p918 = pneg %p443
        $region62: #{decoder_forward.2} parent=11 // pred_check_branch
          %920 = sbr.rel (%p918) target = $region64
        $region63: #{decoder_forward.2} parent=11 // pred_region
          %s922 = ssub.s32 16, 16
          %923 = vsyncadd [#allocation27], %s922
          %s925 = sshll.u32 [#allocation26], 4
          %s926 = int_to_ptr.vmem [resolvable:$true] %s925
          %928 = dma.hbm_to_vmem [thread:$0]  %s31, 16, %s926, [#allocation27]
        $region64: #{decoder_forward.2} parent=11 // pred_fallthru
          _
        // Predicated region
        $region65: #{decoder_forward.2} parent=11 // pred_check
          %p929 = pneg %p464
        $region66: #{decoder_forward.2} parent=11 // pred_check_branch
          %931 = sbr.rel (%p929) target = $region68
        $region67: #{decoder_forward.2} parent=11 // pred_region
          %s933 = ssub.s32 256, 256
          %934 = vsyncadd [#allocation27], %s933
          %s935 = sshll.u32 [#allocation28], 4
          %s936 = int_to_ptr.vmem [resolvable:$true] %s935
          %941 = dma.hbm_to_vmem [thread:$0]  %s33, 256, %s936, [#allocation27], 64, 64, 4
        $region68: #{decoder_forward.2} parent=11 // pred_fallthru
          _
        // Predicated region
        $region69: #{decoder_forward.2} parent=11 // pred_check
          %p942 = pneg %p485
        $region70: #{decoder_forward.2} parent=11 // pred_check_branch
          %944 = sbr.rel (%p942) target = $region72
        $region71: #{decoder_forward.2} parent=11 // pred_region
          %s946 = ssub.s32 16, 16
          %947 = vsyncadd [#allocation30], %s946
          %s949 = sshll.u32 [#allocation29], 4
          %s950 = int_to_ptr.vmem [resolvable:$true] %s949
          %952 = dma.hbm_to_vmem [thread:$0]  %s35, 16, %s950, [#allocation30]
        $region72: #{decoder_forward.2} parent=11 // pred_fallthru
          _
        // Predicated region
        $region73: #{decoder_forward.2} parent=11 // pred_check
          %p953 = pneg %p506
        $region74: #{decoder_forward.2} parent=11 // pred_check_branch
          %955 = sbr.rel (%p953) target = $region76
        $region75: #{decoder_forward.2} parent=11 // pred_region
          %s957 = ssub.s32 256, 256
          %958 = vsyncadd [#allocation30], %s957
          %s959 = sshll.u32 [#allocation31], 4
          %s960 = int_to_ptr.vmem [resolvable:$true] %s959
          %965 = dma.hbm_to_vmem [thread:$0]  %s37, 256, %s960, [#allocation30], 64, 64, 4
        $region76: #{decoder_forward.2} parent=11 // pred_fallthru
          _
        // Predicated region
        $region77: #{decoder_forward.2} parent=11 // pred_check
          %p966 = pneg %p527
        $region78: #{decoder_forward.2} parent=11 // pred_check_branch
          %968 = sbr.rel (%p966) target = $region80
        $region79: #{decoder_forward.2} parent=11 // pred_region
          %s970 = ssub.s32 16, 16
          %971 = vsyncadd [#allocation33], %s970
          %s973 = sshll.u32 [#allocation32], 4
          %s974 = int_to_ptr.vmem [resolvable:$true] %s973
          %976 = dma.hbm_to_vmem [thread:$0]  %s39, 16, %s974, [#allocation33]
        $region80: #{decoder_forward.2} parent=11 // pred_fallthru
          _
        // Predicated region
        $region81: #{decoder_forward.2} parent=11 // pred_check
          %p977 = pneg %p548
        $region82: #{decoder_forward.2} parent=11 // pred_check_branch
          %979 = sbr.rel (%p977) target = $region84
        $region83: #{decoder_forward.2} parent=11 // pred_region
          %s981 = ssub.s32 256, 256
          %982 = vsyncadd [#allocation33], %s981
          %s983 = sshll.u32 [#allocation34], 4
          %s984 = int_to_ptr.vmem [resolvable:$true] %s983
          %989 = dma.hbm_to_vmem [thread:$0]  %s41, 256, %s984, [#allocation33], 64, 64, 4
        $region84: #{decoder_forward.2} parent=11 // pred_fallthru
          _
        // Predicated region
        $region85: #{decoder_forward.2} parent=11 // pred_check
          %p990 = pneg %p569
        $region86: #{decoder_forward.2} parent=11 // pred_check_branch
          %992 = sbr.rel (%p990) target = $region88
        $region87: #{decoder_forward.2} parent=11 // pred_region
          %s994 = ssub.s32 16, 16
          %995 = vsyncadd [#allocation36], %s994
          %s997 = sshll.u32 [#allocation35], 4
          %s998 = int_to_ptr.vmem [resolvable:$true] %s997
          %1000 = dma.hbm_to_vmem [thread:$0]  %s43, 16, %s998, [#allocation36]
        $region88: #{decoder_forward.2} parent=11 // pred_fallthru
          _
        // Predicated region
        $region89: #{decoder_forward.2} parent=11 // pred_check
          %p1001 = pneg %p590
        $region90: #{decoder_forward.2} parent=11 // pred_check_branch
          %1003 = sbr.rel (%p1001) target = $region92
        $region91: #{decoder_forward.2} parent=11 // pred_region
          %s1005 = ssub.s32 256, 256
          %1006 = vsyncadd [#allocation36], %s1005
          %s1007 = sshll.u32 [#allocation37], 4
          %s1008 = int_to_ptr.vmem [resolvable:$true] %s1007
          %1013 = dma.hbm_to_vmem [thread:$0]  %s45, 256, %s1008, [#allocation36], 64, 64, 4
        $region92: #{decoder_forward.2} parent=11 // pred_fallthru
          _
        // Predicated region
        $region93: #{decoder_forward.2} parent=11 // pred_check
          %p1014 = pneg %p611
        $region94: #{decoder_forward.2} parent=11 // pred_check_branch
          %1016 = sbr.rel (%p1014) target = $region96
        $region95: #{decoder_forward.2} parent=11 // pred_region
          %s1018 = ssub.s32 16, 16
          %1019 = vsyncadd [#allocation39], %s1018
          %s1021 = sshll.u32 [#allocation38], 4
          %s1022 = int_to_ptr.vmem [resolvable:$true] %s1021
          %1024 = dma.hbm_to_vmem [thread:$0]  %s47, 16, %s1022, [#allocation39]
        $region96: #{decoder_forward.2} parent=11 // pred_fallthru
          _
        // Predicated region
        $region97: #{decoder_forward.2} parent=11 // pred_check
          %p1025 = pneg %p632
        $region98: #{decoder_forward.2} parent=11 // pred_check_branch
          %1027 = sbr.rel (%p1025) target = $region100
        $region99: #{decoder_forward.2} parent=11 // pred_region
          %s1029 = ssub.s32 16, 16
          %1030 = vsyncadd [#allocation39], %s1029
          %s1032 = sshll.u32 [#allocation40], 4
          %s1033 = int_to_ptr.vmem [resolvable:$true] %s1032
          %1035 = dma.hbm_to_vmem [thread:$0]  %s49, 16, %s1033, [#allocation39]
        $region100: #{decoder_forward.2} parent=11 // pred_fallthru
          _
        // Predicated region
        $region101: #{decoder_forward.2} parent=11 // pred_check
          %p1036 = pneg %p653
        $region102: #{decoder_forward.2} parent=11 // pred_check_branch
          %1038 = sbr.rel (%p1036) target = $region104
        $region103: #{decoder_forward.2} parent=11 // pred_region
          %s1040 = ssub.s32 16, 16
          %1041 = vsyncadd [#allocation42], %s1040
          %s1043 = sshll.u32 [#allocation41], 4
          %s1044 = int_to_ptr.vmem [resolvable:$true] %s1043
          %1046 = dma.hbm_to_vmem [thread:$0]  %s51, 16, %s1044, [#allocation42]
        $region104: #{decoder_forward.2} parent=11 // pred_fallthru
          _
        // Predicated region
        $region105: #{decoder_forward.2} parent=11 // pred_check
          %p1047 = pneg %p674
        $region106: #{decoder_forward.2} parent=11 // pred_check_branch
          %1049 = sbr.rel (%p1047) target = $region108
        $region107: #{decoder_forward.2} parent=11 // pred_region
          %s1051 = ssub.s32 256, 256
          %1052 = vsyncadd [#allocation42], %s1051
          %s1053 = sshll.u32 [#allocation43], 4
          %s1054 = int_to_ptr.vmem [resolvable:$true] %s1053
          %1059 = dma.hbm_to_vmem [thread:$0]  %s53, 256, %s1054, [#allocation42], 64, 64, 4
        $region108: #{decoder_forward.2} parent=11 // pred_fallthru
          _
        // Predicated region
        $region109: #{decoder_forward.2} parent=11 // pred_check
          %p1060 = pneg %p695
        $region110: #{decoder_forward.2} parent=11 // pred_check_branch
          %1062 = sbr.rel (%p1060) target = $region112
        $region111: #{decoder_forward.2} parent=11 // pred_region
          %s1064 = ssub.s32 16, 16
          %1065 = vsyncadd [#allocation45], %s1064
          %s1067 = sshll.u32 [#allocation44], 4
          %s1068 = int_to_ptr.vmem [resolvable:$true] %s1067
          %1070 = dma.hbm_to_vmem [thread:$0]  %s55, 16, %s1068, [#allocation45]
        $region112: #{decoder_forward.2} parent=11 // pred_fallthru
          _
        // Predicated region
        $region113: #{decoder_forward.2} parent=11 // pred_check
          %p1071 = pneg %p716
        $region114: #{decoder_forward.2} parent=11 // pred_check_branch
          %1073 = sbr.rel (%p1071) target = $region116
        $region115: #{decoder_forward.2} parent=11 // pred_region
          %s1075 = ssub.s32 512, 512
          %1076 = vsyncadd [#allocation45], %s1075
          %s1077 = sshll.u32 [#allocation46], 4
          %s1078 = int_to_ptr.vmem [resolvable:$true] %s1077
          %1083 = dma.hbm_to_vmem [thread:$0]  %s57, 512, %s1078, [#allocation45], 64, 64, 4
        $region116: #{decoder_forward.2} parent=11 // pred_fallthru
          _
        // Predicated region
        $region117: #{decoder_forward.2} parent=11 // pred_check
          %p1084 = pneg %p737
        $region118: #{decoder_forward.2} parent=11 // pred_check_branch
          %1086 = sbr.rel (%p1084) target = $region120
        $region119: #{decoder_forward.2} parent=11 // pred_region
          %s1088 = ssub.s32 16, 16
          %1089 = vsyncadd [#allocation48], %s1088
          %s1091 = sshll.u32 [#allocation47], 4
          %s1092 = int_to_ptr.vmem [resolvable:$true] %s1091
          %1094 = dma.hbm_to_vmem [thread:$0]  %s59, 16, %s1092, [#allocation48]
        $region120: #{decoder_forward.2} parent=11 // pred_fallthru
          _
      $region12: #{decoder_forward.2} parent=5 // pred_fallthru
        _
      %p1095 = scmp.lt.s32.totalorder %s92, 2
      // Predicated region
      $region121: #{decoder_forward.2} parent=5 // pred_check
        %p1096 = pneg %p1095
      $region122: #{decoder_forward.2} parent=5 // pred_check_branch
        %1098 = sbr.rel (%p1096) target = $region124
      $region123: #{decoder_forward.2} parent=5 // pred_region
        // Predicated region
        $region125: #{decoder_forward.2} parent=123 // pred_check
          %p1099 = pneg %p112
        $region126: #{decoder_forward.2} parent=123 // pred_check_branch
          %1101 = sbr.rel (%p1099) target = $region128
        $region127: #{decoder_forward.2} parent=123 // pred_region
          %s1102 = sand.u32 %s102, 1
          %s1103 = scalar_lea.sflag [#allocation3], %s1102
          %s1104 = sand.u32 %s102, 1
          %s1105 = smul.addr %s1104, 8
          %s1106 = scalar_lea.vmem [#allocation2], %s1105
          %s1108 = ssub.s32 128, 128
          %1109 = vsyncadd %s1103, %s1108
          %s1110 = smul.addr %s92, 128
          %s1111 = scalar_lea.hbm %s1, %s1110
          %s1113 = sshll.u32 %s1106, 4
          %s1114 = int_to_ptr.vmem [resolvable:$true] %s1113
          %1116 = dma.hbm_to_vmem [thread:$0]  %s1111, 128, %s1114, %s1103
        $region128: #{decoder_forward.2} parent=123 // pred_fallthru
          _
        // Predicated region
        $region129: #{decoder_forward.2} parent=123 // pred_check
          %p1117 = pneg %p138
        $region130: #{decoder_forward.2} parent=123 // pred_check_branch
          %1119 = sbr.rel (%p1117) target = $region132
        $region131: #{decoder_forward.2} parent=123 // pred_region
          %s1120 = sand.u32 %s92, 1
          %s1121 = scalar_lea.sflag [#allocation6], %s1120
          %s1122 = sand.u32 %s128, 1
          %s1123 = smul.addr %s1122, 8
          %s1124 = scalar_lea.vmem [#allocation5], %s1123
          %s1126 = ssub.s32 128, 128
          %1127 = vsyncadd %s1121, %s1126
          %s1128 = smul.addr %s92, 128
          %s1129 = scalar_lea.hbm %s3, %s1128
          %s1131 = sshll.u32 %s1124, 4
          %s1132 = int_to_ptr.vmem [resolvable:$true] %s1131
          %1134 = dma.hbm_to_vmem [thread:$0]  %s1129, 128, %s1132, %s1121
        $region132: #{decoder_forward.2} parent=123 // pred_fallthru
          _
        // Predicated region
        $region133: #{decoder_forward.2} parent=123 // pred_check
          %p1135 = pneg %p185
        $region134: #{decoder_forward.2} parent=123 // pred_check_branch
          %1137 = sbr.rel (%p1135) target = $region136
        $region135: #{decoder_forward.2} parent=123 // pred_region
          %s1138 = sand.u32 %s92, 1
          %s1139 = scalar_lea.sflag [#allocation9], %s1138
          %s1140 = sand.u32 %s175, 1
          %s1141 = scalar_lea.vmem [#allocation8], %s1140
          %s1143 = ssub.s32 16, 16
          %1144 = vsyncadd %s1139, %s1143
          %s1145 = smul.addr %s92, 16
          %s1146 = scalar_lea.hbm %s7, %s1145
          %s1148 = sshll.u32 %s1141, 4
          %s1149 = int_to_ptr.vmem [resolvable:$true] %s1148
          %1151 = dma.hbm_to_vmem [thread:$0]  %s1146, 16, %s1149, %s1139
        $region136: #{decoder_forward.2} parent=123 // pred_fallthru
          _
      $region124: #{decoder_forward.2} parent=5 // pred_fallthru
        _
      %p1152 = scmp.le.s32.totalorder 1, %s92
      %p1153 = scmp.lt.s32.totalorder %s92, 3
      %p1154 = pnand %p1152, %p1153
      %p1155 = pneg %p1154
      // Predicated region
      $region137: #{decoder_forward.2} parent=5 // pred_check
        _
      $region138: #{decoder_forward.2} parent=5 // pred_check_branch
        %1157 = sbr.rel (%p1154) target = $region140
      $region139: #{decoder_forward.2} parent=5 // pred_region
        %s1158 = ssub.s32 %s92, 1
        %s1159 = sand.u32 %s105, 1
        %s1160 = scalar_lea.sflag [#allocation3], %s1159
        %s1161 = sand.u32 %s105, 1
        %s1162 = smul.addr %s1161, 8
        %s1163 = scalar_lea.vmem [#allocation2], %s1162
        // Predicated region
        $region141: #{decoder_forward.2} parent=139 // pred_check
          %p1164 = pneg %p118
        $region142: #{decoder_forward.2} parent=139 // pred_check_branch
          %1166 = sbr.rel (%p1164) target = $region144
        $region143: #{decoder_forward.2} parent=139 // pred_region
          %1167 = dma.done %s1160, 128
        $region144: #{decoder_forward.2} parent=139 // pred_fallthru
          _
        %s1168 = sand.u32 %s97, 1
        %s1169 = scalar_lea.sflag [#allocation6], %s1168
        %s1170 = sand.u32 %s131, 1
        %s1171 = smul.addr %s1170, 8
        %s1172 = scalar_lea.vmem [#allocation5], %s1171
        // Predicated region
        $region145: #{decoder_forward.2} parent=139 // pred_check
          %p1173 = pneg %p144
        $region146: #{decoder_forward.2} parent=139 // pred_check_branch
          %1175 = sbr.rel (%p1173) target = $region148
        $region147: #{decoder_forward.2} parent=139 // pred_region
          %1176 = dma.done %s1169, 128
        $region148: #{decoder_forward.2} parent=139 // pred_fallthru
          _
        // Predicated region
        $region149: #{decoder_forward.2} parent=139 // pred_check
          %p1177 = pneg %p165
        $region150: #{decoder_forward.2} parent=139 // pred_check_branch
          %1179 = sbr.rel (%p1177) target = $region152
        $region151: #{decoder_forward.2} parent=139 // pred_region
          %1180 = dma.done [#allocation6], 128
        $region152: #{decoder_forward.2} parent=139 // pred_fallthru
          _
        %s1181 = sand.u32 %s97, 1
        %s1182 = scalar_lea.sflag [#allocation9], %s1181
        %s1183 = sand.u32 %s178, 1
        %s1184 = scalar_lea.vmem [#allocation8], %s1183
        // Predicated region
        $region153: #{decoder_forward.2} parent=139 // pred_check
          %p1185 = pneg %p191
        $region154: #{decoder_forward.2} parent=139 // pred_check_branch
          %1187 = sbr.rel (%p1185) target = $region156
        $region155: #{decoder_forward.2} parent=139 // pred_region
          %1188 = dma.done %s1182, 16
        $region156: #{decoder_forward.2} parent=139 // pred_fallthru
          _
        // Predicated region
        $region157: #{decoder_forward.2} parent=139 // pred_check
          %p1189 = pneg %p212
        $region158: #{decoder_forward.2} parent=139 // pred_check_branch
          %1191 = sbr.rel (%p1189) target = $region160
        $region159: #{decoder_forward.2} parent=139 // pred_region
          %1192 = dma.done [#allocation9], 16
        $region160: #{decoder_forward.2} parent=139 // pred_fallthru
          _
        // Predicated region
        $region161: #{decoder_forward.2} parent=139 // pred_check
          %p1193 = pneg %p233
        $region162: #{decoder_forward.2} parent=139 // pred_check_branch
          %1195 = sbr.rel (%p1193) target = $region164
        $region163: #{decoder_forward.2} parent=139 // pred_region
          %1196 = dma.done [#allocation12], 16
        $region164: #{decoder_forward.2} parent=139 // pred_fallthru
          _
        // Predicated region
        $region165: #{decoder_forward.2} parent=139 // pred_check
          %p1197 = pneg %p254
        $region166: #{decoder_forward.2} parent=139 // pred_check_branch
          %1199 = sbr.rel (%p1197) target = $region168
        $region167: #{decoder_forward.2} parent=139 // pred_region
          %1200 = dma.done [#allocation12], 256
        $region168: #{decoder_forward.2} parent=139 // pred_fallthru
          _
        // Predicated region
        $region169: #{decoder_forward.2} parent=139 // pred_check
          %p1201 = pneg %p275
        $region170: #{decoder_forward.2} parent=139 // pred_check_branch
          %1203 = sbr.rel (%p1201) target = $region172
        $region171: #{decoder_forward.2} parent=139 // pred_region
          %1204 = dma.done [#allocation15], 16
        $region172: #{decoder_forward.2} parent=139 // pred_fallthru
          _
        // Predicated region
        $region173: #{decoder_forward.2} parent=139 // pred_check
          %p1205 = pneg %p296
        $region174: #{decoder_forward.2} parent=139 // pred_check_branch
          %1207 = sbr.rel (%p1205) target = $region176
        $region175: #{decoder_forward.2} parent=139 // pred_region
          %1208 = dma.done [#allocation15], 256
        $region176: #{decoder_forward.2} parent=139 // pred_fallthru
          _
        // Predicated region
        $region177: #{decoder_forward.2} parent=139 // pred_check
          %p1209 = pneg %p317
        $region178: #{decoder_forward.2} parent=139 // pred_check_branch
          %1211 = sbr.rel (%p1209) target = $region180
        $region179: #{decoder_forward.2} parent=139 // pred_region
          %1212 = dma.done [#allocation18], 16
        $region180: #{decoder_forward.2} parent=139 // pred_fallthru
          _
        // Predicated region
        $region181: #{decoder_forward.2} parent=139 // pred_check
          %p1213 = pneg %p338
        $region182: #{decoder_forward.2} parent=139 // pred_check_branch
          %1215 = sbr.rel (%p1213) target = $region184
        $region183: #{decoder_forward.2} parent=139 // pred_region
          %1216 = dma.done [#allocation18], 256
        $region184: #{decoder_forward.2} parent=139 // pred_fallthru
          _
        // Predicated region
        $region185: #{decoder_forward.2} parent=139 // pred_check
          %p1217 = pneg %p359
        $region186: #{decoder_forward.2} parent=139 // pred_check_branch
          %1219 = sbr.rel (%p1217) target = $region188
        $region187: #{decoder_forward.2} parent=139 // pred_region
          %1220 = dma.done [#allocation21], 16
        $region188: #{decoder_forward.2} parent=139 // pred_fallthru
          _
        // Predicated region
        $region189: #{decoder_forward.2} parent=139 // pred_check
          %p1221 = pneg %p380
        $region190: #{decoder_forward.2} parent=139 // pred_check_branch
          %1223 = sbr.rel (%p1221) target = $region192
        $region191: #{decoder_forward.2} parent=139 // pred_region
          %1224 = dma.done [#allocation21], 256
        $region192: #{decoder_forward.2} parent=139 // pred_fallthru
          _
        // Predicated region
        $region193: #{decoder_forward.2} parent=139 // pred_check
          %p1225 = pneg %p401
        $region194: #{decoder_forward.2} parent=139 // pred_check_branch
          %1227 = sbr.rel (%p1225) target = $region196
        $region195: #{decoder_forward.2} parent=139 // pred_region
          %1228 = dma.done [#allocation24], 16
        $region196: #{decoder_forward.2} parent=139 // pred_fallthru
          _
        // Predicated region
        $region197: #{decoder_forward.2} parent=139 // pred_check
          %p1229 = pneg %p422
        $region198: #{decoder_forward.2} parent=139 // pred_check_branch
          %1231 = sbr.rel (%p1229) target = $region200
        $region199: #{decoder_forward.2} parent=139 // pred_region
          %1232 = dma.done [#allocation24], 16
        $region200: #{decoder_forward.2} parent=139 // pred_fallthru
          _
        // Predicated region
        $region201: #{decoder_forward.2} parent=139 // pred_check
          %p1233 = pneg %p443
        $region202: #{decoder_forward.2} parent=139 // pred_check_branch
          %1235 = sbr.rel (%p1233) target = $region204
        $region203: #{decoder_forward.2} parent=139 // pred_region
          %1236 = dma.done [#allocation27], 16
        $region204: #{decoder_forward.2} parent=139 // pred_fallthru
          _
        // Predicated region
        $region205: #{decoder_forward.2} parent=139 // pred_check
          %p1237 = pneg %p464
        $region206: #{decoder_forward.2} parent=139 // pred_check_branch
          %1239 = sbr.rel (%p1237) target = $region208
        $region207: #{decoder_forward.2} parent=139 // pred_region
          %1240 = dma.done [#allocation27], 256
        $region208: #{decoder_forward.2} parent=139 // pred_fallthru
          _
        // Predicated region
        $region209: #{decoder_forward.2} parent=139 // pred_check
          %p1241 = pneg %p485
        $region210: #{decoder_forward.2} parent=139 // pred_check_branch
          %1243 = sbr.rel (%p1241) target = $region212
        $region211: #{decoder_forward.2} parent=139 // pred_region
          %1244 = dma.done [#allocation30], 16
        $region212: #{decoder_forward.2} parent=139 // pred_fallthru
          _
        // Predicated region
        $region213: #{decoder_forward.2} parent=139 // pred_check
          %p1245 = pneg %p506
        $region214: #{decoder_forward.2} parent=139 // pred_check_branch
          %1247 = sbr.rel (%p1245) target = $region216
        $region215: #{decoder_forward.2} parent=139 // pred_region
          %1248 = dma.done [#allocation30], 256
        $region216: #{decoder_forward.2} parent=139 // pred_fallthru
          _
        // Predicated region
        $region217: #{decoder_forward.2} parent=139 // pred_check
          %p1249 = pneg %p527
        $region218: #{decoder_forward.2} parent=139 // pred_check_branch
          %1251 = sbr.rel (%p1249) target = $region220
        $region219: #{decoder_forward.2} parent=139 // pred_region
          %1252 = dma.done [#allocation33], 16
        $region220: #{decoder_forward.2} parent=139 // pred_fallthru
          _
        // Predicated region
        $region221: #{decoder_forward.2} parent=139 // pred_check
          %p1253 = pneg %p548
        $region222: #{decoder_forward.2} parent=139 // pred_check_branch
          %1255 = sbr.rel (%p1253) target = $region224
        $region223: #{decoder_forward.2} parent=139 // pred_region
          %1256 = dma.done [#allocation33], 256
        $region224: #{decoder_forward.2} parent=139 // pred_fallthru
          _
        // Predicated region
        $region225: #{decoder_forward.2} parent=139 // pred_check
          %p1257 = pneg %p569
        $region226: #{decoder_forward.2} parent=139 // pred_check_branch
          %1259 = sbr.rel (%p1257) target = $region228
        $region227: #{decoder_forward.2} parent=139 // pred_region
          %1260 = dma.done [#allocation36], 16
        $region228: #{decoder_forward.2} parent=139 // pred_fallthru
          _
        // Predicated region
        $region229: #{decoder_forward.2} parent=139 // pred_check
          %p1261 = pneg %p590
        $region230: #{decoder_forward.2} parent=139 // pred_check_branch
          %1263 = sbr.rel (%p1261) target = $region232
        $region231: #{decoder_forward.2} parent=139 // pred_region
          %1264 = dma.done [#allocation36], 256
        $region232: #{decoder_forward.2} parent=139 // pred_fallthru
          _
        // Predicated region
        $region233: #{decoder_forward.2} parent=139 // pred_check
          %p1265 = pneg %p611
        $region234: #{decoder_forward.2} parent=139 // pred_check_branch
          %1267 = sbr.rel (%p1265) target = $region236
        $region235: #{decoder_forward.2} parent=139 // pred_region
          %1268 = dma.done [#allocation39], 16
        $region236: #{decoder_forward.2} parent=139 // pred_fallthru
          _
        // Predicated region
        $region237: #{decoder_forward.2} parent=139 // pred_check
          %p1269 = pneg %p632
        $region238: #{decoder_forward.2} parent=139 // pred_check_branch
          %1271 = sbr.rel (%p1269) target = $region240
        $region239: #{decoder_forward.2} parent=139 // pred_region
          %1272 = dma.done [#allocation39], 16
        $region240: #{decoder_forward.2} parent=139 // pred_fallthru
          _
        // Predicated region
        $region241: #{decoder_forward.2} parent=139 // pred_check
          %p1273 = pneg %p653
        $region242: #{decoder_forward.2} parent=139 // pred_check_branch
          %1275 = sbr.rel (%p1273) target = $region244
        $region243: #{decoder_forward.2} parent=139 // pred_region
          %1276 = dma.done [#allocation42], 16
        $region244: #{decoder_forward.2} parent=139 // pred_fallthru
          _
        // Predicated region
        $region245: #{decoder_forward.2} parent=139 // pred_check
          %p1277 = pneg %p674
        $region246: #{decoder_forward.2} parent=139 // pred_check_branch
          %1279 = sbr.rel (%p1277) target = $region248
        $region247: #{decoder_forward.2} parent=139 // pred_region
          %1280 = dma.done [#allocation42], 256
        $region248: #{decoder_forward.2} parent=139 // pred_fallthru
          _
        // Predicated region
        $region249: #{decoder_forward.2} parent=139 // pred_check
          %p1281 = pneg %p695
        $region250: #{decoder_forward.2} parent=139 // pred_check_branch
          %1283 = sbr.rel (%p1281) target = $region252
        $region251: #{decoder_forward.2} parent=139 // pred_region
          %1284 = dma.done [#allocation45], 16
        $region252: #{decoder_forward.2} parent=139 // pred_fallthru
          _
        // Predicated region
        $region253: #{decoder_forward.2} parent=139 // pred_check
          %p1285 = pneg %p716
        $region254: #{decoder_forward.2} parent=139 // pred_check_branch
          %1287 = sbr.rel (%p1285) target = $region256
        $region255: #{decoder_forward.2} parent=139 // pred_region
          %1288 = dma.done [#allocation45], 512
        $region256: #{decoder_forward.2} parent=139 // pred_fallthru
          _
        // Predicated region
        $region257: #{decoder_forward.2} parent=139 // pred_check
          %p1289 = pneg %p737
        $region258: #{decoder_forward.2} parent=139 // pred_check_branch
          %1291 = sbr.rel (%p1289) target = $region260
        $region259: #{decoder_forward.2} parent=139 // pred_region
          %1292 = dma.done [#allocation48], 16
        $region260: #{decoder_forward.2} parent=139 // pred_fallthru
          _
        %s1293 = sand.u32 %s105, 1
        %s1294 = scalar_lea.sflag [#allocation3], %s1293
        %s1295 = sand.u32 %s105, 1
        %s1296 = smul.addr %s1295, 8
        %s1297 = scalar_lea.vmem [#allocation2], %s1296
        %p1298 = pneg %p118
        %p1299 = pneg %p115
        %s1300 = sand.u32 %s97, 1
        %s1301 = scalar_lea.sflag [#allocation6], %s1300
        %s1302 = sand.u32 %s131, 1
        %s1303 = smul.addr %s1302, 8
        %s1304 = scalar_lea.vmem [#allocation5], %s1303
        %p1305 = pneg %p144
        %p1306 = pneg %p141
        %p1307 = pneg %p165
        %p1308 = pneg %p162
        %s1309 = sand.u32 %s97, 1
        %s1310 = scalar_lea.sflag [#allocation9], %s1309
        %s1311 = sand.u32 %s178, 1
        %s1312 = scalar_lea.vmem [#allocation8], %s1311
        %p1313 = pneg %p191
        %p1314 = pneg %p188
        %p1315 = pneg %p212
        %p1316 = pneg %p209
        %p1317 = pneg %p233
        %p1318 = pneg %p230
        %p1319 = pneg %p254
        %p1320 = pneg %p251
        %p1321 = pneg %p275
        %p1322 = pneg %p272
        %p1323 = pneg %p296
        %p1324 = pneg %p293
        %p1325 = pneg %p317
        %p1326 = pneg %p314
        %p1327 = pneg %p338
        %p1328 = pneg %p335
        %p1329 = pneg %p359
        %p1330 = pneg %p356
        %p1331 = pneg %p380
        %p1332 = pneg %p377
        %p1333 = pneg %p401
        %p1334 = pneg %p398
        %p1335 = pneg %p422
        %p1336 = pneg %p419
        %p1337 = pneg %p443
        %p1338 = pneg %p440
        %p1339 = pneg %p464
        %p1340 = pneg %p461
        %p1341 = pneg %p485
        %p1342 = pneg %p482
        %p1343 = pneg %p506
        %p1344 = pneg %p503
        %p1345 = pneg %p527
        %p1346 = pneg %p524
        %p1347 = pneg %p548
        %p1348 = pneg %p545
        %p1349 = pneg %p569
        %p1350 = pneg %p566
        %p1351 = pneg %p590
        %p1352 = pneg %p587
        %p1353 = pneg %p611
        %p1354 = pneg %p608
        %p1355 = pneg %p632
        %p1356 = pneg %p629
        %p1357 = pneg %p653
        %p1358 = pneg %p650
        %p1359 = pneg %p674
        %p1360 = pneg %p671
        %p1361 = pneg %p695
        %p1362 = pneg %p692
        %p1363 = pneg %p716
        %p1364 = pneg %p713
        %p1365 = pneg %p737
        %p1366 = pneg %p734
        %p1367 = pneg %p763
        %p1368 = pneg %p760
        %s1369 = sand.u32 %s750, 1
        %s1370 = scalar_lea.sflag [#allocation4], %s1369
        %s1371 = sand.u32 %s750, 1
        %s1372 = smul.addr %s1371, 8
        %s1373 = scalar_lea.vmem [#allocation49], %s1372
        %v1375 = vld [vmem:[%s1163] sm:$0xff]
        %v1376 = vld [vmem:[#allocation10] sm:$0x1]
        %v1377 = vld [vmem:[#allocation11] sm:$0x1]
        %vm1378 = vcmask 261120
        %v1379 = vsel %vm1378, %v1375, 0.0
        %1380 = vadd.xlane.f32.xlu0 %v1379
        %v1381 = vpop.xlane.xlu0 %1380
        %v1382 = vrcp.pop 32.0
        %v1383 = vmul.f32 %v1381, %v1382
        %v1384 = vsub.f32 %v1375, %v1383
        %v1385 = vmul.f32 %v1384, %v1384
        %v1386 = vsel %vm1378, %v1385, 0.0
        %1387 = vadd.xlane.f32.xlu0 %v1386
        %v1388 = vpop.xlane.xlu0 %1387
        %v1389 = vmul.f32 %v1388, 0.032258064
        %v1390 = vrsqrt.pop %v1389
        %v1391 = vmul.f32 %v1389, %v1390
        %vm1392 = vcmp.eq.f32.partialorder %v1389, inf
        %v1393 = vsel %vm1392, %v1389, %v1391
        %vm1394 = vcmp.eq.f32.partialorder %v1389, 0.0
        %v1395 = vand.u32 %v1389, 2147483648
        %v1396 = vsel %vm1394, %v1395, %v1393
        %v1398 = vlaneseq
        %v1399 = vshrl.u32 %v1398, 7
        %v1400 = vsub.s32 0, %v1399
        %v1401 = vrot.slane %v1376, %v1400
        %v1403 = vmul.f32 %v1401, %v1384
        %v1404 = vadd.f32 %v1396, 1e-06
        %v1405 = vrcp.pop %v1404
        %v1406 = vmul.f32 %v1403, %v1405
        %v1408 = vlaneseq
        %v1409 = vshrl.u32 %v1408, 7
        %v1410 = vsub.s32 0, %v1409
        %v1411 = vrot.slane %v1377, %v1410
        %v1413 = vadd.f32 %v1406, %v1411
        %v1414 = vld [vmem:[#allocation7] sm:$0xff]
        %v1415 = vsub.f32 %v1414, 1.0
        %v1416 = vmul.f32 %v1415, 1e+09
        %v1417 = vpack.c.bf16 %v1413, %v1413
        %v1418 = vld [vmem:[#allocation13] sm:$0xf]
        %v1419 = vld [vmem:[#allocation13 + $0x4] sm:$0xf]
        %v1420 = vld [vmem:[#allocation13 + $0x8] sm:$0xf]
        %v1421 = vld [vmem:[#allocation13 + $0xc] sm:$0xf]
        %v1422 = vld [vmem:[#allocation14] sm:$0x1]
        %v1424 = vlaneseq
        %v1425 = vshrl.u32 %v1424, 7
        %v1426 = vsub.s32 0, %v1425
        %v1427 = vrot.slane %v1422, %v1426
        %v1433 = vunpack.c.l.b16 %v1418
        %v1434 = vunpack.c.l.b16 %v1419
        %v1435 = vunpack.c.l.b16 %v1420
        %v1436 = vunpack.c.l.b16 %v1421
        %v1437 = vpack.c.b16 %v1434, %v1433
        %v1438 = vpack.c.b16 %v1436, %v1435
        %v1442 = vsel %vm1378, %v1417, 0
        %1444 = vmatprep.subr.bf16.mxu0 0
        %1445 = vmatpush1.bf16.msra.mxu0 %v1437
        %1446 = vmatprep.subr.bf16.mxu0 0
        %1447 = vmatpush1.bf16.msra.mxu0 %v1438
        %1448 = vmatprep.subr.bf16.mxu0 0
        %1449 = vmatpush1.bf16.msra.mxu0 0
        %1450 = vmatprep.subr.bf16.mxu0 0
        %1451 = vmatpush1.bf16.msra.mxu0 0
        %1452 = vmatprep.subr.bf16.mxu0 0
        %1453 = vmatpush1.bf16.msra.mxu0 0
        %1454 = vmatprep.subr.bf16.mxu0 0
        %1455 = vmatpush1.bf16.msra.mxu0 0
        %1456 = vmatprep.subr.bf16.mxu0 0
        %1457 = vmatpush1.bf16.msra.mxu0 0
        %1458 = vmatprep.subr.bf16.mxu0 0
        %1459 = vmatpush1.bf16.msra.mxu0 0
        %1460 = vmatprep.subr.bf16.mxu0 0
        %1461 = vmatpush1.bf16.msra.mxu0 0
        %1462 = vmatprep.subr.bf16.mxu0 0
        %1463 = vmatpush1.bf16.msra.mxu0 0
        %1464 = vmatprep.subr.bf16.mxu0 0
        %1465 = vmatpush1.bf16.msra.mxu0 0
        %1466 = vmatprep.subr.bf16.mxu0 0
        %1467 = vmatpush1.bf16.msra.mxu0 0
        %1468 = vmatprep.subr.bf16.mxu0 0
        %1469 = vmatpush1.bf16.msra.mxu0 0
        %1470 = vmatprep.subr.bf16.mxu0 0
        %1471 = vmatpush1.bf16.msra.mxu0 0
        %1472 = vmatprep.subr.bf16.mxu0 0
        %1473 = vmatpush1.bf16.msra.mxu0 0
        %1474 = vmatprep.subr.bf16.mxu0 0
        %1475 = vmatpush1.bf16.msra.mxu0 0
        %1476 = vmatprep.mubr.bf16.mxu0 0
        %1477 = vmatmul.mubr.bf16.gmra.mrb[0].mxu0 %v1442
        %v1478 = vpop.f32.mrb[0].mxu0
        %v1479 = vadd.f32 %v1427, %v1478
        %v1480 = vpop.f32.mrb[0].mxu0
        %v1481 = vpop.f32.mrb[0].mxu0
        %v1482 = vpop.f32.mrb[0].mxu0
        %1483 = vdwg.mxu0
        %v1484 = vmul.f32 %v1479, 0.35355338
        %v1485 = vld [vmem:[#allocation16] sm:$0xf]
        %v1486 = vld [vmem:[#allocation16 + $0x4] sm:$0xf]
        %v1487 = vld [vmem:[#allocation16 + $0x8] sm:$0xf]
        %v1488 = vld [vmem:[#allocation16 + $0xc] sm:$0xf]
        %v1489 = vld [vmem:[#allocation17] sm:$0x1]
        %v1491 = vlaneseq
        %v1492 = vshrl.u32 %v1491, 7
        %v1493 = vsub.s32 0, %v1492
        %v1494 = vrot.slane %v1489, %v1493
        %v1500 = vunpack.c.l.b16 %v1485
        %v1501 = vunpack.c.l.b16 %v1486
        %v1502 = vunpack.c.l.b16 %v1487
        %v1503 = vunpack.c.l.b16 %v1488
        %v1504 = vpack.c.b16 %v1501, %v1500
        %v1505 = vpack.c.b16 %v1503, %v1502
        %1508 = vmatprep.subr.bf16.mxu0 0
        %1509 = vmatpush1.bf16.msra.mxu0 %v1504
        %1510 = vmatprep.subr.bf16.mxu0 0
        %1511 = vmatpush1.bf16.msra.mxu0 %v1505
        %1512 = vmatprep.subr.bf16.mxu0 0
        %1513 = vmatpush1.bf16.msra.mxu0 0
        %1514 = vmatprep.subr.bf16.mxu0 0
        %1515 = vmatpush1.bf16.msra.mxu0 0
        %1516 = vmatprep.subr.bf16.mxu0 0
        %1517 = vmatpush1.bf16.msra.mxu0 0
        %1518 = vmatprep.subr.bf16.mxu0 0
        %1519 = vmatpush1.bf16.msra.mxu0 0
        %1520 = vmatprep.subr.bf16.mxu0 0
        %1521 = vmatpush1.bf16.msra.mxu0 0
        %1522 = vmatprep.subr.bf16.mxu0 0
        %1523 = vmatpush1.bf16.msra.mxu0 0
        %1524 = vmatprep.subr.bf16.mxu0 0
        %1525 = vmatpush1.bf16.msra.mxu0 0
        %1526 = vmatprep.subr.bf16.mxu0 0
        %1527 = vmatpush1.bf16.msra.mxu0 0
        %1528 = vmatprep.subr.bf16.mxu0 0
        %1529 = vmatpush1.bf16.msra.mxu0 0
        %1530 = vmatprep.subr.bf16.mxu0 0
        %1531 = vmatpush1.bf16.msra.mxu0 0
        %1532 = vmatprep.subr.bf16.mxu0 0
        %1533 = vmatpush1.bf16.msra.mxu0 0
        %1534 = vmatprep.subr.bf16.mxu0 0
        %1535 = vmatpush1.bf16.msra.mxu0 0
        %1536 = vmatprep.subr.bf16.mxu0 0
        %1537 = vmatpush1.bf16.msra.mxu0 0
        %1538 = vmatprep.subr.bf16.mxu0 0
        %1539 = vmatpush1.bf16.msra.mxu0 0
        %1540 = vmatprep.mubr.bf16.mxu0 0
        %1541 = vmatmul.mubr.bf16.gmra.mrb[0].mxu0 %v1442
        %v1542 = vpop.f32.mrb[0].mxu0
        %v1543 = vadd.f32 %v1494, %v1542
        %v1544 = vpop.f32.mrb[0].mxu0
        %v1545 = vpop.f32.mrb[0].mxu0
        %v1546 = vpop.f32.mrb[0].mxu0
        %1547 = vdwg.mxu0
        %v1548 = vld [vmem:[#allocation19] sm:$0xf]
        %v1549 = vld [vmem:[#allocation19 + $0x4] sm:$0xf]
        %v1550 = vld [vmem:[#allocation19 + $0x8] sm:$0xf]
        %v1551 = vld [vmem:[#allocation19 + $0xc] sm:$0xf]
        %v1552 = vld [vmem:[#allocation20] sm:$0x1]
        %v1554 = vlaneseq
        %v1555 = vshrl.u32 %v1554, 7
        %v1556 = vsub.s32 0, %v1555
        %v1557 = vrot.slane %v1552, %v1556
        %v1563 = vunpack.c.l.b16 %v1548
        %v1564 = vunpack.c.l.b16 %v1549
        %v1565 = vunpack.c.l.b16 %v1550
        %v1566 = vunpack.c.l.b16 %v1551
        %v1567 = vpack.c.b16 %v1564, %v1563
        %v1568 = vpack.c.b16 %v1566, %v1565
        %1571 = vmatprep.subr.bf16.mxu0 0
        %1572 = vmatpush1.bf16.msra.mxu0 %v1567
        %1573 = vmatprep.subr.bf16.mxu0 0
        %1574 = vmatpush1.bf16.msra.mxu0 %v1568
        %1575 = vmatprep.subr.bf16.mxu0 0
        %1576 = vmatpush1.bf16.msra.mxu0 0
        %1577 = vmatprep.subr.bf16.mxu0 0
        %1578 = vmatpush1.bf16.msra.mxu0 0
        %1579 = vmatprep.subr.bf16.mxu0 0
        %1580 = vmatpush1.bf16.msra.mxu0 0
        %1581 = vmatprep.subr.bf16.mxu0 0
        %1582 = vmatpush1.bf16.msra.mxu0 0
        %1583 = vmatprep.subr.bf16.mxu0 0
        %1584 = vmatpush1.bf16.msra.mxu0 0
        %1585 = vmatprep.subr.bf16.mxu0 0
        %1586 = vmatpush1.bf16.msra.mxu0 0
        %1587 = vmatprep.subr.bf16.mxu0 0
        %1588 = vmatpush1.bf16.msra.mxu0 0
        %1589 = vmatprep.subr.bf16.mxu0 0
        %1590 = vmatpush1.bf16.msra.mxu0 0
        %1591 = vmatprep.subr.bf16.mxu0 0
        %1592 = vmatpush1.bf16.msra.mxu0 0
        %1593 = vmatprep.subr.bf16.mxu0 0
        %1594 = vmatpush1.bf16.msra.mxu0 0
        %1595 = vmatprep.subr.bf16.mxu0 0
        %1596 = vmatpush1.bf16.msra.mxu0 0
        %1597 = vmatprep.subr.bf16.mxu0 0
        %1598 = vmatpush1.bf16.msra.mxu0 0
        %1599 = vmatprep.subr.bf16.mxu0 0
        %1600 = vmatpush1.bf16.msra.mxu0 0
        %1601 = vmatprep.subr.bf16.mxu0 0
        %1602 = vmatpush1.bf16.msra.mxu0 0
        %1603 = vmatprep.mubr.bf16.mxu0 0
        %1604 = vmatmul.mubr.bf16.gmra.mrb[0].mxu0 %v1442
        %v1605 = vpop.f32.mrb[0].mxu0
        %v1606 = vadd.f32 %v1557, %v1605
        %v1607 = vpop.f32.mrb[0].mxu0
        %v1608 = vpop.f32.mrb[0].mxu0
        %v1609 = vpop.f32.mrb[0].mxu0
        %1610 = vdwg.mxu0
        %v1611 = vpack.c.bf16 %v1484, %v1484
        %v1612 = vpack.c.bf16 %v1543, %v1543
        %v1613 = vpack.c.bf16 %v1606, %v1606
        %vm1614 = vcmask 64512
        %v1616 = vsel %vm1614, %v1611, 0
        %v1619 = vsel %vm1614, %v1612, 0
        %1621 = vmatprep.subr.bf16.mxu0 0
        %1622 = vmatpush1.bf16.xpose.msra.mxu0 %v1619
        %1623 = vmatprep.subr.bf16.mxu0 0
        %1624 = vmatpush1.bf16.xpose.msra.mxu0 0
        %1625 = vmatprep.subr.bf16.mxu0 0
        %1626 = vmatpush1.bf16.xpose.msra.mxu0 0
        %1627 = vmatprep.subr.bf16.mxu0 0
        %1628 = vmatpush1.bf16.xpose.msra.mxu0 0
        %1629 = vmatprep.subr.bf16.mxu0 0
        %1630 = vmatpush1.bf16.xpose.msra.mxu0 0
        %1631 = vmatprep.subr.bf16.mxu0 0
        %1632 = vmatpush1.bf16.xpose.msra.mxu0 0
        %1633 = vmatprep.subr.bf16.mxu0 0
        %1634 = vmatpush1.bf16.xpose.msra.mxu0 0
        %1635 = vmatprep.subr.bf16.mxu0 0
        %1636 = vmatpush1.bf16.xpose.msra.mxu0 0
        %1637 = vmatprep.subr.bf16.mxu0 0
        %1638 = vmatpush1.bf16.xpose.msra.mxu0 0
        %1639 = vmatprep.subr.bf16.mxu0 0
        %1640 = vmatpush1.bf16.xpose.msra.mxu0 0
        %1641 = vmatprep.subr.bf16.mxu0 0
        %1642 = vmatpush1.bf16.xpose.msra.mxu0 0
        %1643 = vmatprep.subr.bf16.mxu0 0
        %1644 = vmatpush1.bf16.xpose.msra.mxu0 0
        %1645 = vmatprep.subr.bf16.mxu0 0
        %1646 = vmatpush1.bf16.xpose.msra.mxu0 0
        %1647 = vmatprep.subr.bf16.mxu0 0
        %1648 = vmatpush1.bf16.xpose.msra.mxu0 0
        %1649 = vmatprep.subr.bf16.mxu0 0
        %1650 = vmatpush1.bf16.xpose.msra.mxu0 0
        %1651 = vmatprep.subr.bf16.mxu0 0
        %1652 = vmatpush1.bf16.xpose.msra.mxu0 0
        %1653 = vmatprep.mubr.bf16.mxu0 0
        %1654 = vmatmul.mubr.bf16.gmra.mrb[0].mxu0 %v1616
        %v1655 = vpop.f32.mrb[0].mxu0
        %v1656 = vadd.f32 %v1416, %v1655
        %v1657 = vpop.f32.mrb[0].mxu0
        %v1658 = vpop.f32.mrb[0].mxu0
        %v1659 = vpop.f32.mrb[0].mxu0
        %1660 = vdwg.mxu0
        %v1661 = vsel %vm1614, %v1656, -inf
        %1662 = vmax.xlane.f32.xlu0 %v1661
        %v1663 = vpop.xlane.xlu0 %1662
        %v1664 = vmax.f32 %v1663, -1e+30
        %v1665 = vsub.f32 -1e+30, %v1664
        %v1666 = vmul.f32 %v1665, 1.442695
        %v1667 = vpow.pop %v1666
        %v1668 = vsub.f32 %v1656, %v1664
        %v1669 = vmul.f32 %v1668, 1.442695
        %v1670 = vpow.pop %v1669
        %v1671 = vmul.f32 %v1667, 0.0
        %v1672 = vsel %vm1614, %v1670, 0.0
        %1673 = vadd.xlane.f32.xlu0 %v1672
        %v1674 = vpop.xlane.xlu0 %1673
        %v1675 = vadd.f32 %v1671, %v1674
        %v1676 = vpack.c.bf16 %v1670, %v1670
        %v1678 = vsel %vm1614, %v1676, 0
        %vm1680 = vcmask 1043456
        %v1682 = vsel %vm1680, %v1613, 0
        %1684 = vmatprep.subr.bf16.mxu0 0
        %1685 = vmatpush1.bf16.msra.mxu0 %v1682
        %1686 = vmatprep.subr.bf16.mxu0 0
        %1687 = vmatpush1.bf16.msra.mxu0 0
        %1688 = vmatprep.subr.bf16.mxu0 0
        %1689 = vmatpush1.bf16.msra.mxu0 0
        %1690 = vmatprep.subr.bf16.mxu0 0
        %1691 = vmatpush1.bf16.msra.mxu0 0
        %1692 = vmatprep.subr.bf16.mxu0 0
        %1693 = vmatpush1.bf16.msra.mxu0 0
        %1694 = vmatprep.subr.bf16.mxu0 0
        %1695 = vmatpush1.bf16.msra.mxu0 0
        %1696 = vmatprep.subr.bf16.mxu0 0
        %1697 = vmatpush1.bf16.msra.mxu0 0
        %1698 = vmatprep.subr.bf16.mxu0 0
        %1699 = vmatpush1.bf16.msra.mxu0 0
        %1700 = vmatprep.subr.bf16.mxu0 0
        %1701 = vmatpush1.bf16.msra.mxu0 0
        %1702 = vmatprep.subr.bf16.mxu0 0
        %1703 = vmatpush1.bf16.msra.mxu0 0
        %1704 = vmatprep.subr.bf16.mxu0 0
        %1705 = vmatpush1.bf16.msra.mxu0 0
        %1706 = vmatprep.subr.bf16.mxu0 0
        %1707 = vmatpush1.bf16.msra.mxu0 0
        %1708 = vmatprep.subr.bf16.mxu0 0
        %1709 = vmatpush1.bf16.msra.mxu0 0
        %1710 = vmatprep.subr.bf16.mxu0 0
        %1711 = vmatpush1.bf16.msra.mxu0 0
        %1712 = vmatprep.subr.bf16.mxu0 0
        %1713 = vmatpush1.bf16.msra.mxu0 0
        %1714 = vmatprep.subr.bf16.mxu0 0
        %1715 = vmatpush1.bf16.msra.mxu0 0
        %1716 = vmatprep.mubr.bf16.mxu0 0
        %1717 = vmatmul.mubr.bf16.gmra.mrb[0].mxu0 %v1678
        %v1718 = vpop.f32.mrb[0].mxu0
        %v1719 = vadd.f32 0.0, %v1718
        %v1720 = vpop.f32.mrb[0].mxu0
        %v1721 = vpop.f32.mrb[0].mxu0
        %v1722 = vpop.f32.mrb[0].mxu0
        %1723 = vdwg.mxu0
        %v1724 = vadd.f32 %v1671, %v1719
        %v1725 = vrcp.pop %v1675
        %v1726 = vmul.f32 %v1724, %v1725
        %v1727 = vpack.c.bf16 %v1726, %v1726
        %v1728 = vld [vmem:[#allocation22] sm:$0xf]
        %1730 = vrot.lane.b32.xlu0 %v1611, 120
        %v1731 = vpop.permute.xlu0 %1730
        %1733 = vrot.lane.b32.xlu0 %v1612, 120
        %v1734 = vpop.permute.xlu0 %1733
        %v1736 = vsel %vm1614, %v1731, 0
        %v1739 = vsel %vm1614, %v1734, 0
        %1741 = vmatprep.subr.bf16.mxu0 0
        %1742 = vmatpush1.bf16.xpose.msra.mxu0 %v1739
        %1743 = vmatprep.subr.bf16.mxu0 0
        %1744 = vmatpush1.bf16.xpose.msra.mxu0 0
        %1745 = vmatprep.subr.bf16.mxu0 0
        %1746 = vmatpush1.bf16.xpose.msra.mxu0 0
        %1747 = vmatprep.subr.bf16.mxu0 0
        %1748 = vmatpush1.bf16.xpose.msra.mxu0 0
        %1749 = vmatprep.subr.bf16.mxu0 0
        %1750 = vmatpush1.bf16.xpose.msra.mxu0 0
        %1751 = vmatprep.subr.bf16.mxu0 0
        %1752 = vmatpush1.bf16.xpose.msra.mxu0 0
        %1753 = vmatprep.subr.bf16.mxu0 0
        %1754 = vmatpush1.bf16.xpose.msra.mxu0 0
        %1755 = vmatprep.subr.bf16.mxu0 0
        %1756 = vmatpush1.bf16.xpose.msra.mxu0 0
        %1757 = vmatprep.subr.bf16.mxu0 0
        %1758 = vmatpush1.bf16.xpose.msra.mxu0 0
        %1759 = vmatprep.subr.bf16.mxu0 0
        %1760 = vmatpush1.bf16.xpose.msra.mxu0 0
        %1761 = vmatprep.subr.bf16.mxu0 0
        %1762 = vmatpush1.bf16.xpose.msra.mxu0 0
        %1763 = vmatprep.subr.bf16.mxu0 0
        %1764 = vmatpush1.bf16.xpose.msra.mxu0 0
        %1765 = vmatprep.subr.bf16.mxu0 0
        %1766 = vmatpush1.bf16.xpose.msra.mxu0 0
        %1767 = vmatprep.subr.bf16.mxu0 0
        %1768 = vmatpush1.bf16.xpose.msra.mxu0 0
        %1769 = vmatprep.subr.bf16.mxu0 0
        %1770 = vmatpush1.bf16.xpose.msra.mxu0 0
        %1771 = vmatprep.subr.bf16.mxu0 0
        %1772 = vmatpush1.bf16.xpose.msra.mxu0 0
        %1773 = vmatprep.mubr.bf16.mxu0 0
        %1774 = vmatmul.mubr.bf16.gmra.mrb[0].mxu0 %v1736
        %v1775 = vpop.f32.mrb[0].mxu0
        %v1776 = vadd.f32 %v1416, %v1775
        %v1777 = vpop.f32.mrb[0].mxu0
        %v1778 = vpop.f32.mrb[0].mxu0
        %v1779 = vpop.f32.mrb[0].mxu0
        %1780 = vdwg.mxu0
        %v1781 = vsel %vm1614, %v1776, -inf
        %1782 = vmax.xlane.f32.xlu0 %v1781
        %v1783 = vpop.xlane.xlu0 %1782
        %v1784 = vmax.f32 %v1783, -1e+30
        %v1785 = vsub.f32 -1e+30, %v1784
        %v1786 = vmul.f32 %v1785, 1.442695
        %v1787 = vpow.pop %v1786
        %v1788 = vsub.f32 %v1776, %v1784
        %v1789 = vmul.f32 %v1788, 1.442695
        %v1790 = vpow.pop %v1789
        %v1791 = vmul.f32 %v1787, 0.0
        %v1792 = vsel %vm1614, %v1790, 0.0
        %1793 = vadd.xlane.f32.xlu0 %v1792
        %v1794 = vpop.xlane.xlu0 %1793
        %v1795 = vadd.f32 %v1791, %v1794
        %v1796 = vpack.c.bf16 %v1790, %v1790
        %1798 = vrot.lane.b32.xlu0 %v1613, 120
        %v1799 = vpop.permute.xlu0 %1798
        %v1801 = vsel %vm1614, %v1796, 0
        %v1804 = vsel %vm1680, %v1799, 0
        %1806 = vmatprep.subr.bf16.mxu0 0
        %1807 = vmatpush1.bf16.msra.mxu0 %v1804
        %1808 = vmatprep.subr.bf16.mxu0 0
        %1809 = vmatpush1.bf16.msra.mxu0 0
        %1810 = vmatprep.subr.bf16.mxu0 0
        %1811 = vmatpush1.bf16.msra.mxu0 0
        %1812 = vmatprep.subr.bf16.mxu0 0
        %1813 = vmatpush1.bf16.msra.mxu0 0
        %1814 = vmatprep.subr.bf16.mxu0 0
        %1815 = vmatpush1.bf16.msra.mxu0 0
        %1816 = vmatprep.subr.bf16.mxu0 0
        %1817 = vmatpush1.bf16.msra.mxu0 0
        %1818 = vmatprep.subr.bf16.mxu0 0
        %1819 = vmatpush1.bf16.msra.mxu0 0
        %1820 = vmatprep.subr.bf16.mxu0 0
        %1821 = vmatpush1.bf16.msra.mxu0 0
        %1822 = vmatprep.subr.bf16.mxu0 0
        %1823 = vmatpush1.bf16.msra.mxu0 0
        %1824 = vmatprep.subr.bf16.mxu0 0
        %1825 = vmatpush1.bf16.msra.mxu0 0
        %1826 = vmatprep.subr.bf16.mxu0 0
        %1827 = vmatpush1.bf16.msra.mxu0 0
        %1828 = vmatprep.subr.bf16.mxu0 0
        %1829 = vmatpush1.bf16.msra.mxu0 0
        %1830 = vmatprep.subr.bf16.mxu0 0
        %1831 = vmatpush1.bf16.msra.mxu0 0
        %1832 = vmatprep.subr.bf16.mxu0 0
        %1833 = vmatpush1.bf16.msra.mxu0 0
        %1834 = vmatprep.subr.bf16.mxu0 0
        %1835 = vmatpush1.bf16.msra.mxu0 0
        %1836 = vmatprep.subr.bf16.mxu0 0
        %1837 = vmatpush1.bf16.msra.mxu0 0
        %1838 = vmatprep.mubr.bf16.mxu0 0
        %1839 = vmatmul.mubr.bf16.gmra.mrb[0].mxu0 %v1801
        %v1840 = vpop.f32.mrb[0].mxu0
        %v1841 = vadd.f32 0.0, %v1840
        %v1842 = vpop.f32.mrb[0].mxu0
        %v1843 = vpop.f32.mrb[0].mxu0
        %v1844 = vpop.f32.mrb[0].mxu0
        %1845 = vdwg.mxu0
        %v1846 = vadd.f32 %v1791, %v1841
        %v1847 = vrcp.pop %v1795
        %v1848 = vmul.f32 %v1846, %v1847
        %v1849 = vpack.c.bf16 %v1848, %v1848
        %v1850 = vld [vmem:[#allocation22 + $0x4] sm:$0xf]
        %v1852 = vsel %vm1614, %v1849, 0
        %v1855 = vsel %vm1680, %v1850, 0
        %1857 = vmatprep.subr.bf16.mxu0 0
        %1858 = vmatpush1.bf16.msra.mxu0 %v1855
        %1859 = vmatprep.subr.bf16.mxu0 0
        %1860 = vmatpush1.bf16.msra.mxu0 0
        %1861 = vmatprep.subr.bf16.mxu0 0
        %1862 = vmatpush1.bf16.msra.mxu0 0
        %1863 = vmatprep.subr.bf16.mxu0 0
        %1864 = vmatpush1.bf16.msra.mxu0 0
        %1865 = vmatprep.subr.bf16.mxu0 0
        %1866 = vmatpush1.bf16.msra.mxu0 0
        %1867 = vmatprep.subr.bf16.mxu0 0
        %1868 = vmatpush1.bf16.msra.mxu0 0
        %1869 = vmatprep.subr.bf16.mxu0 0
        %1870 = vmatpush1.bf16.msra.mxu0 0
        %1871 = vmatprep.subr.bf16.mxu0 0
        %1872 = vmatpush1.bf16.msra.mxu0 0
        %1873 = vmatprep.subr.bf16.mxu0 0
        %1874 = vmatpush1.bf16.msra.mxu0 0
        %1875 = vmatprep.subr.bf16.mxu0 0
        %1876 = vmatpush1.bf16.msra.mxu0 0
        %1877 = vmatprep.subr.bf16.mxu0 0
        %1878 = vmatpush1.bf16.msra.mxu0 0
        %1879 = vmatprep.subr.bf16.mxu0 0
        %1880 = vmatpush1.bf16.msra.mxu0 0
        %1881 = vmatprep.subr.bf16.mxu0 0
        %1882 = vmatpush1.bf16.msra.mxu0 0
        %1883 = vmatprep.subr.bf16.mxu0 0
        %1884 = vmatpush1.bf16.msra.mxu0 0
        %1885 = vmatprep.subr.bf16.mxu0 0
        %1886 = vmatpush1.bf16.msra.mxu0 0
        %1887 = vmatprep.subr.bf16.mxu0 0
        %1888 = vmatpush1.bf16.msra.mxu0 0
        %1889 = vmatprep.mubr.bf16.mxu0 0
        %1890 = vmatmul.mubr.bf16.gmra.mrb[0].mxu0 %v1852
        %v1891 = vpop.f32.mrb[0].mxu0
        %v1892 = vadd.f32 0.0, %v1891
        %v1893 = vpop.f32.mrb[0].mxu0
        %v1894 = vpop.f32.mrb[0].mxu0
        %v1895 = vpop.f32.mrb[0].mxu0
        %1896 = vdwg.mxu0
        %v1898 = vsel %vm1614, %v1727, 0
        %v1901 = vsel %vm1680, %v1728, 0
        %1903 = vmatprep.subr.bf16.mxu0 0
        %1904 = vmatpush1.bf16.msra.mxu0 %v1901
        %1905 = vmatprep.subr.bf16.mxu0 0
        %1906 = vmatpush1.bf16.msra.mxu0 0
        %1907 = vmatprep.subr.bf16.mxu0 0
        %1908 = vmatpush1.bf16.msra.mxu0 0
        %1909 = vmatprep.subr.bf16.mxu0 0
        %1910 = vmatpush1.bf16.msra.mxu0 0
        %1911 = vmatprep.subr.bf16.mxu0 0
        %1912 = vmatpush1.bf16.msra.mxu0 0
        %1913 = vmatprep.subr.bf16.mxu0 0
        %1914 = vmatpush1.bf16.msra.mxu0 0
        %1915 = vmatprep.subr.bf16.mxu0 0
        %1916 = vmatpush1.bf16.msra.mxu0 0
        %1917 = vmatprep.subr.bf16.mxu0 0
        %1918 = vmatpush1.bf16.msra.mxu0 0
        %1919 = vmatprep.subr.bf16.mxu0 0
        %1920 = vmatpush1.bf16.msra.mxu0 0
        %1921 = vmatprep.subr.bf16.mxu0 0
        %1922 = vmatpush1.bf16.msra.mxu0 0
        %1923 = vmatprep.subr.bf16.mxu0 0
        %1924 = vmatpush1.bf16.msra.mxu0 0
        %1925 = vmatprep.subr.bf16.mxu0 0
        %1926 = vmatpush1.bf16.msra.mxu0 0
        %1927 = vmatprep.subr.bf16.mxu0 0
        %1928 = vmatpush1.bf16.msra.mxu0 0
        %1929 = vmatprep.subr.bf16.mxu0 0
        %1930 = vmatpush1.bf16.msra.mxu0 0
        %1931 = vmatprep.subr.bf16.mxu0 0
        %1932 = vmatpush1.bf16.msra.mxu0 0
        %1933 = vmatprep.subr.bf16.mxu0 0
        %1934 = vmatpush1.bf16.msra.mxu0 0
        %1935 = vmatprep.mubr.bf16.mxu0 0
        %1936 = vmatmul.mubr.bf16.gmra.mrb[0].mxu0 %v1898
        %v1937 = vpop.f32.mrb[0].mxu0
        %v1938 = vadd.f32 %v1892, %v1937
        %v1939 = vpop.f32.mrb[0].mxu0
        %v1940 = vpop.f32.mrb[0].mxu0
        %v1941 = vpop.f32.mrb[0].mxu0
        %1942 = vdwg.mxu0
        %1943 = vrot.lane.b32.xlu0 %v1611, 112
        %v1944 = vpop.permute.xlu0 %1943
        %1945 = vrot.lane.b32.xlu0 %v1612, 112
        %v1946 = vpop.permute.xlu0 %1945
        %v1948 = vsel %vm1614, %v1944, 0
        %v1951 = vsel %vm1614, %v1946, 0
        %1953 = vmatprep.subr.bf16.mxu0 0
        %1954 = vmatpush1.bf16.xpose.msra.mxu0 %v1951
        %1955 = vmatprep.subr.bf16.mxu0 0
        %1956 = vmatpush1.bf16.xpose.msra.mxu0 0
        %1957 = vmatprep.subr.bf16.mxu0 0
        %1958 = vmatpush1.bf16.xpose.msra.mxu0 0
        %1959 = vmatprep.subr.bf16.mxu0 0
        %1960 = vmatpush1.bf16.xpose.msra.mxu0 0
        %1961 = vmatprep.subr.bf16.mxu0 0
        %1962 = vmatpush1.bf16.xpose.msra.mxu0 0
        %1963 = vmatprep.subr.bf16.mxu0 0
        %1964 = vmatpush1.bf16.xpose.msra.mxu0 0
        %1965 = vmatprep.subr.bf16.mxu0 0
        %1966 = vmatpush1.bf16.xpose.msra.mxu0 0
        %1967 = vmatprep.subr.bf16.mxu0 0
        %1968 = vmatpush1.bf16.xpose.msra.mxu0 0
        %1969 = vmatprep.subr.bf16.mxu0 0
        %1970 = vmatpush1.bf16.xpose.msra.mxu0 0
        %1971 = vmatprep.subr.bf16.mxu0 0
        %1972 = vmatpush1.bf16.xpose.msra.mxu0 0
        %1973 = vmatprep.subr.bf16.mxu0 0
        %1974 = vmatpush1.bf16.xpose.msra.mxu0 0
        %1975 = vmatprep.subr.bf16.mxu0 0
        %1976 = vmatpush1.bf16.xpose.msra.mxu0 0
        %1977 = vmatprep.subr.bf16.mxu0 0
        %1978 = vmatpush1.bf16.xpose.msra.mxu0 0
        %1979 = vmatprep.subr.bf16.mxu0 0
        %1980 = vmatpush1.bf16.xpose.msra.mxu0 0
        %1981 = vmatprep.subr.bf16.mxu0 0
        %1982 = vmatpush1.bf16.xpose.msra.mxu0 0
        %1983 = vmatprep.subr.bf16.mxu0 0
        %1984 = vmatpush1.bf16.xpose.msra.mxu0 0
        %1985 = vmatprep.mubr.bf16.mxu0 0
        %1986 = vmatmul.mubr.bf16.gmra.mrb[0].mxu0 %v1948
        %v1987 = vpop.f32.mrb[0].mxu0
        %v1988 = vadd.f32 %v1416, %v1987
        %v1989 = vpop.f32.mrb[0].mxu0
        %v1990 = vpop.f32.mrb[0].mxu0
        %v1991 = vpop.f32.mrb[0].mxu0
        %1992 = vdwg.mxu0
        %v1993 = vsel %vm1614, %v1988, -inf
        %1994 = vmax.xlane.f32.xlu0 %v1993
        %v1995 = vpop.xlane.xlu0 %1994
        %v1996 = vmax.f32 %v1995, -1e+30
        %v1997 = vsub.f32 -1e+30, %v1996
        %v1998 = vmul.f32 %v1997, 1.442695
        %v1999 = vpow.pop %v1998
        %v2000 = vsub.f32 %v1988, %v1996
        %v2001 = vmul.f32 %v2000, 1.442695
        %v2002 = vpow.pop %v2001
        %v2003 = vmul.f32 %v1999, 0.0
        %v2004 = vsel %vm1614, %v2002, 0.0
        %2005 = vadd.xlane.f32.xlu0 %v2004
        %v2006 = vpop.xlane.xlu0 %2005
        %v2007 = vadd.f32 %v2003, %v2006
        %v2008 = vpack.c.bf16 %v2002, %v2002
        %2009 = vrot.lane.b32.xlu0 %v1613, 112
        %v2010 = vpop.permute.xlu0 %2009
        %v2012 = vsel %vm1614, %v2008, 0
        %v2015 = vsel %vm1680, %v2010, 0
        %2017 = vmatprep.subr.bf16.mxu0 0
        %2018 = vmatpush1.bf16.msra.mxu0 %v2015
        %2019 = vmatprep.subr.bf16.mxu0 0
        %2020 = vmatpush1.bf16.msra.mxu0 0
        %2021 = vmatprep.subr.bf16.mxu0 0
        %2022 = vmatpush1.bf16.msra.mxu0 0
        %2023 = vmatprep.subr.bf16.mxu0 0
        %2024 = vmatpush1.bf16.msra.mxu0 0
        %2025 = vmatprep.subr.bf16.mxu0 0
        %2026 = vmatpush1.bf16.msra.mxu0 0
        %2027 = vmatprep.subr.bf16.mxu0 0
        %2028 = vmatpush1.bf16.msra.mxu0 0
        %2029 = vmatprep.subr.bf16.mxu0 0
        %2030 = vmatpush1.bf16.msra.mxu0 0
        %2031 = vmatprep.subr.bf16.mxu0 0
        %2032 = vmatpush1.bf16.msra.mxu0 0
        %2033 = vmatprep.subr.bf16.mxu0 0
        %2034 = vmatpush1.bf16.msra.mxu0 0
        %2035 = vmatprep.subr.bf16.mxu0 0
        %2036 = vmatpush1.bf16.msra.mxu0 0
        %2037 = vmatprep.subr.bf16.mxu0 0
        %2038 = vmatpush1.bf16.msra.mxu0 0
        %2039 = vmatprep.subr.bf16.mxu0 0
        %2040 = vmatpush1.bf16.msra.mxu0 0
        %2041 = vmatprep.subr.bf16.mxu0 0
        %2042 = vmatpush1.bf16.msra.mxu0 0
        %2043 = vmatprep.subr.bf16.mxu0 0
        %2044 = vmatpush1.bf16.msra.mxu0 0
        %2045 = vmatprep.subr.bf16.mxu0 0
        %2046 = vmatpush1.bf16.msra.mxu0 0
        %2047 = vmatprep.subr.bf16.mxu0 0
        %2048 = vmatpush1.bf16.msra.mxu0 0
        %2049 = vmatprep.mubr.bf16.mxu0 0
        %2050 = vmatmul.mubr.bf16.gmra.mrb[0].mxu0 %v2012
        %v2051 = vpop.f32.mrb[0].mxu0
        %v2052 = vadd.f32 0.0, %v2051
        %v2053 = vpop.f32.mrb[0].mxu0
        %v2054 = vpop.f32.mrb[0].mxu0
        %v2055 = vpop.f32.mrb[0].mxu0
        %2056 = vdwg.mxu0
        %v2057 = vadd.f32 %v2003, %v2052
        %v2058 = vrcp.pop %v2007
        %v2059 = vmul.f32 %v2057, %v2058
        %v2060 = vpack.c.bf16 %v2059, %v2059
        %v2061 = vld [vmem:[#allocation22 + $0x8] sm:$0xf]
        %v2063 = vsel %vm1614, %v2060, 0
        %v2066 = vsel %vm1680, %v2061, 0
        %2068 = vmatprep.subr.bf16.mxu0 0
        %2069 = vmatpush1.bf16.msra.mxu0 %v2066
        %2070 = vmatprep.subr.bf16.mxu0 0
        %2071 = vmatpush1.bf16.msra.mxu0 0
        %2072 = vmatprep.subr.bf16.mxu0 0
        %2073 = vmatpush1.bf16.msra.mxu0 0
        %2074 = vmatprep.subr.bf16.mxu0 0
        %2075 = vmatpush1.bf16.msra.mxu0 0
        %2076 = vmatprep.subr.bf16.mxu0 0
        %2077 = vmatpush1.bf16.msra.mxu0 0
        %2078 = vmatprep.subr.bf16.mxu0 0
        %2079 = vmatpush1.bf16.msra.mxu0 0
        %2080 = vmatprep.subr.bf16.mxu0 0
        %2081 = vmatpush1.bf16.msra.mxu0 0
        %2082 = vmatprep.subr.bf16.mxu0 0
        %2083 = vmatpush1.bf16.msra.mxu0 0
        %2084 = vmatprep.subr.bf16.mxu0 0
        %2085 = vmatpush1.bf16.msra.mxu0 0
        %2086 = vmatprep.subr.bf16.mxu0 0
        %2087 = vmatpush1.bf16.msra.mxu0 0
        %2088 = vmatprep.subr.bf16.mxu0 0
        %2089 = vmatpush1.bf16.msra.mxu0 0
        %2090 = vmatprep.subr.bf16.mxu0 0
        %2091 = vmatpush1.bf16.msra.mxu0 0
        %2092 = vmatprep.subr.bf16.mxu0 0
        %2093 = vmatpush1.bf16.msra.mxu0 0
        %2094 = vmatprep.subr.bf16.mxu0 0
        %2095 = vmatpush1.bf16.msra.mxu0 0
        %2096 = vmatprep.subr.bf16.mxu0 0
        %2097 = vmatpush1.bf16.msra.mxu0 0
        %2098 = vmatprep.subr.bf16.mxu0 0
        %2099 = vmatpush1.bf16.msra.mxu0 0
        %2100 = vmatprep.mubr.bf16.mxu0 0
        %2101 = vmatmul.mubr.bf16.gmra.mrb[0].mxu0 %v2063
        %v2102 = vpop.f32.mrb[0].mxu0
        %v2103 = vadd.f32 0.0, %v2102
        %v2104 = vpop.f32.mrb[0].mxu0
        %v2105 = vpop.f32.mrb[0].mxu0
        %v2106 = vpop.f32.mrb[0].mxu0
        %2107 = vdwg.mxu0
        %v2108 = vadd.f32 %v1938, %v2103
        %2109 = vrot.lane.b32.xlu0 %v1611, 104
        %v2110 = vpop.permute.xlu0 %2109
        %2111 = vrot.lane.b32.xlu0 %v1612, 104
        %v2112 = vpop.permute.xlu0 %2111
        %v2114 = vsel %vm1614, %v2110, 0
        %v2117 = vsel %vm1614, %v2112, 0
        %2119 = vmatprep.subr.bf16.mxu0 0
        %2120 = vmatpush1.bf16.xpose.msra.mxu0 %v2117
        %2121 = vmatprep.subr.bf16.mxu0 0
        %2122 = vmatpush1.bf16.xpose.msra.mxu0 0
        %2123 = vmatprep.subr.bf16.mxu0 0
        %2124 = vmatpush1.bf16.xpose.msra.mxu0 0
        %2125 = vmatprep.subr.bf16.mxu0 0
        %2126 = vmatpush1.bf16.xpose.msra.mxu0 0
        %2127 = vmatprep.subr.bf16.mxu0 0
        %2128 = vmatpush1.bf16.xpose.msra.mxu0 0
        %2129 = vmatprep.subr.bf16.mxu0 0
        %2130 = vmatpush1.bf16.xpose.msra.mxu0 0
        %2131 = vmatprep.subr.bf16.mxu0 0
        %2132 = vmatpush1.bf16.xpose.msra.mxu0 0
        %2133 = vmatprep.subr.bf16.mxu0 0
        %2134 = vmatpush1.bf16.xpose.msra.mxu0 0
        %2135 = vmatprep.subr.bf16.mxu0 0
        %2136 = vmatpush1.bf16.xpose.msra.mxu0 0
        %2137 = vmatprep.subr.bf16.mxu0 0
        %2138 = vmatpush1.bf16.xpose.msra.mxu0 0
        %2139 = vmatprep.subr.bf16.mxu0 0
        %2140 = vmatpush1.bf16.xpose.msra.mxu0 0
        %2141 = vmatprep.subr.bf16.mxu0 0
        %2142 = vmatpush1.bf16.xpose.msra.mxu0 0
        %2143 = vmatprep.subr.bf16.mxu0 0
        %2144 = vmatpush1.bf16.xpose.msra.mxu0 0
        %2145 = vmatprep.subr.bf16.mxu0 0
        %2146 = vmatpush1.bf16.xpose.msra.mxu0 0
        %2147 = vmatprep.subr.bf16.mxu0 0
        %2148 = vmatpush1.bf16.xpose.msra.mxu0 0
        %2149 = vmatprep.subr.bf16.mxu0 0
        %2150 = vmatpush1.bf16.xpose.msra.mxu0 0
        %2151 = vmatprep.mubr.bf16.mxu0 0
        %2152 = vmatmul.mubr.bf16.gmra.mrb[0].mxu0 %v2114
        %v2153 = vpop.f32.mrb[0].mxu0
        %v2154 = vadd.f32 %v1416, %v2153
        %v2155 = vpop.f32.mrb[0].mxu0
        %v2156 = vpop.f32.mrb[0].mxu0
        %v2157 = vpop.f32.mrb[0].mxu0
        %2158 = vdwg.mxu0
        %v2159 = vsel %vm1614, %v2154, -inf
        %2160 = vmax.xlane.f32.xlu0 %v2159
        %v2161 = vpop.xlane.xlu0 %2160
        %v2162 = vmax.f32 %v2161, -1e+30
        %v2163 = vsub.f32 -1e+30, %v2162
        %v2164 = vmul.f32 %v2163, 1.442695
        %v2165 = vpow.pop %v2164
        %v2166 = vsub.f32 %v2154, %v2162
        %v2167 = vmul.f32 %v2166, 1.442695
        %v2168 = vpow.pop %v2167
        %v2169 = vmul.f32 %v2165, 0.0
        %v2170 = vsel %vm1614, %v2168, 0.0
        %2171 = vadd.xlane.f32.xlu0 %v2170
        %v2172 = vpop.xlane.xlu0 %2171
        %v2173 = vadd.f32 %v2169, %v2172
        %v2174 = vpack.c.bf16 %v2168, %v2168
        %2175 = vrot.lane.b32.xlu0 %v1613, 104
        %v2176 = vpop.permute.xlu0 %2175
        %v2178 = vsel %vm1614, %v2174, 0
        %v2181 = vsel %vm1680, %v2176, 0
        %2183 = vmatprep.subr.bf16.mxu0 0
        %2184 = vmatpush1.bf16.msra.mxu0 %v2181
        %2185 = vmatprep.subr.bf16.mxu0 0
        %2186 = vmatpush1.bf16.msra.mxu0 0
        %2187 = vmatprep.subr.bf16.mxu0 0
        %2188 = vmatpush1.bf16.msra.mxu0 0
        %2189 = vmatprep.subr.bf16.mxu0 0
        %2190 = vmatpush1.bf16.msra.mxu0 0
        %2191 = vmatprep.subr.bf16.mxu0 0
        %2192 = vmatpush1.bf16.msra.mxu0 0
        %2193 = vmatprep.subr.bf16.mxu0 0
        %2194 = vmatpush1.bf16.msra.mxu0 0
        %2195 = vmatprep.subr.bf16.mxu0 0
        %2196 = vmatpush1.bf16.msra.mxu0 0
        %2197 = vmatprep.subr.bf16.mxu0 0
        %2198 = vmatpush1.bf16.msra.mxu0 0
        %2199 = vmatprep.subr.bf16.mxu0 0
        %2200 = vmatpush1.bf16.msra.mxu0 0
        %2201 = vmatprep.subr.bf16.mxu0 0
        %2202 = vmatpush1.bf16.msra.mxu0 0
        %2203 = vmatprep.subr.bf16.mxu0 0
        %2204 = vmatpush1.bf16.msra.mxu0 0
        %2205 = vmatprep.subr.bf16.mxu0 0
        %2206 = vmatpush1.bf16.msra.mxu0 0
        %2207 = vmatprep.subr.bf16.mxu0 0
        %2208 = vmatpush1.bf16.msra.mxu0 0
        %2209 = vmatprep.subr.bf16.mxu0 0
        %2210 = vmatpush1.bf16.msra.mxu0 0
        %2211 = vmatprep.subr.bf16.mxu0 0
        %2212 = vmatpush1.bf16.msra.mxu0 0
        %2213 = vmatprep.subr.bf16.mxu0 0
        %2214 = vmatpush1.bf16.msra.mxu0 0
        %2215 = vmatprep.mubr.bf16.mxu0 0
        %2216 = vmatmul.mubr.bf16.gmra.mrb[0].mxu0 %v2178
        %v2217 = vpop.f32.mrb[0].mxu0
        %v2218 = vadd.f32 0.0, %v2217
        %v2219 = vpop.f32.mrb[0].mxu0
        %v2220 = vpop.f32.mrb[0].mxu0
        %v2221 = vpop.f32.mrb[0].mxu0
        %2222 = vdwg.mxu0
        %v2223 = vadd.f32 %v2169, %v2218
        %v2224 = vrcp.pop %v2173
        %v2225 = vmul.f32 %v2223, %v2224
        %v2226 = vpack.c.bf16 %v2225, %v2225
        %v2227 = vld [vmem:[#allocation22 + $0xc] sm:$0xf]
        %v2229 = vsel %vm1614, %v2226, 0
        %v2232 = vsel %vm1680, %v2227, 0
        %2234 = vmatprep.subr.bf16.mxu0 0
        %2235 = vmatpush1.bf16.msra.mxu0 %v2232
        %2236 = vmatprep.subr.bf16.mxu0 0
        %2237 = vmatpush1.bf16.msra.mxu0 0
        %2238 = vmatprep.subr.bf16.mxu0 0
        %2239 = vmatpush1.bf16.msra.mxu0 0
        %2240 = vmatprep.subr.bf16.mxu0 0
        %2241 = vmatpush1.bf16.msra.mxu0 0
        %2242 = vmatprep.subr.bf16.mxu0 0
        %2243 = vmatpush1.bf16.msra.mxu0 0
        %2244 = vmatprep.subr.bf16.mxu0 0
        %2245 = vmatpush1.bf16.msra.mxu0 0
        %2246 = vmatprep.subr.bf16.mxu0 0
        %2247 = vmatpush1.bf16.msra.mxu0 0
        %2248 = vmatprep.subr.bf16.mxu0 0
        %2249 = vmatpush1.bf16.msra.mxu0 0
        %2250 = vmatprep.subr.bf16.mxu0 0
        %2251 = vmatpush1.bf16.msra.mxu0 0
        %2252 = vmatprep.subr.bf16.mxu0 0
        %2253 = vmatpush1.bf16.msra.mxu0 0
        %2254 = vmatprep.subr.bf16.mxu0 0
        %2255 = vmatpush1.bf16.msra.mxu0 0
        %2256 = vmatprep.subr.bf16.mxu0 0
        %2257 = vmatpush1.bf16.msra.mxu0 0
        %2258 = vmatprep.subr.bf16.mxu0 0
        %2259 = vmatpush1.bf16.msra.mxu0 0
        %2260 = vmatprep.subr.bf16.mxu0 0
        %2261 = vmatpush1.bf16.msra.mxu0 0
        %2262 = vmatprep.subr.bf16.mxu0 0
        %2263 = vmatpush1.bf16.msra.mxu0 0
        %2264 = vmatprep.subr.bf16.mxu0 0
        %2265 = vmatpush1.bf16.msra.mxu0 0
        %2266 = vmatprep.mubr.bf16.mxu0 0
        %2267 = vmatmul.mubr.bf16.gmra.mrb[0].mxu0 %v2229
        %v2268 = vpop.f32.mrb[0].mxu0
        %v2269 = vadd.f32 0.0, %v2268
        %v2270 = vpop.f32.mrb[0].mxu0
        %v2271 = vpop.f32.mrb[0].mxu0
        %v2272 = vpop.f32.mrb[0].mxu0
        %2273 = vdwg.mxu0
        %v2274 = vadd.f32 %v2108, %v2269
        %v2275 = vld [vmem:[#allocation23] sm:$0x1]
        %v2277 = vlaneseq
        %v2278 = vshrl.u32 %v2277, 7
        %v2279 = vsub.s32 0, %v2278
        %v2280 = vrot.slane %v2275, %v2279
        %v2282 = vadd.f32 %v2274, %v2280
        %v2283 = vadd.f32 %v1375, %v2282
        %v2284 = vld [vmem:[#allocation25] sm:$0x1]
        %v2285 = vld [vmem:[#allocation26] sm:$0x1]
        %v2286 = vsel %vm1378, %v2283, 0.0
        %2287 = vadd.xlane.f32.xlu0 %v2286
        %v2288 = vpop.xlane.xlu0 %2287
        %v2289 = vmul.f32 %v2288, %v1382
        %v2290 = vsub.f32 %v2283, %v2289
        %v2291 = vmul.f32 %v2290, %v2290
        %v2292 = vsel %vm1378, %v2291, 0.0
        %2293 = vadd.xlane.f32.xlu0 %v2292
        %v2294 = vpop.xlane.xlu0 %2293
        %v2295 = vmul.f32 %v2294, 0.032258064
        %v2296 = vrsqrt.pop %v2295
        %v2297 = vmul.f32 %v2295, %v2296
        %vm2298 = vcmp.eq.f32.partialorder %v2295, inf
        %v2299 = vsel %vm2298, %v2295, %v2297
        %vm2300 = vcmp.eq.f32.partialorder %v2295, 0.0
        %v2301 = vand.u32 %v2295, 2147483648
        %v2302 = vsel %vm2300, %v2301, %v2299
        %v2304 = vlaneseq
        %v2305 = vshrl.u32 %v2304, 7
        %v2306 = vsub.s32 0, %v2305
        %v2307 = vrot.slane %v2284, %v2306
        %v2309 = vmul.f32 %v2307, %v2290
        %v2310 = vadd.f32 %v2302, 1e-06
        %v2311 = vrcp.pop %v2310
        %v2312 = vmul.f32 %v2309, %v2311
        %v2314 = vlaneseq
        %v2315 = vshrl.u32 %v2314, 7
        %v2316 = vsub.s32 0, %v2315
        %v2317 = vrot.slane %v2285, %v2316
        %v2319 = vadd.f32 %v2312, %v2317
        %v2320 = vld [vmem:[%s1172] sm:$0xff]
        %v2321 = vld [vmem:[%s1184] sm:$0x1]
        %v2322 = vsub.f32 %v2321, 1.0
        %v2323 = vmul.f32 %v2322, 1e+09
        %v2324 = vpack.c.bf16 %v2319, %v2319
        %v2325 = vpack.c.bf16 %v2320, %v2320
        %v2326 = vld [vmem:[#allocation28] sm:$0xf]
        %v2327 = vld [vmem:[#allocation28 + $0x4] sm:$0xf]
        %v2328 = vld [vmem:[#allocation28 + $0x8] sm:$0xf]
        %v2329 = vld [vmem:[#allocation28 + $0xc] sm:$0xf]
        %v2330 = vld [vmem:[#allocation29] sm:$0x1]
        %v2332 = vlaneseq
        %v2333 = vshrl.u32 %v2332, 7
        %v2334 = vsub.s32 0, %v2333
        %v2335 = vrot.slane %v2330, %v2334
        %v2341 = vunpack.c.l.b16 %v2326
        %v2342 = vunpack.c.l.b16 %v2327
        %v2343 = vunpack.c.l.b16 %v2328
        %v2344 = vunpack.c.l.b16 %v2329
        %v2345 = vpack.c.b16 %v2342, %v2341
        %v2346 = vpack.c.b16 %v2344, %v2343
        %v2350 = vsel %vm1378, %v2324, 0
        %2352 = vmatprep.subr.bf16.mxu0 0
        %2353 = vmatpush1.bf16.msra.mxu0 %v2345
        %2354 = vmatprep.subr.bf16.mxu0 0
        %2355 = vmatpush1.bf16.msra.mxu0 %v2346
        %2356 = vmatprep.subr.bf16.mxu0 0
        %2357 = vmatpush1.bf16.msra.mxu0 0
        %2358 = vmatprep.subr.bf16.mxu0 0
        %2359 = vmatpush1.bf16.msra.mxu0 0
        %2360 = vmatprep.subr.bf16.mxu0 0
        %2361 = vmatpush1.bf16.msra.mxu0 0
        %2362 = vmatprep.subr.bf16.mxu0 0
        %2363 = vmatpush1.bf16.msra.mxu0 0
        %2364 = vmatprep.subr.bf16.mxu0 0
        %2365 = vmatpush1.bf16.msra.mxu0 0
        %2366 = vmatprep.subr.bf16.mxu0 0
        %2367 = vmatpush1.bf16.msra.mxu0 0
        %2368 = vmatprep.subr.bf16.mxu0 0
        %2369 = vmatpush1.bf16.msra.mxu0 0
        %2370 = vmatprep.subr.bf16.mxu0 0
        %2371 = vmatpush1.bf16.msra.mxu0 0
        %2372 = vmatprep.subr.bf16.mxu0 0
        %2373 = vmatpush1.bf16.msra.mxu0 0
        %2374 = vmatprep.subr.bf16.mxu0 0
        %2375 = vmatpush1.bf16.msra.mxu0 0
        %2376 = vmatprep.subr.bf16.mxu0 0
        %2377 = vmatpush1.bf16.msra.mxu0 0
        %2378 = vmatprep.subr.bf16.mxu0 0
        %2379 = vmatpush1.bf16.msra.mxu0 0
        %2380 = vmatprep.subr.bf16.mxu0 0
        %2381 = vmatpush1.bf16.msra.mxu0 0
        %2382 = vmatprep.subr.bf16.mxu0 0
        %2383 = vmatpush1.bf16.msra.mxu0 0
        %2384 = vmatprep.mubr.bf16.mxu0 0
        %2385 = vmatmul.mubr.bf16.gmra.mrb[0].mxu0 %v2350
        %v2386 = vpop.f32.mrb[0].mxu0
        %v2387 = vadd.f32 %v2335, %v2386
        %v2388 = vpop.f32.mrb[0].mxu0
        %v2389 = vpop.f32.mrb[0].mxu0
        %v2390 = vpop.f32.mrb[0].mxu0
        %2391 = vdwg.mxu0
        %v2392 = vmul.f32 %v2387, 0.35355338
        %v2393 = vld [vmem:[#allocation31] sm:$0xf]
        %v2394 = vld [vmem:[#allocation31 + $0x4] sm:$0xf]
        %v2395 = vld [vmem:[#allocation31 + $0x8] sm:$0xf]
        %v2396 = vld [vmem:[#allocation31 + $0xc] sm:$0xf]
        %v2397 = vld [vmem:[#allocation32] sm:$0x1]
        %v2399 = vlaneseq
        %v2400 = vshrl.u32 %v2399, 7
        %v2401 = vsub.s32 0, %v2400
        %v2402 = vrot.slane %v2397, %v2401
        %v2408 = vunpack.c.l.b16 %v2393
        %v2409 = vunpack.c.l.b16 %v2394
        %v2410 = vunpack.c.l.b16 %v2395
        %v2411 = vunpack.c.l.b16 %v2396
        %v2412 = vpack.c.b16 %v2409, %v2408
        %v2413 = vpack.c.b16 %v2411, %v2410
        %v2417 = vsel %vm1378, %v2325, 0
        %2419 = vmatprep.subr.bf16.mxu0 0
        %2420 = vmatpush1.bf16.msra.mxu0 %v2412
        %2421 = vmatprep.subr.bf16.mxu0 0
        %2422 = vmatpush1.bf16.msra.mxu0 %v2413
        %2423 = vmatprep.subr.bf16.mxu0 0
        %2424 = vmatpush1.bf16.msra.mxu0 0
        %2425 = vmatprep.subr.bf16.mxu0 0
        %2426 = vmatpush1.bf16.msra.mxu0 0
        %2427 = vmatprep.subr.bf16.mxu0 0
        %2428 = vmatpush1.bf16.msra.mxu0 0
        %2429 = vmatprep.subr.bf16.mxu0 0
        %2430 = vmatpush1.bf16.msra.mxu0 0
        %2431 = vmatprep.subr.bf16.mxu0 0
        %2432 = vmatpush1.bf16.msra.mxu0 0
        %2433 = vmatprep.subr.bf16.mxu0 0
        %2434 = vmatpush1.bf16.msra.mxu0 0
        %2435 = vmatprep.subr.bf16.mxu0 0
        %2436 = vmatpush1.bf16.msra.mxu0 0
        %2437 = vmatprep.subr.bf16.mxu0 0
        %2438 = vmatpush1.bf16.msra.mxu0 0
        %2439 = vmatprep.subr.bf16.mxu0 0
        %2440 = vmatpush1.bf16.msra.mxu0 0
        %2441 = vmatprep.subr.bf16.mxu0 0
        %2442 = vmatpush1.bf16.msra.mxu0 0
        %2443 = vmatprep.subr.bf16.mxu0 0
        %2444 = vmatpush1.bf16.msra.mxu0 0
        %2445 = vmatprep.subr.bf16.mxu0 0
        %2446 = vmatpush1.bf16.msra.mxu0 0
        %2447 = vmatprep.subr.bf16.mxu0 0
        %2448 = vmatpush1.bf16.msra.mxu0 0
        %2449 = vmatprep.subr.bf16.mxu0 0
        %2450 = vmatpush1.bf16.msra.mxu0 0
        %2451 = vmatprep.mubr.bf16.mxu0 0
        %2452 = vmatmul.mubr.bf16.gmra.mrb[0].mxu0 %v2417
        %v2453 = vpop.f32.mrb[0].mxu0
        %v2454 = vadd.f32 %v2402, %v2453
        %v2455 = vpop.f32.mrb[0].mxu0
        %v2456 = vpop.f32.mrb[0].mxu0
        %v2457 = vpop.f32.mrb[0].mxu0
        %2458 = vdwg.mxu0
        %v2459 = vld [vmem:[#allocation34] sm:$0xf]
        %v2460 = vld [vmem:[#allocation34 + $0x4] sm:$0xf]
        %v2461 = vld [vmem:[#allocation34 + $0x8] sm:$0xf]
        %v2462 = vld [vmem:[#allocation34 + $0xc] sm:$0xf]
        %v2463 = vld [vmem:[#allocation35] sm:$0x1]
        %v2465 = vlaneseq
        %v2466 = vshrl.u32 %v2465, 7
        %v2467 = vsub.s32 0, %v2466
        %v2468 = vrot.slane %v2463, %v2467
        %v2474 = vunpack.c.l.b16 %v2459
        %v2475 = vunpack.c.l.b16 %v2460
        %v2476 = vunpack.c.l.b16 %v2461
        %v2477 = vunpack.c.l.b16 %v2462
        %v2478 = vpack.c.b16 %v2475, %v2474
        %v2479 = vpack.c.b16 %v2477, %v2476
        %2482 = vmatprep.subr.bf16.mxu0 0
        %2483 = vmatpush1.bf16.msra.mxu0 %v2478
        %2484 = vmatprep.subr.bf16.mxu0 0
        %2485 = vmatpush1.bf16.msra.mxu0 %v2479
        %2486 = vmatprep.subr.bf16.mxu0 0
        %2487 = vmatpush1.bf16.msra.mxu0 0
        %2488 = vmatprep.subr.bf16.mxu0 0
        %2489 = vmatpush1.bf16.msra.mxu0 0
        %2490 = vmatprep.subr.bf16.mxu0 0
        %2491 = vmatpush1.bf16.msra.mxu0 0
        %2492 = vmatprep.subr.bf16.mxu0 0
        %2493 = vmatpush1.bf16.msra.mxu0 0
        %2494 = vmatprep.subr.bf16.mxu0 0
        %2495 = vmatpush1.bf16.msra.mxu0 0
        %2496 = vmatprep.subr.bf16.mxu0 0
        %2497 = vmatpush1.bf16.msra.mxu0 0
        %2498 = vmatprep.subr.bf16.mxu0 0
        %2499 = vmatpush1.bf16.msra.mxu0 0
        %2500 = vmatprep.subr.bf16.mxu0 0
        %2501 = vmatpush1.bf16.msra.mxu0 0
        %2502 = vmatprep.subr.bf16.mxu0 0
        %2503 = vmatpush1.bf16.msra.mxu0 0
        %2504 = vmatprep.subr.bf16.mxu0 0
        %2505 = vmatpush1.bf16.msra.mxu0 0
        %2506 = vmatprep.subr.bf16.mxu0 0
        %2507 = vmatpush1.bf16.msra.mxu0 0
        %2508 = vmatprep.subr.bf16.mxu0 0
        %2509 = vmatpush1.bf16.msra.mxu0 0
        %2510 = vmatprep.subr.bf16.mxu0 0
        %2511 = vmatpush1.bf16.msra.mxu0 0
        %2512 = vmatprep.subr.bf16.mxu0 0
        %2513 = vmatpush1.bf16.msra.mxu0 0
        %2514 = vmatprep.mubr.bf16.mxu0 0
        %2515 = vmatmul.mubr.bf16.gmra.mrb[0].mxu0 %v2417
        %v2516 = vpop.f32.mrb[0].mxu0
        %v2517 = vadd.f32 %v2468, %v2516
        %v2518 = vpop.f32.mrb[0].mxu0
        %v2519 = vpop.f32.mrb[0].mxu0
        %v2520 = vpop.f32.mrb[0].mxu0
        %2521 = vdwg.mxu0
        %v2522 = vpack.c.bf16 %v2392, %v2392
        %v2523 = vpack.c.bf16 %v2454, %v2454
        %v2524 = vpack.c.bf16 %v2517, %v2517
        %v2526 = vlaneseq
        %v2527 = vshrl.u32 %v2526, 7
        %v2528 = vsub.s32 0, %v2527
        %v2529 = vrot.slane %v2323, %v2528
        %v2532 = vsel %vm1614, %v2522, 0
        %v2535 = vsel %vm1614, %v2523, 0
        %2537 = vmatprep.subr.bf16.mxu0 0
        %2538 = vmatpush1.bf16.xpose.msra.mxu0 %v2535
        %2539 = vmatprep.subr.bf16.mxu0 0
        %2540 = vmatpush1.bf16.xpose.msra.mxu0 0
        %2541 = vmatprep.subr.bf16.mxu0 0
        %2542 = vmatpush1.bf16.xpose.msra.mxu0 0
        %2543 = vmatprep.subr.bf16.mxu0 0
        %2544 = vmatpush1.bf16.xpose.msra.mxu0 0
        %2545 = vmatprep.subr.bf16.mxu0 0
        %2546 = vmatpush1.bf16.xpose.msra.mxu0 0
        %2547 = vmatprep.subr.bf16.mxu0 0
        %2548 = vmatpush1.bf16.xpose.msra.mxu0 0
        %2549 = vmatprep.subr.bf16.mxu0 0
        %2550 = vmatpush1.bf16.xpose.msra.mxu0 0
        %2551 = vmatprep.subr.bf16.mxu0 0
        %2552 = vmatpush1.bf16.xpose.msra.mxu0 0
        %2553 = vmatprep.subr.bf16.mxu0 0
        %2554 = vmatpush1.bf16.xpose.msra.mxu0 0
        %2555 = vmatprep.subr.bf16.mxu0 0
        %2556 = vmatpush1.bf16.xpose.msra.mxu0 0
        %2557 = vmatprep.subr.bf16.mxu0 0
        %2558 = vmatpush1.bf16.xpose.msra.mxu0 0
        %2559 = vmatprep.subr.bf16.mxu0 0
        %2560 = vmatpush1.bf16.xpose.msra.mxu0 0
        %2561 = vmatprep.subr.bf16.mxu0 0
        %2562 = vmatpush1.bf16.xpose.msra.mxu0 0
        %2563 = vmatprep.subr.bf16.mxu0 0
        %2564 = vmatpush1.bf16.xpose.msra.mxu0 0
        %2565 = vmatprep.subr.bf16.mxu0 0
        %2566 = vmatpush1.bf16.xpose.msra.mxu0 0
        %2567 = vmatprep.subr.bf16.mxu0 0
        %2568 = vmatpush1.bf16.xpose.msra.mxu0 0
        %2569 = vmatprep.mubr.bf16.mxu0 0
        %2570 = vmatmul.mubr.bf16.gmra.mrb[0].mxu0 %v2532
        %v2571 = vpop.f32.mrb[0].mxu0
        %v2572 = vadd.f32 %v2529, %v2571
        %v2573 = vpop.f32.mrb[0].mxu0
        %v2574 = vpop.f32.mrb[0].mxu0
        %v2575 = vpop.f32.mrb[0].mxu0
        %2576 = vdwg.mxu0
        %v2577 = vsel %vm1614, %v2572, -inf
        %2578 = vmax.xlane.f32.xlu0 %v2577
        %v2579 = vpop.xlane.xlu0 %2578
        %v2580 = vmax.f32 %v2579, -1e+30
        %v2581 = vsub.f32 -1e+30, %v2580
        %v2582 = vmul.f32 %v2581, 1.442695
        %v2583 = vpow.pop %v2582
        %v2584 = vsub.f32 %v2572, %v2580
        %v2585 = vmul.f32 %v2584, 1.442695
        %v2586 = vpow.pop %v2585
        %v2587 = vmul.f32 %v2583, 0.0
        %v2588 = vsel %vm1614, %v2586, 0.0
        %2589 = vadd.xlane.f32.xlu0 %v2588
        %v2590 = vpop.xlane.xlu0 %2589
        %v2591 = vadd.f32 %v2587, %v2590
        %v2592 = vpack.c.bf16 %v2586, %v2586
        %v2594 = vsel %vm1614, %v2592, 0
        %v2597 = vsel %vm1680, %v2524, 0
        %2599 = vmatprep.subr.bf16.mxu0 0
        %2600 = vmatpush1.bf16.msra.mxu0 %v2597
        %2601 = vmatprep.subr.bf16.mxu0 0
        %2602 = vmatpush1.bf16.msra.mxu0 0
        %2603 = vmatprep.subr.bf16.mxu0 0
        %2604 = vmatpush1.bf16.msra.mxu0 0
        %2605 = vmatprep.subr.bf16.mxu0 0
        %2606 = vmatpush1.bf16.msra.mxu0 0
        %2607 = vmatprep.subr.bf16.mxu0 0
        %2608 = vmatpush1.bf16.msra.mxu0 0
        %2609 = vmatprep.subr.bf16.mxu0 0
        %2610 = vmatpush1.bf16.msra.mxu0 0
        %2611 = vmatprep.subr.bf16.mxu0 0
        %2612 = vmatpush1.bf16.msra.mxu0 0
        %2613 = vmatprep.subr.bf16.mxu0 0
        %2614 = vmatpush1.bf16.msra.mxu0 0
        %2615 = vmatprep.subr.bf16.mxu0 0
        %2616 = vmatpush1.bf16.msra.mxu0 0
        %2617 = vmatprep.subr.bf16.mxu0 0
        %2618 = vmatpush1.bf16.msra.mxu0 0
        %2619 = vmatprep.subr.bf16.mxu0 0
        %2620 = vmatpush1.bf16.msra.mxu0 0
        %2621 = vmatprep.subr.bf16.mxu0 0
        %2622 = vmatpush1.bf16.msra.mxu0 0
        %2623 = vmatprep.subr.bf16.mxu0 0
        %2624 = vmatpush1.bf16.msra.mxu0 0
        %2625 = vmatprep.subr.bf16.mxu0 0
        %2626 = vmatpush1.bf16.msra.mxu0 0
        %2627 = vmatprep.subr.bf16.mxu0 0
        %2628 = vmatpush1.bf16.msra.mxu0 0
        %2629 = vmatprep.subr.bf16.mxu0 0
        %2630 = vmatpush1.bf16.msra.mxu0 0
        %2631 = vmatprep.mubr.bf16.mxu0 0
        %2632 = vmatmul.mubr.bf16.gmra.mrb[0].mxu0 %v2594
        %v2633 = vpop.f32.mrb[0].mxu0
        %v2634 = vadd.f32 0.0, %v2633
        %v2635 = vpop.f32.mrb[0].mxu0
        %v2636 = vpop.f32.mrb[0].mxu0
        %v2637 = vpop.f32.mrb[0].mxu0
        %2638 = vdwg.mxu0
        %v2639 = vadd.f32 %v2587, %v2634
        %v2640 = vrcp.pop %v2591
        %v2641 = vmul.f32 %v2639, %v2640
        %v2642 = vpack.c.bf16 %v2641, %v2641
        %v2643 = vld [vmem:[#allocation37] sm:$0xf]
        %2645 = vrot.lane.b32.xlu0 %v2522, 120
        %v2646 = vpop.permute.xlu0 %2645
        %2648 = vrot.lane.b32.xlu0 %v2523, 120
        %v2649 = vpop.permute.xlu0 %2648
        %v2651 = vsel %vm1614, %v2646, 0
        %v2654 = vsel %vm1614, %v2649, 0
        %2656 = vmatprep.subr.bf16.mxu0 0
        %2657 = vmatpush1.bf16.xpose.msra.mxu0 %v2654
        %2658 = vmatprep.subr.bf16.mxu0 0
        %2659 = vmatpush1.bf16.xpose.msra.mxu0 0
        %2660 = vmatprep.subr.bf16.mxu0 0
        %2661 = vmatpush1.bf16.xpose.msra.mxu0 0
        %2662 = vmatprep.subr.bf16.mxu0 0
        %2663 = vmatpush1.bf16.xpose.msra.mxu0 0
        %2664 = vmatprep.subr.bf16.mxu0 0
        %2665 = vmatpush1.bf16.xpose.msra.mxu0 0
        %2666 = vmatprep.subr.bf16.mxu0 0
        %2667 = vmatpush1.bf16.xpose.msra.mxu0 0
        %2668 = vmatprep.subr.bf16.mxu0 0
        %2669 = vmatpush1.bf16.xpose.msra.mxu0 0
        %2670 = vmatprep.subr.bf16.mxu0 0
        %2671 = vmatpush1.bf16.xpose.msra.mxu0 0
        %2672 = vmatprep.subr.bf16.mxu0 0
        %2673 = vmatpush1.bf16.xpose.msra.mxu0 0
        %2674 = vmatprep.subr.bf16.mxu0 0
        %2675 = vmatpush1.bf16.xpose.msra.mxu0 0
        %2676 = vmatprep.subr.bf16.mxu0 0
        %2677 = vmatpush1.bf16.xpose.msra.mxu0 0
        %2678 = vmatprep.subr.bf16.mxu0 0
        %2679 = vmatpush1.bf16.xpose.msra.mxu0 0
        %2680 = vmatprep.subr.bf16.mxu0 0
        %2681 = vmatpush1.bf16.xpose.msra.mxu0 0
        %2682 = vmatprep.subr.bf16.mxu0 0
        %2683 = vmatpush1.bf16.xpose.msra.mxu0 0
        %2684 = vmatprep.subr.bf16.mxu0 0
        %2685 = vmatpush1.bf16.xpose.msra.mxu0 0
        %2686 = vmatprep.subr.bf16.mxu0 0
        %2687 = vmatpush1.bf16.xpose.msra.mxu0 0
        %2688 = vmatprep.mubr.bf16.mxu0 0
        %2689 = vmatmul.mubr.bf16.gmra.mrb[0].mxu0 %v2651
        %v2690 = vpop.f32.mrb[0].mxu0
        %v2691 = vadd.f32 %v2529, %v2690
        %v2692 = vpop.f32.mrb[0].mxu0
        %v2693 = vpop.f32.mrb[0].mxu0
        %v2694 = vpop.f32.mrb[0].mxu0
        %2695 = vdwg.mxu0
        %v2696 = vsel %vm1614, %v2691, -inf
        %2697 = vmax.xlane.f32.xlu0 %v2696
        %v2698 = vpop.xlane.xlu0 %2697
        %v2699 = vmax.f32 %v2698, -1e+30
        %v2700 = vsub.f32 -1e+30, %v2699
        %v2701 = vmul.f32 %v2700, 1.442695
        %v2702 = vpow.pop %v2701
        %v2703 = vsub.f32 %v2691, %v2699
        %v2704 = vmul.f32 %v2703, 1.442695
        %v2705 = vpow.pop %v2704
        %v2706 = vmul.f32 %v2702, 0.0
        %v2707 = vsel %vm1614, %v2705, 0.0
        %2708 = vadd.xlane.f32.xlu0 %v2707
        %v2709 = vpop.xlane.xlu0 %2708
        %v2710 = vadd.f32 %v2706, %v2709
        %v2711 = vpack.c.bf16 %v2705, %v2705
        %2713 = vrot.lane.b32.xlu0 %v2524, 120
        %v2714 = vpop.permute.xlu0 %2713
        %v2716 = vsel %vm1614, %v2711, 0
        %v2719 = vsel %vm1680, %v2714, 0
        %2721 = vmatprep.subr.bf16.mxu0 0
        %2722 = vmatpush1.bf16.msra.mxu0 %v2719
        %2723 = vmatprep.subr.bf16.mxu0 0
        %2724 = vmatpush1.bf16.msra.mxu0 0
        %2725 = vmatprep.subr.bf16.mxu0 0
        %2726 = vmatpush1.bf16.msra.mxu0 0
        %2727 = vmatprep.subr.bf16.mxu0 0
        %2728 = vmatpush1.bf16.msra.mxu0 0
        %2729 = vmatprep.subr.bf16.mxu0 0
        %2730 = vmatpush1.bf16.msra.mxu0 0
        %2731 = vmatprep.subr.bf16.mxu0 0
        %2732 = vmatpush1.bf16.msra.mxu0 0
        %2733 = vmatprep.subr.bf16.mxu0 0
        %2734 = vmatpush1.bf16.msra.mxu0 0
        %2735 = vmatprep.subr.bf16.mxu0 0
        %2736 = vmatpush1.bf16.msra.mxu0 0
        %2737 = vmatprep.subr.bf16.mxu0 0
        %2738 = vmatpush1.bf16.msra.mxu0 0
        %2739 = vmatprep.subr.bf16.mxu0 0
        %2740 = vmatpush1.bf16.msra.mxu0 0
        %2741 = vmatprep.subr.bf16.mxu0 0
        %2742 = vmatpush1.bf16.msra.mxu0 0
        %2743 = vmatprep.subr.bf16.mxu0 0
        %2744 = vmatpush1.bf16.msra.mxu0 0
        %2745 = vmatprep.subr.bf16.mxu0 0
        %2746 = vmatpush1.bf16.msra.mxu0 0
        %2747 = vmatprep.subr.bf16.mxu0 0
        %2748 = vmatpush1.bf16.msra.mxu0 0
        %2749 = vmatprep.subr.bf16.mxu0 0
        %2750 = vmatpush1.bf16.msra.mxu0 0
        %2751 = vmatprep.subr.bf16.mxu0 0
        %2752 = vmatpush1.bf16.msra.mxu0 0
        %2753 = vmatprep.mubr.bf16.mxu0 0
        %2754 = vmatmul.mubr.bf16.gmra.mrb[0].mxu0 %v2716
        %v2755 = vpop.f32.mrb[0].mxu0
        %v2756 = vadd.f32 0.0, %v2755
        %v2757 = vpop.f32.mrb[0].mxu0
        %v2758 = vpop.f32.mrb[0].mxu0
        %v2759 = vpop.f32.mrb[0].mxu0
        %2760 = vdwg.mxu0
        %v2761 = vadd.f32 %v2706, %v2756
        %v2762 = vrcp.pop %v2710
        %v2763 = vmul.f32 %v2761, %v2762
        %v2764 = vpack.c.bf16 %v2763, %v2763
        %v2765 = vld [vmem:[#allocation37 + $0x4] sm:$0xf]
        %v2767 = vsel %vm1614, %v2764, 0
        %v2770 = vsel %vm1680, %v2765, 0
        %2772 = vmatprep.subr.bf16.mxu0 0
        %2773 = vmatpush1.bf16.msra.mxu0 %v2770
        %2774 = vmatprep.subr.bf16.mxu0 0
        %2775 = vmatpush1.bf16.msra.mxu0 0
        %2776 = vmatprep.subr.bf16.mxu0 0
        %2777 = vmatpush1.bf16.msra.mxu0 0
        %2778 = vmatprep.subr.bf16.mxu0 0
        %2779 = vmatpush1.bf16.msra.mxu0 0
        %2780 = vmatprep.subr.bf16.mxu0 0
        %2781 = vmatpush1.bf16.msra.mxu0 0
        %2782 = vmatprep.subr.bf16.mxu0 0
        %2783 = vmatpush1.bf16.msra.mxu0 0
        %2784 = vmatprep.subr.bf16.mxu0 0
        %2785 = vmatpush1.bf16.msra.mxu0 0
        %2786 = vmatprep.subr.bf16.mxu0 0
        %2787 = vmatpush1.bf16.msra.mxu0 0
        %2788 = vmatprep.subr.bf16.mxu0 0
        %2789 = vmatpush1.bf16.msra.mxu0 0
        %2790 = vmatprep.subr.bf16.mxu0 0
        %2791 = vmatpush1.bf16.msra.mxu0 0
        %2792 = vmatprep.subr.bf16.mxu0 0
        %2793 = vmatpush1.bf16.msra.mxu0 0
        %2794 = vmatprep.subr.bf16.mxu0 0
        %2795 = vmatpush1.bf16.msra.mxu0 0
        %2796 = vmatprep.subr.bf16.mxu0 0
        %2797 = vmatpush1.bf16.msra.mxu0 0
        %2798 = vmatprep.subr.bf16.mxu0 0
        %2799 = vmatpush1.bf16.msra.mxu0 0
        %2800 = vmatprep.subr.bf16.mxu0 0
        %2801 = vmatpush1.bf16.msra.mxu0 0
        %2802 = vmatprep.subr.bf16.mxu0 0
        %2803 = vmatpush1.bf16.msra.mxu0 0
        %2804 = vmatprep.mubr.bf16.mxu0 0
        %2805 = vmatmul.mubr.bf16.gmra.mrb[0].mxu0 %v2767
        %v2806 = vpop.f32.mrb[0].mxu0
        %v2807 = vadd.f32 0.0, %v2806
        %v2808 = vpop.f32.mrb[0].mxu0
        %v2809 = vpop.f32.mrb[0].mxu0
        %v2810 = vpop.f32.mrb[0].mxu0
        %2811 = vdwg.mxu0
        %v2813 = vsel %vm1614, %v2642, 0
        %v2816 = vsel %vm1680, %v2643, 0
        %2818 = vmatprep.subr.bf16.mxu0 0
        %2819 = vmatpush1.bf16.msra.mxu0 %v2816
        %2820 = vmatprep.subr.bf16.mxu0 0
        %2821 = vmatpush1.bf16.msra.mxu0 0
        %2822 = vmatprep.subr.bf16.mxu0 0
        %2823 = vmatpush1.bf16.msra.mxu0 0
        %2824 = vmatprep.subr.bf16.mxu0 0
        %2825 = vmatpush1.bf16.msra.mxu0 0
        %2826 = vmatprep.subr.bf16.mxu0 0
        %2827 = vmatpush1.bf16.msra.mxu0 0
        %2828 = vmatprep.subr.bf16.mxu0 0
        %2829 = vmatpush1.bf16.msra.mxu0 0
        %2830 = vmatprep.subr.bf16.mxu0 0
        %2831 = vmatpush1.bf16.msra.mxu0 0
        %2832 = vmatprep.subr.bf16.mxu0 0
        %2833 = vmatpush1.bf16.msra.mxu0 0
        %2834 = vmatprep.subr.bf16.mxu0 0
        %2835 = vmatpush1.bf16.msra.mxu0 0
        %2836 = vmatprep.subr.bf16.mxu0 0
        %2837 = vmatpush1.bf16.msra.mxu0 0
        %2838 = vmatprep.subr.bf16.mxu0 0
        %2839 = vmatpush1.bf16.msra.mxu0 0
        %2840 = vmatprep.subr.bf16.mxu0 0
        %2841 = vmatpush1.bf16.msra.mxu0 0
        %2842 = vmatprep.subr.bf16.mxu0 0
        %2843 = vmatpush1.bf16.msra.mxu0 0
        %2844 = vmatprep.subr.bf16.mxu0 0
        %2845 = vmatpush1.bf16.msra.mxu0 0
        %2846 = vmatprep.subr.bf16.mxu0 0
        %2847 = vmatpush1.bf16.msra.mxu0 0
        %2848 = vmatprep.subr.bf16.mxu0 0
        %2849 = vmatpush1.bf16.msra.mxu0 0
        %2850 = vmatprep.mubr.bf16.mxu0 0
        %2851 = vmatmul.mubr.bf16.gmra.mrb[0].mxu0 %v2813
        %v2852 = vpop.f32.mrb[0].mxu0
        %v2853 = vadd.f32 %v2807, %v2852
        %v2854 = vpop.f32.mrb[0].mxu0
        %v2855 = vpop.f32.mrb[0].mxu0
        %v2856 = vpop.f32.mrb[0].mxu0
        %2857 = vdwg.mxu0
        %2858 = vrot.lane.b32.xlu0 %v2522, 112
        %v2859 = vpop.permute.xlu0 %2858
        %2860 = vrot.lane.b32.xlu0 %v2523, 112
        %v2861 = vpop.permute.xlu0 %2860
        %v2863 = vsel %vm1614, %v2859, 0
        %v2866 = vsel %vm1614, %v2861, 0
        %2868 = vmatprep.subr.bf16.mxu0 0
        %2869 = vmatpush1.bf16.xpose.msra.mxu0 %v2866
        %2870 = vmatprep.subr.bf16.mxu0 0
        %2871 = vmatpush1.bf16.xpose.msra.mxu0 0
        %2872 = vmatprep.subr.bf16.mxu0 0
        %2873 = vmatpush1.bf16.xpose.msra.mxu0 0
        %2874 = vmatprep.subr.bf16.mxu0 0
        %2875 = vmatpush1.bf16.xpose.msra.mxu0 0
        %2876 = vmatprep.subr.bf16.mxu0 0
        %2877 = vmatpush1.bf16.xpose.msra.mxu0 0
        %2878 = vmatprep.subr.bf16.mxu0 0
        %2879 = vmatpush1.bf16.xpose.msra.mxu0 0
        %2880 = vmatprep.subr.bf16.mxu0 0
        %2881 = vmatpush1.bf16.xpose.msra.mxu0 0
        %2882 = vmatprep.subr.bf16.mxu0 0
        %2883 = vmatpush1.bf16.xpose.msra.mxu0 0
        %2884 = vmatprep.subr.bf16.mxu0 0
        %2885 = vmatpush1.bf16.xpose.msra.mxu0 0
        %2886 = vmatprep.subr.bf16.mxu0 0
        %2887 = vmatpush1.bf16.xpose.msra.mxu0 0
        %2888 = vmatprep.subr.bf16.mxu0 0
        %2889 = vmatpush1.bf16.xpose.msra.mxu0 0
        %2890 = vmatprep.subr.bf16.mxu0 0
        %2891 = vmatpush1.bf16.xpose.msra.mxu0 0
        %2892 = vmatprep.subr.bf16.mxu0 0
        %2893 = vmatpush1.bf16.xpose.msra.mxu0 0
        %2894 = vmatprep.subr.bf16.mxu0 0
        %2895 = vmatpush1.bf16.xpose.msra.mxu0 0
        %2896 = vmatprep.subr.bf16.mxu0 0
        %2897 = vmatpush1.bf16.xpose.msra.mxu0 0
        %2898 = vmatprep.subr.bf16.mxu0 0
        %2899 = vmatpush1.bf16.xpose.msra.mxu0 0
        %2900 = vmatprep.mubr.bf16.mxu0 0
        %2901 = vmatmul.mubr.bf16.gmra.mrb[0].mxu0 %v2863
        %v2902 = vpop.f32.mrb[0].mxu0
        %v2903 = vadd.f32 %v2529, %v2902
        %v2904 = vpop.f32.mrb[0].mxu0
        %v2905 = vpop.f32.mrb[0].mxu0
        %v2906 = vpop.f32.mrb[0].mxu0
        %2907 = vdwg.mxu0
        %v2908 = vsel %vm1614, %v2903, -inf
        %2909 = vmax.xlane.f32.xlu0 %v2908
        %v2910 = vpop.xlane.xlu0 %2909
        %v2911 = vmax.f32 %v2910, -1e+30
        %v2912 = vsub.f32 -1e+30, %v2911
        %v2913 = vmul.f32 %v2912, 1.442695
        %v2914 = vpow.pop %v2913
        %v2915 = vsub.f32 %v2903, %v2911
        %v2916 = vmul.f32 %v2915, 1.442695
        %v2917 = vpow.pop %v2916
        %v2918 = vmul.f32 %v2914, 0.0
        %v2919 = vsel %vm1614, %v2917, 0.0
        %2920 = vadd.xlane.f32.xlu0 %v2919
        %v2921 = vpop.xlane.xlu0 %2920
        %v2922 = vadd.f32 %v2918, %v2921
        %v2923 = vpack.c.bf16 %v2917, %v2917
        %2924 = vrot.lane.b32.xlu0 %v2524, 112
        %v2925 = vpop.permute.xlu0 %2924
        %v2927 = vsel %vm1614, %v2923, 0
        %v2930 = vsel %vm1680, %v2925, 0
        %2932 = vmatprep.subr.bf16.mxu0 0
        %2933 = vmatpush1.bf16.msra.mxu0 %v2930
        %2934 = vmatprep.subr.bf16.mxu0 0
        %2935 = vmatpush1.bf16.msra.mxu0 0
        %2936 = vmatprep.subr.bf16.mxu0 0
        %2937 = vmatpush1.bf16.msra.mxu0 0
        %2938 = vmatprep.subr.bf16.mxu0 0
        %2939 = vmatpush1.bf16.msra.mxu0 0
        %2940 = vmatprep.subr.bf16.mxu0 0
        %2941 = vmatpush1.bf16.msra.mxu0 0
        %2942 = vmatprep.subr.bf16.mxu0 0
        %2943 = vmatpush1.bf16.msra.mxu0 0
        %2944 = vmatprep.subr.bf16.mxu0 0
        %2945 = vmatpush1.bf16.msra.mxu0 0
        %2946 = vmatprep.subr.bf16.mxu0 0
        %2947 = vmatpush1.bf16.msra.mxu0 0
        %2948 = vmatprep.subr.bf16.mxu0 0
        %2949 = vmatpush1.bf16.msra.mxu0 0
        %2950 = vmatprep.subr.bf16.mxu0 0
        %2951 = vmatpush1.bf16.msra.mxu0 0
        %2952 = vmatprep.subr.bf16.mxu0 0
        %2953 = vmatpush1.bf16.msra.mxu0 0
        %2954 = vmatprep.subr.bf16.mxu0 0
        %2955 = vmatpush1.bf16.msra.mxu0 0
        %2956 = vmatprep.subr.bf16.mxu0 0
        %2957 = vmatpush1.bf16.msra.mxu0 0
        %2958 = vmatprep.subr.bf16.mxu0 0
        %2959 = vmatpush1.bf16.msra.mxu0 0
        %2960 = vmatprep.subr.bf16.mxu0 0
        %2961 = vmatpush1.bf16.msra.mxu0 0
        %2962 = vmatprep.subr.bf16.mxu0 0
        %2963 = vmatpush1.bf16.msra.mxu0 0
        %2964 = vmatprep.mubr.bf16.mxu0 0
        %2965 = vmatmul.mubr.bf16.gmra.mrb[0].mxu0 %v2927
        %v2966 = vpop.f32.mrb[0].mxu0
        %v2967 = vadd.f32 0.0, %v2966
        %v2968 = vpop.f32.mrb[0].mxu0
        %v2969 = vpop.f32.mrb[0].mxu0
        %v2970 = vpop.f32.mrb[0].mxu0
        %2971 = vdwg.mxu0
        %v2972 = vadd.f32 %v2918, %v2967
        %v2973 = vrcp.pop %v2922
        %v2974 = vmul.f32 %v2972, %v2973
        %v2975 = vpack.c.bf16 %v2974, %v2974
        %v2976 = vld [vmem:[#allocation37 + $0x8] sm:$0xf]
        %v2978 = vsel %vm1614, %v2975, 0
        %v2981 = vsel %vm1680, %v2976, 0
        %2983 = vmatprep.subr.bf16.mxu0 0
        %2984 = vmatpush1.bf16.msra.mxu0 %v2981
        %2985 = vmatprep.subr.bf16.mxu0 0
        %2986 = vmatpush1.bf16.msra.mxu0 0
        %2987 = vmatprep.subr.bf16.mxu0 0
        %2988 = vmatpush1.bf16.msra.mxu0 0
        %2989 = vmatprep.subr.bf16.mxu0 0
        %2990 = vmatpush1.bf16.msra.mxu0 0
        %2991 = vmatprep.subr.bf16.mxu0 0
        %2992 = vmatpush1.bf16.msra.mxu0 0
        %2993 = vmatprep.subr.bf16.mxu0 0
        %2994 = vmatpush1.bf16.msra.mxu0 0
        %2995 = vmatprep.subr.bf16.mxu0 0
        %2996 = vmatpush1.bf16.msra.mxu0 0
        %2997 = vmatprep.subr.bf16.mxu0 0
        %2998 = vmatpush1.bf16.msra.mxu0 0
        %2999 = vmatprep.subr.bf16.mxu0 0
        %3000 = vmatpush1.bf16.msra.mxu0 0
        %3001 = vmatprep.subr.bf16.mxu0 0
        %3002 = vmatpush1.bf16.msra.mxu0 0
        %3003 = vmatprep.subr.bf16.mxu0 0
        %3004 = vmatpush1.bf16.msra.mxu0 0
        %3005 = vmatprep.subr.bf16.mxu0 0
        %3006 = vmatpush1.bf16.msra.mxu0 0
        %3007 = vmatprep.subr.bf16.mxu0 0
        %3008 = vmatpush1.bf16.msra.mxu0 0
        %3009 = vmatprep.subr.bf16.mxu0 0
        %3010 = vmatpush1.bf16.msra.mxu0 0
        %3011 = vmatprep.subr.bf16.mxu0 0
        %3012 = vmatpush1.bf16.msra.mxu0 0
        %3013 = vmatprep.subr.bf16.mxu0 0
        %3014 = vmatpush1.bf16.msra.mxu0 0
        %3015 = vmatprep.mubr.bf16.mxu0 0
        %3016 = vmatmul.mubr.bf16.gmra.mrb[0].mxu0 %v2978
        %v3017 = vpop.f32.mrb[0].mxu0
        %v3018 = vadd.f32 0.0, %v3017
        %v3019 = vpop.f32.mrb[0].mxu0
        %v3020 = vpop.f32.mrb[0].mxu0
        %v3021 = vpop.f32.mrb[0].mxu0
        %3022 = vdwg.mxu0
        %v3023 = vadd.f32 %v2853, %v3018
        %3024 = vrot.lane.b32.xlu0 %v2522, 104
        %v3025 = vpop.permute.xlu0 %3024
        %3026 = vrot.lane.b32.xlu0 %v2523, 104
        %v3027 = vpop.permute.xlu0 %3026
        %v3029 = vsel %vm1614, %v3025, 0
        %v3032 = vsel %vm1614, %v3027, 0
        %3034 = vmatprep.subr.bf16.mxu0 0
        %3035 = vmatpush1.bf16.xpose.msra.mxu0 %v3032
        %3036 = vmatprep.subr.bf16.mxu0 0
        %3037 = vmatpush1.bf16.xpose.msra.mxu0 0
        %3038 = vmatprep.subr.bf16.mxu0 0
        %3039 = vmatpush1.bf16.xpose.msra.mxu0 0
        %3040 = vmatprep.subr.bf16.mxu0 0
        %3041 = vmatpush1.bf16.xpose.msra.mxu0 0
        %3042 = vmatprep.subr.bf16.mxu0 0
        %3043 = vmatpush1.bf16.xpose.msra.mxu0 0
        %3044 = vmatprep.subr.bf16.mxu0 0
        %3045 = vmatpush1.bf16.xpose.msra.mxu0 0
        %3046 = vmatprep.subr.bf16.mxu0 0
        %3047 = vmatpush1.bf16.xpose.msra.mxu0 0
        %3048 = vmatprep.subr.bf16.mxu0 0
        %3049 = vmatpush1.bf16.xpose.msra.mxu0 0
        %3050 = vmatprep.subr.bf16.mxu0 0
        %3051 = vmatpush1.bf16.xpose.msra.mxu0 0
        %3052 = vmatprep.subr.bf16.mxu0 0
        %3053 = vmatpush1.bf16.xpose.msra.mxu0 0
        %3054 = vmatprep.subr.bf16.mxu0 0
        %3055 = vmatpush1.bf16.xpose.msra.mxu0 0
        %3056 = vmatprep.subr.bf16.mxu0 0
        %3057 = vmatpush1.bf16.xpose.msra.mxu0 0
        %3058 = vmatprep.subr.bf16.mxu0 0
        %3059 = vmatpush1.bf16.xpose.msra.mxu0 0
        %3060 = vmatprep.subr.bf16.mxu0 0
        %3061 = vmatpush1.bf16.xpose.msra.mxu0 0
        %3062 = vmatprep.subr.bf16.mxu0 0
        %3063 = vmatpush1.bf16.xpose.msra.mxu0 0
        %3064 = vmatprep.subr.bf16.mxu0 0
        %3065 = vmatpush1.bf16.xpose.msra.mxu0 0
        %3066 = vmatprep.mubr.bf16.mxu0 0
        %3067 = vmatmul.mubr.bf16.gmra.mrb[0].mxu0 %v3029
        %v3068 = vpop.f32.mrb[0].mxu0
        %v3069 = vadd.f32 %v2529, %v3068
        %v3070 = vpop.f32.mrb[0].mxu0
        %v3071 = vpop.f32.mrb[0].mxu0
        %v3072 = vpop.f32.mrb[0].mxu0
        %3073 = vdwg.mxu0
        %v3074 = vsel %vm1614, %v3069, -inf
        %3075 = vmax.xlane.f32.xlu0 %v3074
        %v3076 = vpop.xlane.xlu0 %3075
        %v3077 = vmax.f32 %v3076, -1e+30
        %v3078 = vsub.f32 -1e+30, %v3077
        %v3079 = vmul.f32 %v3078, 1.442695
        %v3080 = vpow.pop %v3079
        %v3081 = vsub.f32 %v3069, %v3077
        %v3082 = vmul.f32 %v3081, 1.442695
        %v3083 = vpow.pop %v3082
        %v3084 = vmul.f32 %v3080, 0.0
        %v3085 = vsel %vm1614, %v3083, 0.0
        %3086 = vadd.xlane.f32.xlu0 %v3085
        %v3087 = vpop.xlane.xlu0 %3086
        %v3088 = vadd.f32 %v3084, %v3087
        %v3089 = vpack.c.bf16 %v3083, %v3083
        %3090 = vrot.lane.b32.xlu0 %v2524, 104
        %v3091 = vpop.permute.xlu0 %3090
        %v3093 = vsel %vm1614, %v3089, 0
        %v3096 = vsel %vm1680, %v3091, 0
        %3098 = vmatprep.subr.bf16.mxu0 0
        %3099 = vmatpush1.bf16.msra.mxu0 %v3096
        %3100 = vmatprep.subr.bf16.mxu0 0
        %3101 = vmatpush1.bf16.msra.mxu0 0
        %3102 = vmatprep.subr.bf16.mxu0 0
        %3103 = vmatpush1.bf16.msra.mxu0 0
        %3104 = vmatprep.subr.bf16.mxu0 0
        %3105 = vmatpush1.bf16.msra.mxu0 0
        %3106 = vmatprep.subr.bf16.mxu0 0
        %3107 = vmatpush1.bf16.msra.mxu0 0
        %3108 = vmatprep.subr.bf16.mxu0 0
        %3109 = vmatpush1.bf16.msra.mxu0 0
        %3110 = vmatprep.subr.bf16.mxu0 0
        %3111 = vmatpush1.bf16.msra.mxu0 0
        %3112 = vmatprep.subr.bf16.mxu0 0
        %3113 = vmatpush1.bf16.msra.mxu0 0
        %3114 = vmatprep.subr.bf16.mxu0 0
        %3115 = vmatpush1.bf16.msra.mxu0 0
        %3116 = vmatprep.subr.bf16.mxu0 0
        %3117 = vmatpush1.bf16.msra.mxu0 0
        %3118 = vmatprep.subr.bf16.mxu0 0
        %3119 = vmatpush1.bf16.msra.mxu0 0
        %3120 = vmatprep.subr.bf16.mxu0 0
        %3121 = vmatpush1.bf16.msra.mxu0 0
        %3122 = vmatprep.subr.bf16.mxu0 0
        %3123 = vmatpush1.bf16.msra.mxu0 0
        %3124 = vmatprep.subr.bf16.mxu0 0
        %3125 = vmatpush1.bf16.msra.mxu0 0
        %3126 = vmatprep.subr.bf16.mxu0 0
        %3127 = vmatpush1.bf16.msra.mxu0 0
        %3128 = vmatprep.subr.bf16.mxu0 0
        %3129 = vmatpush1.bf16.msra.mxu0 0
        %3130 = vmatprep.mubr.bf16.mxu0 0
        %3131 = vmatmul.mubr.bf16.gmra.mrb[0].mxu0 %v3093
        %v3132 = vpop.f32.mrb[0].mxu0
        %v3133 = vadd.f32 0.0, %v3132
        %v3134 = vpop.f32.mrb[0].mxu0
        %v3135 = vpop.f32.mrb[0].mxu0
        %v3136 = vpop.f32.mrb[0].mxu0
        %3137 = vdwg.mxu0
        %v3138 = vadd.f32 %v3084, %v3133
        %v3139 = vrcp.pop %v3088
        %v3140 = vmul.f32 %v3138, %v3139
        %v3141 = vpack.c.bf16 %v3140, %v3140
        %v3142 = vld [vmem:[#allocation37 + $0xc] sm:$0xf]
        %v3144 = vsel %vm1614, %v3141, 0
        %v3147 = vsel %vm1680, %v3142, 0
        %3149 = vmatprep.subr.bf16.mxu0 0
        %3150 = vmatpush1.bf16.msra.mxu0 %v3147
        %3151 = vmatprep.subr.bf16.mxu0 0
        %3152 = vmatpush1.bf16.msra.mxu0 0
        %3153 = vmatprep.subr.bf16.mxu0 0
        %3154 = vmatpush1.bf16.msra.mxu0 0
        %3155 = vmatprep.subr.bf16.mxu0 0
        %3156 = vmatpush1.bf16.msra.mxu0 0
        %3157 = vmatprep.subr.bf16.mxu0 0
        %3158 = vmatpush1.bf16.msra.mxu0 0
        %3159 = vmatprep.subr.bf16.mxu0 0
        %3160 = vmatpush1.bf16.msra.mxu0 0
        %3161 = vmatprep.subr.bf16.mxu0 0
        %3162 = vmatpush1.bf16.msra.mxu0 0
        %3163 = vmatprep.subr.bf16.mxu0 0
        %3164 = vmatpush1.bf16.msra.mxu0 0
        %3165 = vmatprep.subr.bf16.mxu0 0
        %3166 = vmatpush1.bf16.msra.mxu0 0
        %3167 = vmatprep.subr.bf16.mxu0 0
        %3168 = vmatpush1.bf16.msra.mxu0 0
        %3169 = vmatprep.subr.bf16.mxu0 0
        %3170 = vmatpush1.bf16.msra.mxu0 0
        %3171 = vmatprep.subr.bf16.mxu0 0
        %3172 = vmatpush1.bf16.msra.mxu0 0
        %3173 = vmatprep.subr.bf16.mxu0 0
        %3174 = vmatpush1.bf16.msra.mxu0 0
        %3175 = vmatprep.subr.bf16.mxu0 0
        %3176 = vmatpush1.bf16.msra.mxu0 0
        %3177 = vmatprep.subr.bf16.mxu0 0
        %3178 = vmatpush1.bf16.msra.mxu0 0
        %3179 = vmatprep.subr.bf16.mxu0 0
        %3180 = vmatpush1.bf16.msra.mxu0 0
        %3181 = vmatprep.mubr.bf16.mxu0 0
        %3182 = vmatmul.mubr.bf16.gmra.mrb[0].mxu0 %v3144
        %v3183 = vpop.f32.mrb[0].mxu0
        %v3184 = vadd.f32 0.0, %v3183
        %v3185 = vpop.f32.mrb[0].mxu0
        %v3186 = vpop.f32.mrb[0].mxu0
        %v3187 = vpop.f32.mrb[0].mxu0
        %3188 = vdwg.mxu0
        %v3189 = vadd.f32 %v3023, %v3184
        %v3190 = vld [vmem:[#allocation38] sm:$0x1]
        %v3192 = vlaneseq
        %v3193 = vshrl.u32 %v3192, 7
        %v3194 = vsub.s32 0, %v3193
        %v3195 = vrot.slane %v3190, %v3194
        %v3197 = vadd.f32 %v3189, %v3195
        %v3198 = vadd.f32 %v2283, %v3197
        %v3199 = vld [vmem:[#allocation40] sm:$0x1]
        %v3200 = vld [vmem:[#allocation41] sm:$0x1]
        %v3201 = vsel %vm1378, %v3198, 0.0
        %3202 = vadd.xlane.f32.xlu0 %v3201
        %v3203 = vpop.xlane.xlu0 %3202
        %v3204 = vmul.f32 %v3203, %v1382
        %v3205 = vsub.f32 %v3198, %v3204
        %v3206 = vmul.f32 %v3205, %v3205
        %v3207 = vsel %vm1378, %v3206, 0.0
        %3208 = vadd.xlane.f32.xlu0 %v3207
        %v3209 = vpop.xlane.xlu0 %3208
        %v3210 = vmul.f32 %v3209, 0.032258064
        %v3211 = vrsqrt.pop %v3210
        %v3212 = vmul.f32 %v3210, %v3211
        %vm3213 = vcmp.eq.f32.partialorder %v3210, inf
        %v3214 = vsel %vm3213, %v3210, %v3212
        %vm3215 = vcmp.eq.f32.partialorder %v3210, 0.0
        %v3216 = vand.u32 %v3210, 2147483648
        %v3217 = vsel %vm3215, %v3216, %v3214
        %v3219 = vlaneseq
        %v3220 = vshrl.u32 %v3219, 7
        %v3221 = vsub.s32 0, %v3220
        %v3222 = vrot.slane %v3199, %v3221
        %v3224 = vmul.f32 %v3222, %v3205
        %v3225 = vadd.f32 %v3217, 1e-06
        %v3226 = vrcp.pop %v3225
        %v3227 = vmul.f32 %v3224, %v3226
        %v3229 = vlaneseq
        %v3230 = vshrl.u32 %v3229, 7
        %v3231 = vsub.s32 0, %v3230
        %v3232 = vrot.slane %v3200, %v3231
        %v3234 = vadd.f32 %v3227, %v3232
        %v3235 = vpack.c.bf16 %v3234, %v3234
        %v3236 = vld [vmem:[#allocation43] sm:$0xf]
        %v3237 = vld [vmem:[#allocation43 + $0x4] sm:$0xf]
        %v3238 = vld [vmem:[#allocation43 + $0x8] sm:$0xf]
        %v3239 = vld [vmem:[#allocation43 + $0xc] sm:$0xf]
        %v3240 = vld [vmem:[#allocation44] sm:$0x1]
        %v3242 = vlaneseq
        %v3243 = vshrl.u32 %v3242, 7
        %v3244 = vsub.s32 0, %v3243
        %v3245 = vrot.slane %v3240, %v3244
        %v3251 = vunpack.c.l.b16 %v3236
        %v3252 = vunpack.c.l.b16 %v3237
        %v3253 = vunpack.c.l.b16 %v3238
        %v3254 = vunpack.c.l.b16 %v3239
        %v3255 = vpack.c.b16 %v3252, %v3251
        %v3256 = vpack.c.b16 %v3254, %v3253
        %v3260 = vsel %vm1378, %v3235, 0
        %3262 = vmatprep.subr.bf16.mxu0 0
        %3263 = vmatpush1.bf16.msra.mxu0 %v3255
        %3264 = vmatprep.subr.bf16.mxu0 0
        %3265 = vmatpush1.bf16.msra.mxu0 %v3256
        %3266 = vmatprep.subr.bf16.mxu0 0
        %3267 = vmatpush1.bf16.msra.mxu0 0
        %3268 = vmatprep.subr.bf16.mxu0 0
        %3269 = vmatpush1.bf16.msra.mxu0 0
        %3270 = vmatprep.subr.bf16.mxu0 0
        %3271 = vmatpush1.bf16.msra.mxu0 0
        %3272 = vmatprep.subr.bf16.mxu0 0
        %3273 = vmatpush1.bf16.msra.mxu0 0
        %3274 = vmatprep.subr.bf16.mxu0 0
        %3275 = vmatpush1.bf16.msra.mxu0 0
        %3276 = vmatprep.subr.bf16.mxu0 0
        %3277 = vmatpush1.bf16.msra.mxu0 0
        %3278 = vmatprep.subr.bf16.mxu0 0
        %3279 = vmatpush1.bf16.msra.mxu0 0
        %3280 = vmatprep.subr.bf16.mxu0 0
        %3281 = vmatpush1.bf16.msra.mxu0 0
        %3282 = vmatprep.subr.bf16.mxu0 0
        %3283 = vmatpush1.bf16.msra.mxu0 0
        %3284 = vmatprep.subr.bf16.mxu0 0
        %3285 = vmatpush1.bf16.msra.mxu0 0
        %3286 = vmatprep.subr.bf16.mxu0 0
        %3287 = vmatpush1.bf16.msra.mxu0 0
        %3288 = vmatprep.subr.bf16.mxu0 0
        %3289 = vmatpush1.bf16.msra.mxu0 0
        %3290 = vmatprep.subr.bf16.mxu0 0
        %3291 = vmatpush1.bf16.msra.mxu0 0
        %3292 = vmatprep.subr.bf16.mxu0 0
        %3293 = vmatpush1.bf16.msra.mxu0 0
        %3294 = vmatprep.mubr.bf16.mxu0 0
        %3295 = vmatmul.mubr.bf16.gmra.mrb[0].mxu0 %v3260
        %v3296 = vpop.f32.mrb[0].mxu0
        %v3297 = vadd.f32 %v3245, %v3296
        %v3298 = vpop.f32.mrb[0].mxu0
        %v3299 = vpop.f32.mrb[0].mxu0
        %v3300 = vpop.f32.mrb[0].mxu0
        %3301 = vdwg.mxu0
        %v3302 = vmax.f32 %v3297, 0.0
        %v3303 = vpack.c.bf16 %v3302, %v3302
        %v3304 = vld [vmem:[#allocation46] sm:$0xf]
        %v3305 = vld [vmem:[#allocation46 + $0x4] sm:$0xf]
        %v3306 = vld [vmem:[#allocation46 + $0x8] sm:$0xf]
        %v3307 = vld [vmem:[#allocation46 + $0xc] sm:$0xf]
        %v3308 = vld [vmem:[#allocation46 + $0x10] sm:$0xf]
        %v3309 = vld [vmem:[#allocation46 + $0x14] sm:$0xf]
        %v3310 = vld [vmem:[#allocation46 + $0x18] sm:$0xf]
        %v3311 = vld [vmem:[#allocation46 + $0x1c] sm:$0xf]
        %v3312 = vld [vmem:[#allocation47] sm:$0x1]
        %v3314 = vlaneseq
        %v3315 = vshrl.u32 %v3314, 7
        %v3316 = vsub.s32 0, %v3315
        %v3317 = vrot.slane %v3312, %v3316
        %v3327 = vunpack.c.l.b16 %v3304
        %v3328 = vunpack.c.l.b16 %v3305
        %v3329 = vunpack.c.l.b16 %v3306
        %v3330 = vunpack.c.l.b16 %v3307
        %v3331 = vunpack.c.l.b16 %v3308
        %v3332 = vunpack.c.l.b16 %v3309
        %v3333 = vunpack.c.l.b16 %v3310
        %v3334 = vunpack.c.l.b16 %v3311
        %v3335 = vpack.c.b16 %v3328, %v3327
        %v3336 = vpack.c.b16 %v3330, %v3329
        %v3337 = vpack.c.b16 %v3332, %v3331
        %v3338 = vpack.c.b16 %v3334, %v3333
        %vm3343 = vcmask 523264
        %v3345 = vsel %vm3343, %v3303, 0
        %3347 = vmatprep.subr.bf16.mxu0 0
        %3348 = vmatpush1.bf16.msra.mxu0 %v3335
        %3349 = vmatprep.subr.bf16.mxu0 0
        %3350 = vmatpush1.bf16.msra.mxu0 %v3336
        %3351 = vmatprep.subr.bf16.mxu0 0
        %3352 = vmatpush1.bf16.msra.mxu0 %v3337
        %3353 = vmatprep.subr.bf16.mxu0 0
        %3354 = vmatpush1.bf16.msra.mxu0 %v3338
        %3355 = vmatprep.subr.bf16.mxu0 0
        %3356 = vmatpush1.bf16.msra.mxu0 0
        %3357 = vmatprep.subr.bf16.mxu0 0
        %3358 = vmatpush1.bf16.msra.mxu0 0
        %3359 = vmatprep.subr.bf16.mxu0 0
        %3360 = vmatpush1.bf16.msra.mxu0 0
        %3361 = vmatprep.subr.bf16.mxu0 0
        %3362 = vmatpush1.bf16.msra.mxu0 0
        %3363 = vmatprep.subr.bf16.mxu0 0
        %3364 = vmatpush1.bf16.msra.mxu0 0
        %3365 = vmatprep.subr.bf16.mxu0 0
        %3366 = vmatpush1.bf16.msra.mxu0 0
        %3367 = vmatprep.subr.bf16.mxu0 0
        %3368 = vmatpush1.bf16.msra.mxu0 0
        %3369 = vmatprep.subr.bf16.mxu0 0
        %3370 = vmatpush1.bf16.msra.mxu0 0
        %3371 = vmatprep.subr.bf16.mxu0 0
        %3372 = vmatpush1.bf16.msra.mxu0 0
        %3373 = vmatprep.subr.bf16.mxu0 0
        %3374 = vmatpush1.bf16.msra.mxu0 0
        %3375 = vmatprep.subr.bf16.mxu0 0
        %3376 = vmatpush1.bf16.msra.mxu0 0
        %3377 = vmatprep.subr.bf16.mxu0 0
        %3378 = vmatpush1.bf16.msra.mxu0 0
        %3379 = vmatprep.mubr.bf16.mxu0 0
        %3380 = vmatmul.mubr.bf16.gmra.mrb[0].mxu0 %v3345
        %v3381 = vpop.f32.mrb[0].mxu0
        %v3382 = vadd.f32 %v3317, %v3381
        %v3383 = vpop.f32.mrb[0].mxu0
        %v3384 = vpop.f32.mrb[0].mxu0
        %v3385 = vpop.f32.mrb[0].mxu0
        %3386 = vdwg.mxu0
        %v3387 = vadd.f32 %v3198, %v3382
        %3388 = vst.msk [vmem:[%s1373] sm:$0xff] %vm1378, %v3387
        %s3389 = sand.u32 %s750, 1
        %s3390 = scalar_lea.sflag [#allocation4], %s3389
        %s3391 = sand.u32 %s750, 1
        %s3392 = smul.addr %s3391, 8
        %s3393 = scalar_lea.vmem [#allocation49], %s3392
        // Predicated region
        $region261: #{decoder_forward.2} parent=139 // pred_check
          %p3394 = pneg %p760
        $region262: #{decoder_forward.2} parent=139 // pred_check_branch
          %3396 = sbr.rel (%p3394) target = $region264
        $region263: #{decoder_forward.2} parent=139 // pred_region
          %s3398 = ssub.s32 128, 128
          %3399 = vsyncadd %s3390, %s3398
          %s3400 = smul.addr %s97, 128
          %s3401 = scalar_lea.hbm %s61, %s3400
          %s3403 = sshll.u32 %s3393, 4
          %s3404 = int_to_ptr.vmem [resolvable:$true] %s3403
          %3406 = dma.vmem_to_hbm [thread:$0]  %s3404, 128, %s3401, %s3390
        $region264: #{decoder_forward.2} parent=139 // pred_fallthru
          _
      $region140: #{decoder_forward.2} parent=5 // pred_fallthru
        _
      %p3407 = scmp.le.s32.totalorder 2, %s92
      // Predicated region
      $region265: #{decoder_forward.2} parent=5 // pred_check
        %p3408 = pneg %p3407
      $region266: #{decoder_forward.2} parent=5 // pred_check_branch
        %3410 = sbr.rel (%p3408) target = $region268
      $region267: #{decoder_forward.2} parent=5 // pred_region
        %s3411 = ssub.s32 %s92, 2
        // Predicated region
        $region269: #{decoder_forward.2} parent=267 // pred_check
          %p3412 = pneg %p766
        $region270: #{decoder_forward.2} parent=267 // pred_check_branch
          %3414 = sbr.rel (%p3412) target = $region272
        $region271: #{decoder_forward.2} parent=267 // pred_region
          %s3415 = sand.u32 %s751, 1
          %s3416 = scalar_lea.sflag [#allocation4], %s3415
          %s3417 = sand.u32 %s751, 1
          %s3418 = smul.addr %s3417, 8
          %s3419 = scalar_lea.vmem [#allocation49], %s3418
          %3420 = dma.done %s3416, 128
        $region272: #{decoder_forward.2} parent=267 // pred_fallthru
          _
      $region268: #{decoder_forward.2} parent=5 // pred_fallthru
        _
    $region6: #{decoder_forward.2} parent=1 // loop_footer
      %s96 = sadd.s32 1, %s92
    $region7: #{decoder_forward.2} parent=1 // loop_footer_branch
      %91 = sbr.rel target = $region3
    $region8: #{decoder_forward.2} parent=1 // loop_exit
      _
    %3421 = vsyncpa [#allocation3], 1
    %s3422 = scalar_lea.sflag [#allocation3], 1
    %3423 = vsyncpa %s3422, 1
    %3424 = vsyncpa [#allocation6], 1
    %s3425 = scalar_lea.sflag [#allocation6], 1
    %3426 = vsyncpa %s3425, 1
    %3427 = vsyncpa [#allocation9], 1
    %s3428 = scalar_lea.sflag [#allocation9], 1
    %3429 = vsyncpa %s3428, 1
    %3430 = vsyncpa [#allocation12], 1
    %3431 = vsyncpa [#allocation15], 1
    %3432 = vsyncpa [#allocation18], 1
    %3433 = vsyncpa [#allocation21], 1
    %3434 = vsyncpa [#allocation24], 1
    %3435 = vsyncpa [#allocation27], 1
    %3436 = vsyncpa [#allocation30], 1
    %3437 = vsyncpa [#allocation33], 1
    %3438 = vsyncpa [#allocation36], 1
    %3439 = vsyncpa [#allocation39], 1
    %3440 = vsyncpa [#allocation42], 1
    %3441 = vsyncpa [#allocation45], 1
    %3442 = vsyncpa [#allocation48], 1
    %3443 = vsyncpa [#allocation4], 1
    %s3444 = scalar_lea.sflag [#allocation4], 1
    %3445 = vsyncpa %s3444, 1

</llo_original>
